<compile_context>
chip_gen: v7x
topology: tpu7x:2x2x1
jax: 0.10.0
libtpu: 0.0.40
codegen_flags: <defaults>
</compile_context>

<pallas_src>
import functools

import jax
import jax.numpy as jnp
from jax import lax
from jax.experimental import pallas as pl
from jax.experimental.pallas import tpu as pltpu


# ----------------------------------------------------------------------------
# Pallas kernel: 3x3 stride-1 "same" conv (+ bias, ReLU, optional skip, ReLU)
# ----------------------------------------------------------------------------
def _conv3x3_kernel(x_ref, w_ref, b_ref, *rest, hout, wout, relu1, relu2,
                    has_skip):
    if has_skip:
        s_ref, o_ref = rest
    else:
        (o_ref,) = rest
    cin = x_ref.shape[-1]
    cout = w_ref.shape[-1]
    m = hout * wout

    acc = jnp.zeros((m, cout), jnp.float32)
    # 9 taps of the 3x3 stencil: shifted windows of the 1-halo-padded input,
    # each one a (H*W, Cin) @ (Cin, Cout) matmul accumulated in f32.
    for t in range(9):
        dh, dw = t // 3, t % 3
        patch = x_ref[:, dh:dh + hout, dw:dw + wout, :].astype(jnp.float32)
        patch = patch.reshape(m, cin)
        acc = acc + jnp.dot(patch, w_ref[t].astype(jnp.float32),
                            preferred_element_type=jnp.float32)

    acc = acc + b_ref[...].astype(jnp.float32)          # (1, Cout) broadcast
    if relu1:                                           # the layer's own ReLU
        acc = jnp.maximum(acc, 0.0)
    if has_skip:                                        # encoder skip / residual
        acc = acc + s_ref[...].astype(jnp.float32).reshape(m, cout)
    if relu2:                                           # post-skip ReLU
        acc = jnp.maximum(acc, 0.0)
    o_ref[...] = acc.reshape(1, hout, wout, cout).astype(o_ref.dtype)


def conv3x3_same(x_pad, w9, b, skip=None, relu1=True, relu2=False):
    """3x3 stride-1 conv on an already 1-halo-padded NHWC input.

    x_pad: (N, H+2, W+2, Cin)   w9: (9, Cin, Cout)   b: (Cout,)
    skip : optional (N, H, W, Cout), added after the (optional) layer ReLU.
    Returns (N, H, W, Cout).
    """
    n, hp, wp, cin = x_pad.shape
    hout, wout = hp - 2, wp - 2
    cout = w9.shape[-1]
    b2 = b.reshape(1, cout)

    kernel = functools.partial(_conv3x3_kernel, hout=hout, wout=wout,
                               relu1=relu1, relu2=relu2,
                               has_skip=skip is not None)

    in_specs = [
        pl.BlockSpec((1, hp, wp, cin), lambda i: (i, 0, 0, 0)),
        pl.BlockSpec((9, cin, cout), lambda i: (0, 0, 0)),
        pl.BlockSpec((1, cout), lambda i: (0, 0)),
    ]
    args = [x_pad, w9, b2]
    if skip is not None:
        in_specs.append(
            pl.BlockSpec((1, hout, wout, cout), lambda i: (i, 0, 0, 0)))
        args.append(skip)

    return pl.pallas_call(
        kernel,
        grid=(n,),
        in_specs=in_specs,
        out_specs=pl.BlockSpec((1, hout, wout, cout), lambda i: (i, 0, 0, 0)),
        out_shape=jax.ShapeDtypeStruct((n, hout, wout, cout), x_pad.dtype),
        compiler_params=pltpu.CompilerParams(
            dimension_semantics=("parallel",),     # megacore on v7x, free on v5e/v6e
            vmem_limit_bytes=64 * 1024 * 1024,     # explicit, fits v7x's 64 MiB VMEM
        ),
    )(*args)


# ----------------------------------------------------------------------------
# Weight transforms (PyTorch layouts -> (9, Cin, Cout) tap matrices)
# ----------------------------------------------------------------------------
def w9_from_conv(w):
    # Conv2d weight (Cout, Cin, 3, 3) -> (9, Cin, Cout), tap t = kh*3 + kw.
    return jnp.transpose(w, (2, 3, 1, 0)).reshape(9, w.shape[1], w.shape[0])


def w9_from_convT(w):
    # ConvTranspose2d weight (Cin, Cout, 3, 3): equivalent direct conv uses the
    # spatially flipped kernel with (in, out) swapped.
    w_eq = jnp.transpose(jnp.flip(w, axis=(2, 3)), (1, 0, 2, 3))  # (Cout, Cin, 3, 3)
    return w9_from_conv(w_eq)


# ----------------------------------------------------------------------------
# Full REDNet30_stft forward (Pallas kernels for every conv/deconv)
# ----------------------------------------------------------------------------
def rednet30_stft_forward(x_nchw, params, num_layers=15):
    n = x_nchw.shape[0]
    x = jnp.transpose(x_nchw, (0, 2, 3, 1))   # NHWC internally
    residual = x

    def pad1(t):
        return jnp.pad(t, ((0, 0), (1, 1), (1, 1), (0, 0)))

    max_feats = -(-num_layers // 2) - 1       # math.ceil(num_layers/2) - 1

    # ----- encoder -----
    conv_feats = []
    for i in range(num_layers):
        x = conv3x3_same(pad1(x), w9_from_conv(params['conv_w'][i]),
                         params['conv_b'][i], relu1=True)
        if i == 0:
            # stride-2 conv == stride-1 conv subsampled at even rows/cols
            x = x[:, ::2, ::2, :]
        if (i + 1) % 2 == 0 and len(conv_feats) < max_feats:
            conv_feats.append(x)

    # ----- decoder -----
    feat_idx = 0
    for i in range(num_layers):
        w9 = w9_from_convT(params['deconv_w'][i])
        b = params['deconv_b'][i]
        if i < num_layers - 1:
            take_skip = ((i + 1 + num_layers) % 2 == 0
                         and feat_idx < len(conv_feats))
            skip = conv_feats[-(feat_idx + 1)] if take_skip else None
            if take_skip:
                feat_idx += 1
            x = conv3x3_same(pad1(x), w9, b, skip=skip,
                             relu1=True, relu2=take_skip)
        else:
            # Final layer: stride-2 ConvTranspose2d(pad=1, output_padding=1)
            # == zero-dilate the input, 1-halo pad, stride-1 conv with the
            # flipped/transposed weights. Fuse the network-level residual add
            # and final ReLU into the same kernel call.
            hi, wi, cin = x.shape[1], x.shape[2], x.shape[3]
            x_dil = jnp.zeros((n, 2 * hi + 2, 2 * wi + 2, cin), x.dtype)
            x_dil = x_dil.at[:, 1:2 * hi:2, 1:2 * wi:2, :].set(x)
            x = conv3x3_same(x_dil, w9, b, skip=residual,
                             relu1=False, relu2=True)

    return jnp.transpose(x, (0, 3, 1, 2))     # back to NCHW


# ----------------------------------------------------------------------------
# Pure-JAX reference (lax convolutions) mirroring the PyTorch forward
# ----------------------------------------------------------------------------
def reference_forward(x, params, num_layers=15):
    def conv(x, w, b, stride):
        y = lax.conv_general_dilated(
            x, w, window_strides=(stride, stride), padding=((1, 1), (1, 1)),
            dimension_numbers=('NCHW', 'OIHW', 'NCHW'))
        return y + b[None, :, None, None]

    def conv_transpose(x, w, b, stride, output_padding):
        # ConvTranspose2d(k=3, padding=1) via the standard dilated-conv identity.
        w_eq = jnp.transpose(jnp.flip(w, axis=(2, 3)), (1, 0, 2, 3))
        pad = (1, 1 + output_padding)
        y = lax.conv_general_dilated(
            x, w_eq, window_strides=(1, 1), padding=(pad, pad),
            lhs_dilation=(stride, stride),
            dimension_numbers=('NCHW', 'OIHW', 'NCHW'))
        return y + b[None, :, None, None]

    relu = lambda t: jnp.maximum(t, 0.0)
    max_feats = -(-num_layers // 2) - 1

    residual = x
    feats = []
    for i in range(num_layers):
        x = relu(conv(x, params['conv_w'][i], params['conv_b'][i],
                      2 if i == 0 else 1))
        if (i + 1) % 2 == 0 and len(feats) < max_feats:
            feats.append(x)
    idx = 0
    for i in range(num_layers):
        last = (i == num_layers - 1)
        x = conv_transpose(x, params['deconv_w'][i], params['deconv_b'][i],
                           2 if last else 1, 1 if last else 0)
        if not last:
            x = relu(x)
        if (i + 1 + num_layers) % 2 == 0 and idx < len(feats):
            x = x + feats[-(idx + 1)]
            idx += 1
            x = relu(x)
    return relu(x + residual)


# ----------------------------------------------------------------------------
# Parameter init (PyTorch layouts, deterministic)
# ----------------------------------------------------------------------------
def init_params(key, num_layers=15, num_features=8):
    nf2 = num_features * 2
    params = {'conv_w': [], 'conv_b': [], 'deconv_w': [], 'deconv_b': []}

    def nxt():
        nonlocal key
        key, sub = jax.random.split(key)
        return sub

    conv_shapes = ([(nf2, num_features, 3, 3)]
                   + [(nf2, nf2, 3, 3)] * (num_layers - 1))
    for s in conv_shapes:                     # Conv2d: (Cout, Cin, kH, kW)
        fan_in = s[1] * 9
        params['conv_w'].append(
            jax.random.normal(nxt(), s, jnp.float32) * (2.0 / fan_in) ** 0.5)
        params['conv_b'].append(
            jax.random.normal(nxt(), (s[0],), jnp.float32) * 0.01)

    deconv_shapes = ([(nf2, nf2, 3, 3)] * (num_layers - 1)
                     + [(nf2, num_features, 3, 3)])
    for s in deconv_shapes:                   # ConvTranspose2d: (Cin, Cout, kH, kW)
        fan_in = s[0] * 9
        params['deconv_w'].append(
            jax.random.normal(nxt(), s, jnp.float32) * (2.0 / fan_in) ** 0.5)
        params['deconv_b'].append(
            jax.random.normal(nxt(), (s[1],), jnp.float32) * 0.01)
    return params


if __name__ == "__main__":
    num_layers, num_features = 15, 8
    batch, height, width = 2, 16, 16

    key = jax.random.PRNGKey(0)
    key, kx = jax.random.split(key)
    x = jax.random.normal(kx, (batch, num_features, height, width),
                          dtype=jnp.float32)
    params = init_params(key, num_layers, num_features)

    out = rednet30_stft_forward(x, params, num_layers)
    out = jax.block_until_ready(out)
    assert out.shape == x.shape, out.shape

    ref = reference_forward(x, params, num_layers)
    err = float(jnp.max(jnp.abs(out - ref)))
    scale = float(jnp.max(jnp.abs(ref))) + 1e-6
    assert err / scale < 1e-4, f"mismatch vs reference: err={err}, scale={scale}"

    print("KERNEL_OK")
</pallas_src>

<mosaic_0001>
module attributes {stable_mosaic.version = 11 : i64} {
  func.func @_conv3x3_kernel(%arg0: i32, %arg1: memref<1x18x18x8xf32, #tpu.memory_space<vmem>>, %arg2: memref<9x8x16xf32, #tpu.memory_space<vmem>>, %arg3: memref<1x16xf32, #tpu.memory_space<vmem>>, %arg4: memref<1x16x16x16xf32, #tpu.memory_space<vmem>>) attributes {dimension_semantics = [#tpu.dimension_semantics<parallel>], iteration_bounds = array<i64: 2>, scalar_prefetch = 0 : i64, scratch_operands = 0 : i64, tpu.core_type = #tpu.core_type<tc>, window_params = [{transform_indices = @transform_0, window_bounds = array<i64: 1, 18, 18, 8>}, {pipeline_mode = #tpu.pipeline_mode<synchronous>, transform_indices = @transform_1, window_bounds = array<i64: 9, 8, 16>}, {pipeline_mode = #tpu.pipeline_mode<synchronous>, transform_indices = @transform_2, window_bounds = array<i64: 1, 16>}, {transform_indices = @transform_3, window_bounds = array<i64: 1, 16, 16, 16>}]} {
    %cst = arith.constant 0.000000e+00 : f32
    %0 = vector.broadcast %cst : f32 to vector<256x16xf32>
    %c0 = arith.constant 0 : index
    %c0_0 = arith.constant 0 : index
    %c0_1 = arith.constant 0 : index
    %c0_2 = arith.constant 0 : index
    %1 = vector.load %arg1[%c0, %c0_0, %c0_1, %c0_2] : memref<1x18x18x8xf32, #tpu.memory_space<vmem>>, vector<1x16x16x8xf32>
    %2 = vector.shape_cast %1 : vector<1x16x16x8xf32> to vector<256x8xf32>
    %c0_3 = arith.constant 0 : index
    %c0_4 = arith.constant 0 : index
    %c0_5 = arith.constant 0 : index
    %3 = vector.load %arg2[%c0_3, %c0_4, %c0_5] : memref<9x8x16xf32, #tpu.memory_space<vmem>>, vector<1x8x16xf32>
    %4 = vector.shape_cast %3 : vector<1x8x16xf32> to vector<8x16xf32>
    %cst_6 = arith.constant dense<0.000000e+00> : vector<256x16xf32>
    %5 = tpu.matmul %2, %4, %cst_6 {dimension_numbers = #tpu.dot_dimension_numbers<[1], [0], [0], [1], [0, 0, 1, 1], [], []>} : vector<256x8xf32>, vector<8x16xf32>, vector<256x16xf32> -> vector<256x16xf32>
    %6 = arith.addf %0, %5 : vector<256x16xf32>
    %c0_7 = arith.constant 0 : index
    %c0_8 = arith.constant 0 : index
    %c1 = arith.constant 1 : index
    %c0_9 = arith.constant 0 : index
    %7 = vector.load %arg1[%c0_7, %c0_8, %c1, %c0_9] : memref<1x18x18x8xf32, #tpu.memory_space<vmem>>, vector<1x16x16x8xf32>
    %8 = vector.shape_cast %7 : vector<1x16x16x8xf32> to vector<256x8xf32>
    %c1_10 = arith.constant 1 : index
    %c0_11 = arith.constant 0 : index
    %c0_12 = arith.constant 0 : index
    %9 = vector.load %arg2[%c1_10, %c0_11, %c0_12] : memref<9x8x16xf32, #tpu.memory_space<vmem>>, vector<1x8x16xf32>
    %10 = vector.shape_cast %9 : vector<1x8x16xf32> to vector<8x16xf32>
    %cst_13 = arith.constant dense<0.000000e+00> : vector<256x16xf32>
    %11 = tpu.matmul %8, %10, %cst_13 {dimension_numbers = #tpu.dot_dimension_numbers<[1], [0], [0], [1], [0, 0, 1, 1], [], []>} : vector<256x8xf32>, vector<8x16xf32>, vector<256x16xf32> -> vector<256x16xf32>
    %12 = arith.addf %6, %11 : vector<256x16xf32>
    %c0_14 = arith.constant 0 : index
    %c0_15 = arith.constant 0 : index
    %c2 = arith.constant 2 : index
    %c0_16 = arith.constant 0 : index
    %13 = vector.load %arg1[%c0_14, %c0_15, %c2, %c0_16] : memref<1x18x18x8xf32, #tpu.memory_space<vmem>>, vector<1x16x16x8xf32>
    %14 = vector.shape_cast %13 : vector<1x16x16x8xf32> to vector<256x8xf32>
    %c2_17 = arith.constant 2 : index
    %c0_18 = arith.constant 0 : index
    %c0_19 = arith.constant 0 : index
    %15 = vector.load %arg2[%c2_17, %c0_18, %c0_19] : memref<9x8x16xf32, #tpu.memory_space<vmem>>, vector<1x8x16xf32>
    %16 = vector.shape_cast %15 : vector<1x8x16xf32> to vector<8x16xf32>
    %cst_20 = arith.constant dense<0.000000e+00> : vector<256x16xf32>
    %17 = tpu.matmul %14, %16, %cst_20 {dimension_numbers = #tpu.dot_dimension_numbers<[1], [0], [0], [1], [0, 0, 1, 1], [], []>} : vector<256x8xf32>, vector<8x16xf32>, vector<256x16xf32> -> vector<256x16xf32>
    %18 = arith.addf %12, %17 : vector<256x16xf32>
    %c0_21 = arith.constant 0 : index
    %c1_22 = arith.constant 1 : index
    %c0_23 = arith.constant 0 : index
    %c0_24 = arith.constant 0 : index
    %19 = vector.load %arg1[%c0_21, %c1_22, %c0_23, %c0_24] : memref<1x18x18x8xf32, #tpu.memory_space<vmem>>, vector<1x16x16x8xf32>
    %20 = vector.shape_cast %19 : vector<1x16x16x8xf32> to vector<256x8xf32>
    %c3 = arith.constant 3 : index
    %c0_25 = arith.constant 0 : index
    %c0_26 = arith.constant 0 : index
    %21 = vector.load %arg2[%c3, %c0_25, %c0_26] : memref<9x8x16xf32, #tpu.memory_space<vmem>>, vector<1x8x16xf32>
    %22 = vector.shape_cast %21 : vector<1x8x16xf32> to vector<8x16xf32>
    %cst_27 = arith.constant dense<0.000000e+00> : vector<256x16xf32>
    %23 = tpu.matmul %20, %22, %cst_27 {dimension_numbers = #tpu.dot_dimension_numbers<[1], [0], [0], [1], [0, 0, 1, 1], [], []>} : vector<256x8xf32>, vector<8x16xf32>, vector<256x16xf32> -> vector<256x16xf32>
    %24 = arith.addf %18, %23 : vector<256x16xf32>
    %c0_28 = arith.constant 0 : index
    %c1_29 = arith.constant 1 : index
    %c1_30 = arith.constant 1 : index
    %c0_31 = arith.constant 0 : index
    %25 = vector.load %arg1[%c0_28, %c1_29, %c1_30, %c0_31] : memref<1x18x18x8xf32, #tpu.memory_space<vmem>>, vector<1x16x16x8xf32>
    %26 = vector.shape_cast %25 : vector<1x16x16x8xf32> to vector<256x8xf32>
    %c4 = arith.constant 4 : index
    %c0_32 = arith.constant 0 : index
    %c0_33 = arith.constant 0 : index
    %27 = vector.load %arg2[%c4, %c0_32, %c0_33] : memref<9x8x16xf32, #tpu.memory_space<vmem>>, vector<1x8x16xf32>
    %28 = vector.shape_cast %27 : vector<1x8x16xf32> to vector<8x16xf32>
    %cst_34 = arith.constant dense<0.000000e+00> : vector<256x16xf32>
    %29 = tpu.matmul %26, %28, %cst_34 {dimension_numbers = #tpu.dot_dimension_numbers<[1], [0], [0], [1], [0, 0, 1, 1], [], []>} : vector<256x8xf32>, vector<8x16xf32>, vector<256x16xf32> -> vector<256x16xf32>
    %30 = arith.addf %24, %29 : vector<256x16xf32>
    %c0_35 = arith.constant 0 : index
    %c1_36 = arith.constant 1 : index
    %c2_37 = arith.constant 2 : index
    %c0_38 = arith.constant 0 : index
    %31 = vector.load %arg1[%c0_35, %c1_36, %c2_37, %c0_38] : memref<1x18x18x8xf32, #tpu.memory_space<vmem>>, vector<1x16x16x8xf32>
    %32 = vector.shape_cast %31 : vector<1x16x16x8xf32> to vector<256x8xf32>
    %c5 = arith.constant 5 : index
    %c0_39 = arith.constant 0 : index
    %c0_40 = arith.constant 0 : index
    %33 = vector.load %arg2[%c5, %c0_39, %c0_40] : memref<9x8x16xf32, #tpu.memory_space<vmem>>, vector<1x8x16xf32>
    %34 = vector.shape_cast %33 : vector<1x8x16xf32> to vector<8x16xf32>
    %cst_41 = arith.constant dense<0.000000e+00> : vector<256x16xf32>
    %35 = tpu.matmul %32, %34, %cst_41 {dimension_numbers = #tpu.dot_dimension_numbers<[1], [0], [0], [1], [0, 0, 1, 1], [], []>} : vector<256x8xf32>, vector<8x16xf32>, vector<256x16xf32> -> vector<256x16xf32>
    %36 = arith.addf %30, %35 : vector<256x16xf32>
    %c0_42 = arith.constant 0 : index
    %c2_43 = arith.constant 2 : index
    %c0_44 = arith.constant 0 : index
    %c0_45 = arith.constant 0 : index
    %37 = vector.load %arg1[%c0_42, %c2_43, %c0_44, %c0_45] : memref<1x18x18x8xf32, #tpu.memory_space<vmem>>, vector<1x16x16x8xf32>
    %38 = vector.shape_cast %37 : vector<1x16x16x8xf32> to vector<256x8xf32>
    %c6 = arith.constant 6 : index
    %c0_46 = arith.constant 0 : index
    %c0_47 = arith.constant 0 : index
    %39 = vector.load %arg2[%c6, %c0_46, %c0_47] : memref<9x8x16xf32, #tpu.memory_space<vmem>>, vector<1x8x16xf32>
    %40 = vector.shape_cast %39 : vector<1x8x16xf32> to vector<8x16xf32>
    %cst_48 = arith.constant dense<0.000000e+00> : vector<256x16xf32>
    %41 = tpu.matmul %38, %40, %cst_48 {dimension_numbers = #tpu.dot_dimension_numbers<[1], [0], [0], [1], [0, 0, 1, 1], [], []>} : vector<256x8xf32>, vector<8x16xf32>, vector<256x16xf32> -> vector<256x16xf32>
    %42 = arith.addf %36, %41 : vector<256x16xf32>
    %c0_49 = arith.constant 0 : index
    %c2_50 = arith.constant 2 : index
    %c1_51 = arith.constant 1 : index
    %c0_52 = arith.constant 0 : index
    %43 = vector.load %arg1[%c0_49, %c2_50, %c1_51, %c0_52] : memref<1x18x18x8xf32, #tpu.memory_space<vmem>>, vector<1x16x16x8xf32>
    %44 = vector.shape_cast %43 : vector<1x16x16x8xf32> to vector<256x8xf32>
    %c7 = arith.constant 7 : index
    %c0_53 = arith.constant 0 : index
    %c0_54 = arith.constant 0 : index
    %45 = vector.load %arg2[%c7, %c0_53, %c0_54] : memref<9x8x16xf32, #tpu.memory_space<vmem>>, vector<1x8x16xf32>
    %46 = vector.shape_cast %45 : vector<1x8x16xf32> to vector<8x16xf32>
    %cst_55 = arith.constant dense<0.000000e+00> : vector<256x16xf32>
    %47 = tpu.matmul %44, %46, %cst_55 {dimension_numbers = #tpu.dot_dimension_numbers<[1], [0], [0], [1], [0, 0, 1, 1], [], []>} : vector<256x8xf32>, vector<8x16xf32>, vector<256x16xf32> -> vector<256x16xf32>
    %48 = arith.addf %42, %47 : vector<256x16xf32>
    %c0_56 = arith.constant 0 : index
    %c2_57 = arith.constant 2 : index
    %c2_58 = arith.constant 2 : index
    %c0_59 = arith.constant 0 : index
    %49 = vector.load %arg1[%c0_56, %c2_57, %c2_58, %c0_59] : memref<1x18x18x8xf32, #tpu.memory_space<vmem>>, vector<1x16x16x8xf32>
    %50 = vector.shape_cast %49 : vector<1x16x16x8xf32> to vector<256x8xf32>
    %c8 = arith.constant 8 : index
    %c0_60 = arith.constant 0 : index
    %c0_61 = arith.constant 0 : index
    %51 = vector.load %arg2[%c8, %c0_60, %c0_61] : memref<9x8x16xf32, #tpu.memory_space<vmem>>, vector<1x8x16xf32>
    %52 = vector.shape_cast %51 : vector<1x8x16xf32> to vector<8x16xf32>
    %cst_62 = arith.constant dense<0.000000e+00> : vector<256x16xf32>
    %53 = tpu.matmul %50, %52, %cst_62 {dimension_numbers = #tpu.dot_dimension_numbers<[1], [0], [0], [1], [0, 0, 1, 1], [], []>} : vector<256x8xf32>, vector<8x16xf32>, vector<256x16xf32> -> vector<256x16xf32>
    %54 = arith.addf %48, %53 : vector<256x16xf32>
    %c0_63 = arith.constant 0 : index
    %c0_64 = arith.constant 0 : index
    %55 = vector.load %arg3[%c0_63, %c0_64] : memref<1x16xf32, #tpu.memory_space<vmem>>, vector<1x16xf32>
    %56 = vector.broadcast %55 : vector<1x16xf32> to vector<256x16xf32>
    %57 = arith.addf %54, %56 : vector<256x16xf32>
    %cst_65 = arith.constant 0.000000e+00 : f32
    %58 = vector.broadcast %cst_65 : f32 to vector<256x16xf32>
    %59 = arith.maximumf %57, %58 : vector<256x16xf32>
    %60 = vector.shape_cast %59 : vector<256x16xf32> to vector<1x16x16x16xf32>
    %c0_66 = arith.constant 0 : index
    %c0_67 = arith.constant 0 : index
    %c0_68 = arith.constant 0 : index
    %c0_69 = arith.constant 0 : index
    %61 = vector.load %arg4[%c0_66, %c0_67, %c0_68, %c0_69] : memref<1x16x16x16xf32, #tpu.memory_space<vmem>>, vector<1x16x16x16xf32>
    tpu.vector_store %arg4[%c0_66, %c0_67, %c0_68, %c0_69], %60 {strides = array<i32>} : memref<1x16x16x16xf32, #tpu.memory_space<vmem>>, vector<1x16x16x16xf32>,
    return
  }
  func.func @transform_0(%arg0: i32) -> (i32, i32, i32, i32) {
    %c0_i32 = arith.constant 0 : i32
    %c0_i32_0 = arith.constant 0 : i32
    %c0_i32_1 = arith.constant 0 : i32
    %c0_i32_2 = arith.constant 0 : i32
    return %arg0, %c0_i32, %c0_i32_0, %c0_i32_1 : i32, i32, i32, i32
  }
  func.func @transform_1(%arg0: i32) -> (i32, i32, i32) {
    %c0_i32 = arith.constant 0 : i32
    %c0_i32_0 = arith.constant 0 : i32
    %c0_i32_1 = arith.constant 0 : i32
    %c0_i32_2 = arith.constant 0 : i32
    return %c0_i32, %c0_i32_0, %c0_i32_1 : i32, i32, i32
  }
  func.func @transform_2(%arg0: i32) -> (i32, i32) {
    %c0_i32 = arith.constant 0 : i32
    %c0_i32_0 = arith.constant 0 : i32
    %c0_i32_1 = arith.constant 0 : i32
    return %c0_i32, %c0_i32_0 : i32, i32
  }
  func.func @transform_3(%arg0: i32) -> (i32, i32, i32, i32) {
    %c0_i32 = arith.constant 0 : i32
    %c0_i32_0 = arith.constant 0 : i32
    %c0_i32_1 = arith.constant 0 : i32
    %c0_i32_2 = arith.constant 0 : i32
    return %arg0, %c0_i32, %c0_i32_0, %c0_i32_1 : i32, i32, i32, i32
  }
}

</mosaic_0001>

<llo_original>
// kernel: tpu_custom_call.1
$region0: #{tpu_custom_call.1}
  #allocation0 [shape = 'u32[]', space=smem, size = 0x4, offset = 0x4, fixed_abs, tag = 'smem constant byte address 0x4 - core index']
  #allocation1 [shape = 'u32[144,128]{1,0:T(1,128)}', space=vmem, size = 0x12000, scoped, tag = 'internal scratch']
  %s0 = inlined_call_operand.hbm [shape: f32[2,18,18,8], index: 0, kind: input, shape index: {}]
  %s1 = inlined_call_operand.hbm [shape: f32[9,8,16], index: 1, kind: input, shape index: {}]
  %s2 = inlined_call_operand.hbm [shape: f32[1,16], index: 2, kind: input, shape index: {}]
  %s3 = inlined_call_operand.hbm [shape: f32[2,16,16,16], index: 3, kind: output, shape index: {}]
  %s4 = sld [smem:[#allocation0]]
  $region57: #{tpu_custom_call.1} parent=0
    _
  %s6 = ssub.s32 1, %s4
  %s7 = scalar_select 0, %s6, %s4
  $region1: #{tpu_custom_call.1} parent=0
    #allocation2 [shape = 'u8[442368]{0}', space=vmem, size = 0x6c000, scoped, tag = 'input window, operand 0']
    #allocation3 [shape = 's32[2]{0}', space=sflag, size = 0x8, scoped, tag = 'scoped memory for tpu_custom_call.1']
    #allocation4 [shape = 's32[2]{0}', space=sflag, size = 0x8, scoped, tag = 'scoped memory for tpu_custom_call.1']
    #allocation5 [shape = 'u8[36864]{0}', space=vmem, size = 0x9000, scoped, tag = 'input window, operand 1, single buffered']
    #allocation6 [shape = 's32[1]{0}', space=sflag, size = 0x4, scoped, tag = 'scoped memory for tpu_custom_call.1']
    #allocation7 [shape = 'u8[512]{0}', space=vmem, size = 0x400, scoped, tag = 'input window, operand 2, single buffered']
    #allocation8 [shape = 'u8[262144]{0}', space=vmem, size = 0x40000, scoped, tag = 'output window, operand 0']
    %8 = vsyncpa [#allocation3], 0
    %s9 = scalar_lea.sflag [#allocation3], 1
    %10 = vsyncpa %s9, 0
    %11 = vsyncpa [#allocation6], 0
    %12 = vsyncpa [#allocation4], 0
    %s13 = scalar_lea.sflag [#allocation4], 1
    %14 = vsyncpa %s13, 0
    loop: start=0, step=1, limit=4
    $region2: #{tpu_custom_call.1} parent=1 // loop_pre_header
      _
    $region3: #{tpu_custom_call.1} parent=1 // loop_header
      %s16 = sphi 0, %s20
      %p17 = scmp.ge.s32.totalorder %s16, 4
      %s26 = sphi 0, %s28
      %s29 = sphi 0, %s26
      %s30 = sphi 0, %s29
      %s46 = sphi 0, %s30
      %s50 = sphi 0, %s50
      %s52 = sphi 0, %s50
      %s53 = sphi 0, %s52
      %s67 = sphi 0, %s53
      %s71 = sphi 0, %s71
      %s73 = sphi 0, %s71
      %s74 = sphi 0, %s73
      %s88 = sphi 0, %s74
      %s94 = sphi 0, %s96
      %s97 = sphi 0, %s94
      %s98 = sphi 0, %s97
      %s114 = sphi 0, %s98
    $region4: #{tpu_custom_call.1} parent=1 // loop_header_branch
      %19 = sbr.rel (%p17) target = $region8
    $region5: #{tpu_custom_call.1} parent=1 // loop_body
      %s21 = ssub.s32 %s16, 1
      %s22 = ssub.s32 %s16, 2
      %s23 = sadd.s32 %s16, 1
      %s24 = ssub.s32 %s16, %s23
      %p25 = scmp.eq.s32.totalorder %s24, 0
      %s27 = sadd.s32 %s26, 1
      %s28 = scalar_select %p25, %s26, %s27
      %p31 = pneg %p25
      %p32 = scmp.eq.s32.totalorder %s16, 1
      %p33 = por %p31, %p32
      %p34 = scmp.ne.s32.totalorder %s26, %s29
      %p35 = scmp.eq.s32.totalorder %s16, 0
      %p36 = por %p34, %p35
      %p37 = scmp.ne.s32.totalorder %s26, %s29
      %p38 = scmp.eq.s32.totalorder %s21, 1
      %p39 = por %p37, %p38
      %p40 = scmp.ne.s32.totalorder %s29, %s30
      %p41 = scmp.eq.s32.totalorder %s21, 0
      %p42 = por %p40, %p41
      %p43 = scmp.ne.s32.totalorder %s29, %s30
      %p44 = scmp.eq.s32.totalorder %s22, 1
      %p45 = por %p43, %p44
      %p47 = scmp.ne.s32.totalorder %s30, %s46
      %p48 = scmp.eq.s32.totalorder %s22, 0
      %p49 = por %p47, %p48
      %s51 = sadd.s32 %s50, 1
      %p54 = scmp.eq.s32.totalorder %s16, 1
      %p55 = scmp.ne.s32.totalorder %s50, %s52
      %p56 = scmp.eq.s32.totalorder %s16, 0
      %p57 = por %p55, %p56
      %p58 = scmp.ne.s32.totalorder %s50, %s52
      %p59 = scmp.eq.s32.totalorder %s21, 1
      %p60 = por %p58, %p59
      %p61 = scmp.ne.s32.totalorder %s52, %s53
      %p62 = scmp.eq.s32.totalorder %s21, 0
      %p63 = por %p61, %p62
      %p64 = scmp.ne.s32.totalorder %s52, %s53
      %p65 = scmp.eq.s32.totalorder %s22, 1
      %p66 = por %p64, %p65
      %p68 = scmp.ne.s32.totalorder %s53, %s67
      %p69 = scmp.eq.s32.totalorder %s22, 0
      %p70 = por %p68, %p69
      %s72 = sadd.s32 %s71, 1
      %p75 = scmp.eq.s32.totalorder %s16, 1
      %p76 = scmp.ne.s32.totalorder %s71, %s73
      %p77 = scmp.eq.s32.totalorder %s16, 0
      %p78 = por %p76, %p77
      %p79 = scmp.ne.s32.totalorder %s71, %s73
      %p80 = scmp.eq.s32.totalorder %s21, 1
      %p81 = por %p79, %p80
      %p82 = scmp.ne.s32.totalorder %s73, %s74
      %p83 = scmp.eq.s32.totalorder %s21, 0
      %p84 = por %p82, %p83
      %p85 = scmp.ne.s32.totalorder %s73, %s74
      %p86 = scmp.eq.s32.totalorder %s22, 1
      %p87 = por %p85, %p86
      %p89 = scmp.ne.s32.totalorder %s74, %s88
      %p90 = scmp.eq.s32.totalorder %s22, 0
      %p91 = por %p89, %p90
      %s92 = ssub.s32 %s16, %s23
      %p93 = scmp.eq.s32.totalorder %s92, 0
      %s95 = sadd.s32 %s94, 1
      %s96 = scalar_select %p93, %s94, %s95
      %p99 = pneg %p93
      %p100 = scmp.eq.s32.totalorder %s16, 1
      %p101 = por %p99, %p100
      %p102 = scmp.ne.s32.totalorder %s94, %s97
      %p103 = scmp.eq.s32.totalorder %s16, 0
      %p104 = por %p102, %p103
      %p105 = scmp.ne.s32.totalorder %s94, %s97
      %p106 = scmp.eq.s32.totalorder %s21, 1
      %p107 = por %p105, %p106
      %p108 = scmp.ne.s32.totalorder %s97, %s98
      %p109 = scmp.eq.s32.totalorder %s21, 0
      %p110 = por %p108, %p109
      %p111 = scmp.ne.s32.totalorder %s97, %s98
      %p112 = scmp.eq.s32.totalorder %s22, 1
      %p113 = por %p111, %p112
      %p115 = scmp.ne.s32.totalorder %s98, %s114
      %p116 = scmp.eq.s32.totalorder %s22, 0
      %p117 = por %p115, %p116
      %p118 = scmp.le.s32.totalorder 1, %s16
      %p119 = scmp.lt.s32.totalorder %s16, 3
      %p120 = pnand %p118, %p119
      %p121 = pneg %p120
      // Predicated region
      $region9: #{tpu_custom_call.1} parent=5 // pred_check
        _
      $region10: #{tpu_custom_call.1} parent=5 // pred_check_branch
        %123 = sbr.rel (%p120) target = $region12
      $region11: #{tpu_custom_call.1} parent=5 // pred_region
        %s124 = ssub.s32 %s16, 1
        // Predicated region
        $region13: #{tpu_custom_call.1} parent=11 // pred_check
          %p125 = pneg %p63
        $region14: #{tpu_custom_call.1} parent=11 // pred_check_branch
          %127 = sbr.rel (%p125) target = $region16
        $region15: #{tpu_custom_call.1} parent=11 // pred_region
          %s129 = ssub.s32 1152, 1152
          %130 = vsyncadd [#allocation6], %s129
          %s131 = sshll.u32 [#allocation5], 4
          %s132 = int_to_ptr.vmem [resolvable:$true] %s131
          %137 = dma.hbm_to_vmem [thread:$0]  %s1, 1152, %s132, [#allocation6], 128, 128, 8
        $region16: #{tpu_custom_call.1} parent=11 // pred_fallthru
          _
        // Predicated region
        $region17: #{tpu_custom_call.1} parent=11 // pred_check
          %p138 = pneg %p84
        $region18: #{tpu_custom_call.1} parent=11 // pred_check_branch
          %140 = sbr.rel (%p138) target = $region20
        $region19: #{tpu_custom_call.1} parent=11 // pred_region
          %s142 = ssub.s32 16, 16
          %143 = vsyncadd [#allocation6], %s142
          %s145 = sshll.u32 [#allocation7], 4
          %s146 = int_to_ptr.vmem [resolvable:$true] %s145
          %148 = dma.hbm_to_vmem [thread:$0]  %s2, 16, %s146, [#allocation6]
        $region20: #{tpu_custom_call.1} parent=11 // pred_fallthru
          _
      $region12: #{tpu_custom_call.1} parent=5 // pred_fallthru
        _
      %p149 = scmp.lt.s32.totalorder %s16, 2
      // Predicated region
      $region21: #{tpu_custom_call.1} parent=5 // pred_check
        %p150 = pneg %p149
      $region22: #{tpu_custom_call.1} parent=5 // pred_check_branch
        %152 = sbr.rel (%p150) target = $region24
      $region23: #{tpu_custom_call.1} parent=5 // pred_region
        // Predicated region
        $region25: #{tpu_custom_call.1} parent=23 // pred_check
          %p153 = pneg %p36
        $region26: #{tpu_custom_call.1} parent=23 // pred_check_branch
          %155 = sbr.rel (%p153) target = $region28
        $region27: #{tpu_custom_call.1} parent=23 // pred_region
          %s156 = sand.u32 %s26, 1
          %s157 = scalar_lea.sflag [#allocation3], %s156
          %s158 = sand.u32 %s26, 1
          %s159 = smul.addr %s158, 432
          %s160 = scalar_lea.vmem [#allocation2], %s159
          %s162 = ssub.s32 6912, 6912
          %163 = vsyncadd %s157, %s162
          %s164 = smul.addr %s16, 54
          %s165 = smul.addr %s164, 128
          %s166 = scalar_lea.hbm %s0, %s165
          %s167 = sshll.u32 %s160, 4
          %s168 = int_to_ptr.vmem [resolvable:$true] %s167
          %173 = dma.hbm_to_vmem [thread:$0]  %s166, 6912, %s168, %s157, 128, 128, 8
        $region28: #{tpu_custom_call.1} parent=23 // pred_fallthru
          _
      $region24: #{tpu_custom_call.1} parent=5 // pred_fallthru
        _
      %p174 = scmp.le.s32.totalorder 1, %s16
      %p175 = scmp.lt.s32.totalorder %s16, 3
      %p176 = pnand %p174, %p175
      %p177 = pneg %p176
      // Predicated region
      $region29: #{tpu_custom_call.1} parent=5 // pred_check
        _
      $region30: #{tpu_custom_call.1} parent=5 // pred_check_branch
        %179 = sbr.rel (%p176) target = $region32
      $region31: #{tpu_custom_call.1} parent=5 // pred_region
        %s180 = ssub.s32 %s16, 1
        %s181 = sand.u32 %s29, 1
        %s182 = scalar_lea.sflag [#allocation3], %s181
        %s183 = sand.u32 %s29, 1
        %s184 = smul.addr %s183, 432
        %s185 = scalar_lea.vmem [#allocation2], %s184
        // Predicated region
        $region33: #{tpu_custom_call.1} parent=31 // pred_check
          %p186 = pneg %p42
        $region34: #{tpu_custom_call.1} parent=31 // pred_check_branch
          %188 = sbr.rel (%p186) target = $region36
        $region35: #{tpu_custom_call.1} parent=31 // pred_region
          %189 = dma.done %s182, 6912
        $region36: #{tpu_custom_call.1} parent=31 // pred_fallthru
          _
        // Predicated region
        $region37: #{tpu_custom_call.1} parent=31 // pred_check
          %p190 = pneg %p63
        $region38: #{tpu_custom_call.1} parent=31 // pred_check_branch
          %192 = sbr.rel (%p190) target = $region40
        $region39: #{tpu_custom_call.1} parent=31 // pred_region
          %193 = dma.done [#allocation6], 1152
        $region40: #{tpu_custom_call.1} parent=31 // pred_fallthru
          _
        // Predicated region
        $region41: #{tpu_custom_call.1} parent=31 // pred_check
          %p194 = pneg %p84
        $region42: #{tpu_custom_call.1} parent=31 // pred_check_branch
          %196 = sbr.rel (%p194) target = $region44
        $region43: #{tpu_custom_call.1} parent=31 // pred_region
          %197 = dma.done [#allocation6], 16
        $region44: #{tpu_custom_call.1} parent=31 // pred_fallthru
          _
        %s198 = sand.u32 %s29, 1
        %s199 = scalar_lea.sflag [#allocation3], %s198
        %s200 = sand.u32 %s29, 1
        %s201 = smul.addr %s200, 432
        %s202 = scalar_lea.vmem [#allocation2], %s201
        %p203 = pneg %p42
        %p204 = pneg %p39
        %p205 = pneg %p63
        %p206 = pneg %p60
        %p207 = pneg %p84
        %p208 = pneg %p81
        %p209 = pneg %p110
        %p210 = pneg %p107
        %s211 = sand.u32 %s97, 1
        %s212 = scalar_lea.sflag [#allocation4], %s211
        %s213 = sand.u32 %s97, 1
        %s214 = smul.addr %s213, 256
        %s215 = scalar_lea.vmem [#allocation8], %s214
        %v216 = vld [vmem:[%s185] sm:$0xff]
        %v217 = vld [vmem:[%s185 + $0x8] sm:$0xff]
        %v218 = vld [vmem:[%s185 + $0x18] sm:$0xff]
        %v219 = vld [vmem:[%s185 + $0x20] sm:$0xff]
        %v220 = vld [vmem:[%s185 + $0x30] sm:$0xff]
        %v221 = vld [vmem:[%s185 + $0x38] sm:$0xff]
        %v222 = vld [vmem:[%s185 + $0x48] sm:$0xff]
        %v223 = vld [vmem:[%s185 + $0x50] sm:$0xff]
        %v224 = vld [vmem:[%s185 + $0x60] sm:$0xff]
        %v225 = vld [vmem:[%s185 + $0x68] sm:$0xff]
        %v226 = vld [vmem:[%s185 + $0x78] sm:$0xff]
        %v227 = vld [vmem:[%s185 + $0x80] sm:$0xff]
        %v228 = vld [vmem:[%s185 + $0x90] sm:$0xff]
        %v229 = vld [vmem:[%s185 + $0x98] sm:$0xff]
        %v230 = vld [vmem:[%s185 + $0xa8] sm:$0xff]
        %v231 = vld [vmem:[%s185 + $0xb0] sm:$0xff]
        %v232 = vld [vmem:[%s185 + $0xc0] sm:$0xff]
        %v233 = vld [vmem:[%s185 + $0xc8] sm:$0xff]
        %v234 = vld [vmem:[%s185 + $0xd8] sm:$0xff]
        %v235 = vld [vmem:[%s185 + $0xe0] sm:$0xff]
        %v236 = vld [vmem:[%s185 + $0xf0] sm:$0xff]
        %v237 = vld [vmem:[%s185 + $0xf8] sm:$0xff]
        %v238 = vld [vmem:[%s185 + $0x108] sm:$0xff]
        %v239 = vld [vmem:[%s185 + $0x110] sm:$0xff]
        %v240 = vld [vmem:[%s185 + $0x120] sm:$0xff]
        %v241 = vld [vmem:[%s185 + $0x128] sm:$0xff]
        %v242 = vld [vmem:[%s185 + $0x138] sm:$0xff]
        %v243 = vld [vmem:[%s185 + $0x140] sm:$0xff]
        %v244 = vld [vmem:[%s185 + $0x150] sm:$0xff]
        %v245 = vld [vmem:[%s185 + $0x158] sm:$0xff]
        %v246 = vld [vmem:[%s185 + $0x168] sm:$0xff]
        %v247 = vld [vmem:[%s185 + $0x170] sm:$0xff]
        %v248 = vld [vmem:[#allocation5] sm:$0xff]
        %v249 = vld [vmem:[%s185 + $0x1] sm:$0xff]
        %v250 = vld [vmem:[%s185 + $0x9] sm:$0xff]
        %v251 = vld [vmem:[%s185 + $0x19] sm:$0xff]
        %v252 = vld [vmem:[%s185 + $0x21] sm:$0xff]
        %v253 = vld [vmem:[%s185 + $0x31] sm:$0xff]
        %v254 = vld [vmem:[%s185 + $0x39] sm:$0xff]
        %v255 = vld [vmem:[%s185 + $0x49] sm:$0xff]
        %v256 = vld [vmem:[%s185 + $0x51] sm:$0xff]
        %v257 = vld [vmem:[%s185 + $0x61] sm:$0xff]
        %v258 = vld [vmem:[%s185 + $0x69] sm:$0xff]
        %v259 = vld [vmem:[%s185 + $0x79] sm:$0xff]
        %v260 = vld [vmem:[%s185 + $0x81] sm:$0xff]
        %v261 = vld [vmem:[%s185 + $0x91] sm:$0xff]
        %v262 = vld [vmem:[%s185 + $0x99] sm:$0xff]
        %v263 = vld [vmem:[%s185 + $0xa9] sm:$0xff]
        %v264 = vld [vmem:[%s185 + $0xb1] sm:$0xff]
        %v265 = vld [vmem:[%s185 + $0xc1] sm:$0xff]
        %v266 = vld [vmem:[%s185 + $0xc9] sm:$0xff]
        %v267 = vld [vmem:[%s185 + $0xd9] sm:$0xff]
        %v268 = vld [vmem:[%s185 + $0xe1] sm:$0xff]
        %v269 = vld [vmem:[%s185 + $0xf1] sm:$0xff]
        %v270 = vld [vmem:[%s185 + $0xf9] sm:$0xff]
        %v271 = vld [vmem:[%s185 + $0x109] sm:$0xff]
        %v272 = vld [vmem:[%s185 + $0x111] sm:$0xff]
        %v273 = vld [vmem:[%s185 + $0x121] sm:$0xff]
        %v274 = vld [vmem:[%s185 + $0x129] sm:$0xff]
        %v275 = vld [vmem:[%s185 + $0x139] sm:$0xff]
        %v276 = vld [vmem:[%s185 + $0x141] sm:$0xff]
        %v277 = vld [vmem:[%s185 + $0x151] sm:$0xff]
        %v278 = vld [vmem:[%s185 + $0x159] sm:$0xff]
        %v279 = vld [vmem:[%s185 + $0x169] sm:$0xff]
        %v280 = vld [vmem:[%s185 + $0x171] sm:$0xff]
        %s281 = scalar_lea.vmem [#allocation5], 8
        %v282 = vld [vmem:[%s281] sm:$0xff]
        %vm283 = vcmask 64512
        %v285 = vsel %vm283, %v249, 0
        %v288 = vsel %vm283, %v250, 0
        %v291 = vsel %vm283, %v251, 0
        %v294 = vsel %vm283, %v252, 0
        %v297 = vsel %vm283, %v253, 0
        %v300 = vsel %vm283, %v254, 0
        %v303 = vsel %vm283, %v255, 0
        %v306 = vsel %vm283, %v256, 0
        %v309 = vsel %vm283, %v257, 0
        %v312 = vsel %vm283, %v258, 0
        %v315 = vsel %vm283, %v259, 0
        %v318 = vsel %vm283, %v260, 0
        %v321 = vsel %vm283, %v261, 0
        %v324 = vsel %vm283, %v262, 0
        %v327 = vsel %vm283, %v263, 0
        %v330 = vsel %vm283, %v264, 0
        %v333 = vsel %vm283, %v265, 0
        %v336 = vsel %vm283, %v266, 0
        %v339 = vsel %vm283, %v267, 0
        %v342 = vsel %vm283, %v268, 0
        %v345 = vsel %vm283, %v269, 0
        %v348 = vsel %vm283, %v270, 0
        %v351 = vsel %vm283, %v271, 0
        %v354 = vsel %vm283, %v272, 0
        %v357 = vsel %vm283, %v273, 0
        %v360 = vsel %vm283, %v274, 0
        %v363 = vsel %vm283, %v275, 0
        %v366 = vsel %vm283, %v276, 0
        %v369 = vsel %vm283, %v277, 0
        %v372 = vsel %vm283, %v278, 0
        %v375 = vsel %vm283, %v279, 0
        %v378 = vsel %vm283, %v280, 0
        %380 = vmatprep.subr.mxu0 0.0
        %381 = vmatpush1.msra.mxu0 %v282
        %382 = vmatprep.subr.mxu0 0.0
        %383 = vmatpush1.msra.mxu0 0.0
        %384 = vmatprep.subr.mxu0 0.0
        %385 = vmatpush1.msra.mxu0 0.0
        %386 = vmatprep.subr.mxu0 0.0
        %387 = vmatpush1.msra.mxu0 0.0
        %388 = vmatprep.subr.mxu0 0.0
        %389 = vmatpush1.msra.mxu0 0.0
        %390 = vmatprep.subr.mxu0 0.0
        %391 = vmatpush1.msra.mxu0 0.0
        %392 = vmatprep.subr.mxu0 0.0
        %393 = vmatpush1.msra.mxu0 0.0
        %394 = vmatprep.subr.mxu0 0.0
        %395 = vmatpush1.msra.mxu0 0.0
        %396 = vmatprep.subr.mxu0 0.0
        %397 = vmatpush1.msra.mxu0 0.0
        %398 = vmatprep.subr.mxu0 0.0
        %399 = vmatpush1.msra.mxu0 0.0
        %400 = vmatprep.subr.mxu0 0.0
        %401 = vmatpush1.msra.mxu0 0.0
        %402 = vmatprep.subr.mxu0 0.0
        %403 = vmatpush1.msra.mxu0 0.0
        %404 = vmatprep.subr.mxu0 0.0
        %405 = vmatpush1.msra.mxu0 0.0
        %406 = vmatprep.subr.mxu0 0.0
        %407 = vmatpush1.msra.mxu0 0.0
        %408 = vmatprep.subr.mxu0 0.0
        %409 = vmatpush1.msra.mxu0 0.0
        %410 = vmatprep.subr.mxu0 0.0
        %411 = vmatpush1.msra.mxu0 0.0
        %412 = vmatprep.subr.mxu0 0.0
        %413 = vmatpush1.msra.mxu0 0.0
        %414 = vmatprep.subr.mxu0 0.0
        %415 = vmatpush1.msra.mxu0 0.0
        %416 = vmatprep.subr.mxu0 0.0
        %417 = vmatpush1.msra.mxu0 0.0
        %418 = vmatprep.subr.mxu0 0.0
        %419 = vmatpush1.msra.mxu0 0.0
        %420 = vmatprep.subr.mxu0 0.0
        %421 = vmatpush1.msra.mxu0 0.0
        %422 = vmatprep.subr.mxu0 0.0
        %423 = vmatpush1.msra.mxu0 0.0
        %424 = vmatprep.subr.mxu0 0.0
        %425 = vmatpush1.msra.mxu0 0.0
        %426 = vmatprep.subr.mxu0 0.0
        %427 = vmatpush1.msra.mxu0 0.0
        %428 = vmatprep.subr.mxu0 0.0
        %429 = vmatpush1.msra.mxu0 0.0
        %430 = vmatprep.subr.mxu0 0.0
        %431 = vmatpush1.msra.mxu0 0.0
        %432 = vmatprep.subr.mxu0 0.0
        %433 = vmatpush1.msra.mxu0 0.0
        %434 = vmatprep.subr.mxu0 0.0
        %435 = vmatpush1.msra.mxu0 0.0
        %436 = vmatprep.subr.mxu0 0.0
        %437 = vmatpush1.msra.mxu0 0.0
        %438 = vmatprep.subr.mxu0 0.0
        %439 = vmatpush1.msra.mxu0 0.0
        %440 = vmatprep.subr.mxu0 0.0
        %441 = vmatpush1.msra.mxu0 0.0
        %442 = vmatprep.subr.mxu0 0.0
        %443 = vmatpush1.msra.mxu0 0.0
        %444 = vmatprep.mubr.f32.mxu0 0.0
        %445 = vmatmul.mubr.f32.gmra.mrb[0].mxu0 %v285
        %v446 = vpop.f32.mrb[0].mxu0
        %v447 = vadd.f32 0.0, %v446
        %v448 = vpop.f32.mrb[0].mxu0
        %449 = vmatprep.mubr.f32.mxu0 0.0
        %450 = vmatmul.mubr.f32.gmra.mrb[0].mxu0 %v288
        %v451 = vpop.f32.mrb[0].mxu0
        %v452 = vadd.f32 0.0, %v451
        %v453 = vpop.f32.mrb[0].mxu0
        %454 = vmatprep.mubr.f32.mxu0 0.0
        %455 = vmatmul.mubr.f32.gmra.mrb[0].mxu0 %v291
        %v456 = vpop.f32.mrb[0].mxu0
        %v457 = vadd.f32 0.0, %v456
        %v458 = vpop.f32.mrb[0].mxu0
        %459 = vmatprep.mubr.f32.mxu0 0.0
        %460 = vmatmul.mubr.f32.gmra.mrb[0].mxu0 %v294
        %v461 = vpop.f32.mrb[0].mxu0
        %v462 = vadd.f32 0.0, %v461
        %v463 = vpop.f32.mrb[0].mxu0
        %464 = vmatprep.mubr.f32.mxu0 0.0
        %465 = vmatmul.mubr.f32.gmra.mrb[0].mxu0 %v297
        %v466 = vpop.f32.mrb[0].mxu0
        %v467 = vadd.f32 0.0, %v466
        %v468 = vpop.f32.mrb[0].mxu0
        %469 = vmatprep.mubr.f32.mxu0 0.0
        %470 = vmatmul.mubr.f32.gmra.mrb[0].mxu0 %v300
        %v471 = vpop.f32.mrb[0].mxu0
        %v472 = vadd.f32 0.0, %v471
        %v473 = vpop.f32.mrb[0].mxu0
        %474 = vmatprep.mubr.f32.mxu0 0.0
        %475 = vmatmul.mubr.f32.gmra.mrb[0].mxu0 %v303
        %v476 = vpop.f32.mrb[0].mxu0
        %v477 = vadd.f32 0.0, %v476
        %v478 = vpop.f32.mrb[0].mxu0
        %479 = vmatprep.mubr.f32.mxu0 0.0
        %480 = vmatmul.mubr.f32.gmra.mrb[0].mxu0 %v306
        %v481 = vpop.f32.mrb[0].mxu0
        %v482 = vadd.f32 0.0, %v481
        %v483 = vpop.f32.mrb[0].mxu0
        %484 = vmatprep.mubr.f32.mxu0 0.0
        %485 = vmatmul.mubr.f32.gmra.mrb[0].mxu0 %v309
        %v486 = vpop.f32.mrb[0].mxu0
        %v487 = vadd.f32 0.0, %v486
        %v488 = vpop.f32.mrb[0].mxu0
        %489 = vmatprep.mubr.f32.mxu0 0.0
        %490 = vmatmul.mubr.f32.gmra.mrb[0].mxu0 %v312
        %v491 = vpop.f32.mrb[0].mxu0
        %v492 = vadd.f32 0.0, %v491
        %v493 = vpop.f32.mrb[0].mxu0
        %494 = vmatprep.mubr.f32.mxu0 0.0
        %495 = vmatmul.mubr.f32.gmra.mrb[0].mxu0 %v315
        %v496 = vpop.f32.mrb[0].mxu0
        %v497 = vadd.f32 0.0, %v496
        %v498 = vpop.f32.mrb[0].mxu0
        %499 = vmatprep.mubr.f32.mxu0 0.0
        %500 = vmatmul.mubr.f32.gmra.mrb[0].mxu0 %v318
        %v501 = vpop.f32.mrb[0].mxu0
        %v502 = vadd.f32 0.0, %v501
        %v503 = vpop.f32.mrb[0].mxu0
        %504 = vmatprep.mubr.f32.mxu0 0.0
        %505 = vmatmul.mubr.f32.gmra.mrb[0].mxu0 %v321
        %v506 = vpop.f32.mrb[0].mxu0
        %v507 = vadd.f32 0.0, %v506
        %v508 = vpop.f32.mrb[0].mxu0
        %509 = vmatprep.mubr.f32.mxu0 0.0
        %510 = vmatmul.mubr.f32.gmra.mrb[0].mxu0 %v324
        %v511 = vpop.f32.mrb[0].mxu0
        %v512 = vadd.f32 0.0, %v511
        %v513 = vpop.f32.mrb[0].mxu0
        %514 = vmatprep.mubr.f32.mxu0 0.0
        %515 = vmatmul.mubr.f32.gmra.mrb[0].mxu0 %v327
        %v516 = vpop.f32.mrb[0].mxu0
        %v517 = vadd.f32 0.0, %v516
        %v518 = vpop.f32.mrb[0].mxu0
        %519 = vmatprep.mubr.f32.mxu0 0.0
        %520 = vmatmul.mubr.f32.gmra.mrb[0].mxu0 %v330
        %v521 = vpop.f32.mrb[0].mxu0
        %v522 = vadd.f32 0.0, %v521
        %v523 = vpop.f32.mrb[0].mxu0
        %524 = vmatprep.mubr.f32.mxu0 0.0
        %525 = vmatmul.mubr.f32.gmra.mrb[0].mxu0 %v333
        %v526 = vpop.f32.mrb[0].mxu0
        %v527 = vadd.f32 0.0, %v526
        %v528 = vpop.f32.mrb[0].mxu0
        %529 = vmatprep.mubr.f32.mxu0 0.0
        %530 = vmatmul.mubr.f32.gmra.mrb[0].mxu0 %v336
        %v531 = vpop.f32.mrb[0].mxu0
        %v532 = vadd.f32 0.0, %v531
        %v533 = vpop.f32.mrb[0].mxu0
        %534 = vmatprep.mubr.f32.mxu0 0.0
        %535 = vmatmul.mubr.f32.gmra.mrb[0].mxu0 %v339
        %v536 = vpop.f32.mrb[0].mxu0
        %v537 = vadd.f32 0.0, %v536
        %v538 = vpop.f32.mrb[0].mxu0
        %539 = vmatprep.mubr.f32.mxu0 0.0
        %540 = vmatmul.mubr.f32.gmra.mrb[0].mxu0 %v342
        %v541 = vpop.f32.mrb[0].mxu0
        %v542 = vadd.f32 0.0, %v541
        %v543 = vpop.f32.mrb[0].mxu0
        %544 = vmatprep.mubr.f32.mxu0 0.0
        %545 = vmatmul.mubr.f32.gmra.mrb[0].mxu0 %v345
        %v546 = vpop.f32.mrb[0].mxu0
        %v547 = vadd.f32 0.0, %v546
        %v548 = vpop.f32.mrb[0].mxu0
        %549 = vmatprep.mubr.f32.mxu0 0.0
        %550 = vmatmul.mubr.f32.gmra.mrb[0].mxu0 %v348
        %v551 = vpop.f32.mrb[0].mxu0
        %v552 = vadd.f32 0.0, %v551
        %v553 = vpop.f32.mrb[0].mxu0
        %554 = vmatprep.mubr.f32.mxu0 0.0
        %555 = vmatmul.mubr.f32.gmra.mrb[0].mxu0 %v351
        %v556 = vpop.f32.mrb[0].mxu0
        %v557 = vadd.f32 0.0, %v556
        %v558 = vpop.f32.mrb[0].mxu0
        %559 = vmatprep.mubr.f32.mxu0 0.0
        %560 = vmatmul.mubr.f32.gmra.mrb[0].mxu0 %v354
        %v561 = vpop.f32.mrb[0].mxu0
        %v562 = vadd.f32 0.0, %v561
        %v563 = vpop.f32.mrb[0].mxu0
        %564 = vmatprep.mubr.f32.mxu0 0.0
        %565 = vmatmul.mubr.f32.gmra.mrb[0].mxu0 %v357
        %v566 = vpop.f32.mrb[0].mxu0
        %v567 = vadd.f32 0.0, %v566
        %v568 = vpop.f32.mrb[0].mxu0
        %569 = vmatprep.mubr.f32.mxu0 0.0
        %570 = vmatmul.mubr.f32.gmra.mrb[0].mxu0 %v360
        %v571 = vpop.f32.mrb[0].mxu0
        %v572 = vadd.f32 0.0, %v571
        %v573 = vpop.f32.mrb[0].mxu0
        %574 = vmatprep.mubr.f32.mxu0 0.0
        %575 = vmatmul.mubr.f32.gmra.mrb[0].mxu0 %v363
        %v576 = vpop.f32.mrb[0].mxu0
        %v577 = vadd.f32 0.0, %v576
        %v578 = vpop.f32.mrb[0].mxu0
        %579 = vmatprep.mubr.f32.mxu0 0.0
        %580 = vmatmul.mubr.f32.gmra.mrb[0].mxu0 %v366
        %v581 = vpop.f32.mrb[0].mxu0
        %v582 = vadd.f32 0.0, %v581
        %v583 = vpop.f32.mrb[0].mxu0
        %584 = vmatprep.mubr.f32.mxu0 0.0
        %585 = vmatmul.mubr.f32.gmra.mrb[0].mxu0 %v369
        %v586 = vpop.f32.mrb[0].mxu0
        %v587 = vadd.f32 0.0, %v586
        %v588 = vpop.f32.mrb[0].mxu0
        %589 = vmatprep.mubr.f32.mxu0 0.0
        %590 = vmatmul.mubr.f32.gmra.mrb[0].mxu0 %v372
        %v591 = vpop.f32.mrb[0].mxu0
        %v592 = vadd.f32 0.0, %v591
        %v593 = vpop.f32.mrb[0].mxu0
        %594 = vmatprep.mubr.f32.mxu0 0.0
        %595 = vmatmul.mubr.f32.gmra.mrb[0].mxu0 %v375
        %v596 = vpop.f32.mrb[0].mxu0
        %v597 = vadd.f32 0.0, %v596
        %v598 = vpop.f32.mrb[0].mxu0
        %599 = vmatprep.mubr.f32.mxu0 0.0
        %600 = vmatmul.mubr.f32.gmra.mrb[0].mxu0 %v378
        %v601 = vpop.f32.mrb[0].mxu0
        %v602 = vadd.f32 0.0, %v601
        %v603 = vpop.f32.mrb[0].mxu0
        %604 = vdwg.mxu0
        %v606 = vsel %vm283, %v216, 0
        %v609 = vsel %vm283, %v217, 0
        %v612 = vsel %vm283, %v218, 0
        %v615 = vsel %vm283, %v219, 0
        %v618 = vsel %vm283, %v220, 0
        %v621 = vsel %vm283, %v221, 0
        %v624 = vsel %vm283, %v222, 0
        %v627 = vsel %vm283, %v223, 0
        %v630 = vsel %vm283, %v224, 0
        %v633 = vsel %vm283, %v225, 0
        %v636 = vsel %vm283, %v226, 0
        %v639 = vsel %vm283, %v227, 0
        %v642 = vsel %vm283, %v228, 0
        %v645 = vsel %vm283, %v229, 0
        %v648 = vsel %vm283, %v230, 0
        %v651 = vsel %vm283, %v231, 0
        %v654 = vsel %vm283, %v232, 0
        %v657 = vsel %vm283, %v233, 0
        %v660 = vsel %vm283, %v234, 0
        %v663 = vsel %vm283, %v235, 0
        %v666 = vsel %vm283, %v236, 0
        %v669 = vsel %vm283, %v237, 0
        %v672 = vsel %vm283, %v238, 0
        %v675 = vsel %vm283, %v239, 0
        %v678 = vsel %vm283, %v240, 0
        %v681 = vsel %vm283, %v241, 0
        %v684 = vsel %vm283, %v242, 0
        %v687 = vsel %vm283, %v243, 0
        %v690 = vsel %vm283, %v244, 0
        %v693 = vsel %vm283, %v245, 0
        %v696 = vsel %vm283, %v246, 0
        %v699 = vsel %vm283, %v247, 0
        %701 = vmatprep.subr.mxu0 0.0
        %702 = vmatpush1.msra.mxu0 %v248
        %703 = vmatprep.subr.mxu0 0.0
        %704 = vmatpush1.msra.mxu0 0.0
        %705 = vmatprep.subr.mxu0 0.0
        %706 = vmatpush1.msra.mxu0 0.0
        %707 = vmatprep.subr.mxu0 0.0
        %708 = vmatpush1.msra.mxu0 0.0
        %709 = vmatprep.subr.mxu0 0.0
        %710 = vmatpush1.msra.mxu0 0.0
        %711 = vmatprep.subr.mxu0 0.0
        %712 = vmatpush1.msra.mxu0 0.0
        %713 = vmatprep.subr.mxu0 0.0
        %714 = vmatpush1.msra.mxu0 0.0
        %715 = vmatprep.subr.mxu0 0.0
        %716 = vmatpush1.msra.mxu0 0.0
        %717 = vmatprep.subr.mxu0 0.0
        %718 = vmatpush1.msra.mxu0 0.0
        %719 = vmatprep.subr.mxu0 0.0
        %720 = vmatpush1.msra.mxu0 0.0
        %721 = vmatprep.subr.mxu0 0.0
        %722 = vmatpush1.msra.mxu0 0.0
        %723 = vmatprep.subr.mxu0 0.0
        %724 = vmatpush1.msra.mxu0 0.0
        %725 = vmatprep.subr.mxu0 0.0
        %726 = vmatpush1.msra.mxu0 0.0
        %727 = vmatprep.subr.mxu0 0.0
        %728 = vmatpush1.msra.mxu0 0.0
        %729 = vmatprep.subr.mxu0 0.0
        %730 = vmatpush1.msra.mxu0 0.0
        %731 = vmatprep.subr.mxu0 0.0
        %732 = vmatpush1.msra.mxu0 0.0
        %733 = vmatprep.subr.mxu0 0.0
        %734 = vmatpush1.msra.mxu0 0.0
        %735 = vmatprep.subr.mxu0 0.0
        %736 = vmatpush1.msra.mxu0 0.0
        %737 = vmatprep.subr.mxu0 0.0
        %738 = vmatpush1.msra.mxu0 0.0
        %739 = vmatprep.subr.mxu0 0.0
        %740 = vmatpush1.msra.mxu0 0.0
        %741 = vmatprep.subr.mxu0 0.0
        %742 = vmatpush1.msra.mxu0 0.0
        %743 = vmatprep.subr.mxu0 0.0
        %744 = vmatpush1.msra.mxu0 0.0
        %745 = vmatprep.subr.mxu0 0.0
        %746 = vmatpush1.msra.mxu0 0.0
        %747 = vmatprep.subr.mxu0 0.0
        %748 = vmatpush1.msra.mxu0 0.0
        %749 = vmatprep.subr.mxu0 0.0
        %750 = vmatpush1.msra.mxu0 0.0
        %751 = vmatprep.subr.mxu0 0.0
        %752 = vmatpush1.msra.mxu0 0.0
        %753 = vmatprep.subr.mxu0 0.0
        %754 = vmatpush1.msra.mxu0 0.0
        %755 = vmatprep.subr.mxu0 0.0
        %756 = vmatpush1.msra.mxu0 0.0
        %757 = vmatprep.subr.mxu0 0.0
        %758 = vmatpush1.msra.mxu0 0.0
        %759 = vmatprep.subr.mxu0 0.0
        %760 = vmatpush1.msra.mxu0 0.0
        %761 = vmatprep.subr.mxu0 0.0
        %762 = vmatpush1.msra.mxu0 0.0
        %763 = vmatprep.subr.mxu0 0.0
        %764 = vmatpush1.msra.mxu0 0.0
        %765 = vmatprep.mubr.f32.mxu0 0.0
        %766 = vmatmul.mubr.f32.gmra.mrb[0].mxu0 %v606
        %v767 = vpop.f32.mrb[0].mxu0
        %v768 = vadd.f32 %v447, %v767
        %v769 = vpop.f32.mrb[0].mxu0
        %770 = vmatprep.mubr.f32.mxu0 0.0
        %771 = vmatmul.mubr.f32.gmra.mrb[0].mxu0 %v609
        %v772 = vpop.f32.mrb[0].mxu0
        %v773 = vadd.f32 %v452, %v772
        %v774 = vpop.f32.mrb[0].mxu0
        %775 = vmatprep.mubr.f32.mxu0 0.0
        %776 = vmatmul.mubr.f32.gmra.mrb[0].mxu0 %v612
        %v777 = vpop.f32.mrb[0].mxu0
        %v778 = vadd.f32 %v457, %v777
        %v779 = vpop.f32.mrb[0].mxu0
        %780 = vmatprep.mubr.f32.mxu0 0.0
        %781 = vmatmul.mubr.f32.gmra.mrb[0].mxu0 %v615
        %v782 = vpop.f32.mrb[0].mxu0
        %v783 = vadd.f32 %v462, %v782
        %v784 = vpop.f32.mrb[0].mxu0
        %785 = vmatprep.mubr.f32.mxu0 0.0
        %786 = vmatmul.mubr.f32.gmra.mrb[0].mxu0 %v618
        %v787 = vpop.f32.mrb[0].mxu0
        %v788 = vadd.f32 %v467, %v787
        %v789 = vpop.f32.mrb[0].mxu0
        %790 = vmatprep.mubr.f32.mxu0 0.0
        %791 = vmatmul.mubr.f32.gmra.mrb[0].mxu0 %v621
        %v792 = vpop.f32.mrb[0].mxu0
        %v793 = vadd.f32 %v472, %v792
        %v794 = vpop.f32.mrb[0].mxu0
        %795 = vmatprep.mubr.f32.mxu0 0.0
        %796 = vmatmul.mubr.f32.gmra.mrb[0].mxu0 %v624
        %v797 = vpop.f32.mrb[0].mxu0
        %v798 = vadd.f32 %v477, %v797
        %v799 = vpop.f32.mrb[0].mxu0
        %800 = vmatprep.mubr.f32.mxu0 0.0
        %801 = vmatmul.mubr.f32.gmra.mrb[0].mxu0 %v627
        %v802 = vpop.f32.mrb[0].mxu0
        %v803 = vadd.f32 %v482, %v802
        %v804 = vpop.f32.mrb[0].mxu0
        %805 = vmatprep.mubr.f32.mxu0 0.0
        %806 = vmatmul.mubr.f32.gmra.mrb[0].mxu0 %v630
        %v807 = vpop.f32.mrb[0].mxu0
        %v808 = vadd.f32 %v487, %v807
        %v809 = vpop.f32.mrb[0].mxu0
        %810 = vmatprep.mubr.f32.mxu0 0.0
        %811 = vmatmul.mubr.f32.gmra.mrb[0].mxu0 %v633
        %v812 = vpop.f32.mrb[0].mxu0
        %v813 = vadd.f32 %v492, %v812
        %v814 = vpop.f32.mrb[0].mxu0
        %815 = vmatprep.mubr.f32.mxu0 0.0
        %816 = vmatmul.mubr.f32.gmra.mrb[0].mxu0 %v636
        %v817 = vpop.f32.mrb[0].mxu0
        %v818 = vadd.f32 %v497, %v817
        %v819 = vpop.f32.mrb[0].mxu0
        %820 = vmatprep.mubr.f32.mxu0 0.0
        %821 = vmatmul.mubr.f32.gmra.mrb[0].mxu0 %v639
        %v822 = vpop.f32.mrb[0].mxu0
        %v823 = vadd.f32 %v502, %v822
        %v824 = vpop.f32.mrb[0].mxu0
        %825 = vmatprep.mubr.f32.mxu0 0.0
        %826 = vmatmul.mubr.f32.gmra.mrb[0].mxu0 %v642
        %v827 = vpop.f32.mrb[0].mxu0
        %v828 = vadd.f32 %v507, %v827
        %v829 = vpop.f32.mrb[0].mxu0
        %830 = vmatprep.mubr.f32.mxu0 0.0
        %831 = vmatmul.mubr.f32.gmra.mrb[0].mxu0 %v645
        %v832 = vpop.f32.mrb[0].mxu0
        %v833 = vadd.f32 %v512, %v832
        %v834 = vpop.f32.mrb[0].mxu0
        %835 = vmatprep.mubr.f32.mxu0 0.0
        %836 = vmatmul.mubr.f32.gmra.mrb[0].mxu0 %v648
        %v837 = vpop.f32.mrb[0].mxu0
        %v838 = vadd.f32 %v517, %v837
        %v839 = vpop.f32.mrb[0].mxu0
        %840 = vmatprep.mubr.f32.mxu0 0.0
        %841 = vmatmul.mubr.f32.gmra.mrb[0].mxu0 %v651
        %v842 = vpop.f32.mrb[0].mxu0
        %v843 = vadd.f32 %v522, %v842
        %v844 = vpop.f32.mrb[0].mxu0
        %845 = vmatprep.mubr.f32.mxu0 0.0
        %846 = vmatmul.mubr.f32.gmra.mrb[0].mxu0 %v654
        %v847 = vpop.f32.mrb[0].mxu0
        %v848 = vadd.f32 %v527, %v847
        %v849 = vpop.f32.mrb[0].mxu0
        %850 = vmatprep.mubr.f32.mxu0 0.0
        %851 = vmatmul.mubr.f32.gmra.mrb[0].mxu0 %v657
        %v852 = vpop.f32.mrb[0].mxu0
        %v853 = vadd.f32 %v532, %v852
        %v854 = vpop.f32.mrb[0].mxu0
        %855 = vmatprep.mubr.f32.mxu0 0.0
        %856 = vmatmul.mubr.f32.gmra.mrb[0].mxu0 %v660
        %v857 = vpop.f32.mrb[0].mxu0
        %v858 = vadd.f32 %v537, %v857
        %v859 = vpop.f32.mrb[0].mxu0
        %860 = vmatprep.mubr.f32.mxu0 0.0
        %861 = vmatmul.mubr.f32.gmra.mrb[0].mxu0 %v663
        %v862 = vpop.f32.mrb[0].mxu0
        %v863 = vadd.f32 %v542, %v862
        %v864 = vpop.f32.mrb[0].mxu0
        %865 = vmatprep.mubr.f32.mxu0 0.0
        %866 = vmatmul.mubr.f32.gmra.mrb[0].mxu0 %v666
        %v867 = vpop.f32.mrb[0].mxu0
        %v868 = vadd.f32 %v547, %v867
        %v869 = vpop.f32.mrb[0].mxu0
        %870 = vmatprep.mubr.f32.mxu0 0.0
        %871 = vmatmul.mubr.f32.gmra.mrb[0].mxu0 %v669
        %v872 = vpop.f32.mrb[0].mxu0
        %v873 = vadd.f32 %v552, %v872
        %v874 = vpop.f32.mrb[0].mxu0
        %875 = vmatprep.mubr.f32.mxu0 0.0
        %876 = vmatmul.mubr.f32.gmra.mrb[0].mxu0 %v672
        %v877 = vpop.f32.mrb[0].mxu0
        %v878 = vadd.f32 %v557, %v877
        %v879 = vpop.f32.mrb[0].mxu0
        %880 = vmatprep.mubr.f32.mxu0 0.0
        %881 = vmatmul.mubr.f32.gmra.mrb[0].mxu0 %v675
        %v882 = vpop.f32.mrb[0].mxu0
        %v883 = vadd.f32 %v562, %v882
        %v884 = vpop.f32.mrb[0].mxu0
        %885 = vmatprep.mubr.f32.mxu0 0.0
        %886 = vmatmul.mubr.f32.gmra.mrb[0].mxu0 %v678
        %v887 = vpop.f32.mrb[0].mxu0
        %v888 = vadd.f32 %v567, %v887
        %v889 = vpop.f32.mrb[0].mxu0
        %890 = vmatprep.mubr.f32.mxu0 0.0
        %891 = vmatmul.mubr.f32.gmra.mrb[0].mxu0 %v681
        %v892 = vpop.f32.mrb[0].mxu0
        %v893 = vadd.f32 %v572, %v892
        %v894 = vpop.f32.mrb[0].mxu0
        %895 = vmatprep.mubr.f32.mxu0 0.0
        %896 = vmatmul.mubr.f32.gmra.mrb[0].mxu0 %v684
        %v897 = vpop.f32.mrb[0].mxu0
        %v898 = vadd.f32 %v577, %v897
        %v899 = vpop.f32.mrb[0].mxu0
        %900 = vmatprep.mubr.f32.mxu0 0.0
        %901 = vmatmul.mubr.f32.gmra.mrb[0].mxu0 %v687
        %v902 = vpop.f32.mrb[0].mxu0
        %v903 = vadd.f32 %v582, %v902
        %v904 = vpop.f32.mrb[0].mxu0
        %905 = vmatprep.mubr.f32.mxu0 0.0
        %906 = vmatmul.mubr.f32.gmra.mrb[0].mxu0 %v690
        %v907 = vpop.f32.mrb[0].mxu0
        %v908 = vadd.f32 %v587, %v907
        %v909 = vpop.f32.mrb[0].mxu0
        %910 = vmatprep.mubr.f32.mxu0 0.0
        %911 = vmatmul.mubr.f32.gmra.mrb[0].mxu0 %v693
        %v912 = vpop.f32.mrb[0].mxu0
        %v913 = vadd.f32 %v592, %v912
        %v914 = vpop.f32.mrb[0].mxu0
        %915 = vmatprep.mubr.f32.mxu0 0.0
        %916 = vmatmul.mubr.f32.gmra.mrb[0].mxu0 %v696
        %v917 = vpop.f32.mrb[0].mxu0
        %v918 = vadd.f32 %v597, %v917
        %v919 = vpop.f32.mrb[0].mxu0
        %920 = vmatprep.mubr.f32.mxu0 0.0
        %921 = vmatmul.mubr.f32.gmra.mrb[0].mxu0 %v699
        %v922 = vpop.f32.mrb[0].mxu0
        %v923 = vadd.f32 %v602, %v922
        %v924 = vpop.f32.mrb[0].mxu0
        %925 = vdwg.mxu0
        %v926 = vld [vmem:[%s185 + $0x2] sm:$0xff]
        %v927 = vld [vmem:[%s185 + $0xa] sm:$0xff]
        %v928 = vld [vmem:[%s185 + $0x1a] sm:$0xff]
        %v929 = vld [vmem:[%s185 + $0x22] sm:$0xff]
        %v930 = vld [vmem:[%s185 + $0x32] sm:$0xff]
        %v931 = vld [vmem:[%s185 + $0x3a] sm:$0xff]
        %v932 = vld [vmem:[%s185 + $0x4a] sm:$0xff]
        %v933 = vld [vmem:[%s185 + $0x52] sm:$0xff]
        %v934 = vld [vmem:[%s185 + $0x62] sm:$0xff]
        %v935 = vld [vmem:[%s185 + $0x6a] sm:$0xff]
        %v936 = vld [vmem:[%s185 + $0x7a] sm:$0xff]
        %v937 = vld [vmem:[%s185 + $0x82] sm:$0xff]
        %v938 = vld [vmem:[%s185 + $0x92] sm:$0xff]
        %v939 = vld [vmem:[%s185 + $0x9a] sm:$0xff]
        %v940 = vld [vmem:[%s185 + $0xaa] sm:$0xff]
        %v941 = vld [vmem:[%s185 + $0xb2] sm:$0xff]
        %v942 = vld [vmem:[%s185 + $0xc2] sm:$0xff]
        %v943 = vld [vmem:[%s185 + $0xca] sm:$0xff]
        %v944 = vld [vmem:[%s185 + $0xda] sm:$0xff]
        %v945 = vld [vmem:[%s185 + $0xe2] sm:$0xff]
        %v946 = vld [vmem:[%s185 + $0xf2] sm:$0xff]
        %v947 = vld [vmem:[%s185 + $0xfa] sm:$0xff]
        %v948 = vld [vmem:[%s185 + $0x10a] sm:$0xff]
        %v949 = vld [vmem:[%s185 + $0x112] sm:$0xff]
        %v950 = vld [vmem:[%s185 + $0x122] sm:$0xff]
        %v951 = vld [vmem:[%s185 + $0x12a] sm:$0xff]
        %v952 = vld [vmem:[%s185 + $0x13a] sm:$0xff]
        %v953 = vld [vmem:[%s185 + $0x142] sm:$0xff]
        %v954 = vld [vmem:[%s185 + $0x152] sm:$0xff]
        %v955 = vld [vmem:[%s185 + $0x15a] sm:$0xff]
        %v956 = vld [vmem:[%s185 + $0x16a] sm:$0xff]
        %v957 = vld [vmem:[%s185 + $0x172] sm:$0xff]
        %s958 = scalar_lea.vmem [#allocation5], 16
        %v959 = vld [vmem:[%s958] sm:$0xff]
        %v961 = vsel %vm283, %v926, 0
        %v964 = vsel %vm283, %v927, 0
        %v967 = vsel %vm283, %v928, 0
        %v970 = vsel %vm283, %v929, 0
        %v973 = vsel %vm283, %v930, 0
        %v976 = vsel %vm283, %v931, 0
        %v979 = vsel %vm283, %v932, 0
        %v982 = vsel %vm283, %v933, 0
        %v985 = vsel %vm283, %v934, 0
        %v988 = vsel %vm283, %v935, 0
        %v991 = vsel %vm283, %v936, 0
        %v994 = vsel %vm283, %v937, 0
        %v997 = vsel %vm283, %v938, 0
        %v1000 = vsel %vm283, %v939, 0
        %v1003 = vsel %vm283, %v940, 0
        %v1006 = vsel %vm283, %v941, 0
        %v1009 = vsel %vm283, %v942, 0
        %v1012 = vsel %vm283, %v943, 0
        %v1015 = vsel %vm283, %v944, 0
        %v1018 = vsel %vm283, %v945, 0
        %v1021 = vsel %vm283, %v946, 0
        %v1024 = vsel %vm283, %v947, 0
        %v1027 = vsel %vm283, %v948, 0
        %v1030 = vsel %vm283, %v949, 0
        %v1033 = vsel %vm283, %v950, 0
        %v1036 = vsel %vm283, %v951, 0
        %v1039 = vsel %vm283, %v952, 0
        %v1042 = vsel %vm283, %v953, 0
        %v1045 = vsel %vm283, %v954, 0
        %v1048 = vsel %vm283, %v955, 0
        %v1051 = vsel %vm283, %v956, 0
        %v1054 = vsel %vm283, %v957, 0
        %1056 = vmatprep.subr.mxu0 0.0
        %1057 = vmatpush1.msra.mxu0 %v959
        %1058 = vmatprep.subr.mxu0 0.0
        %1059 = vmatpush1.msra.mxu0 0.0
        %1060 = vmatprep.subr.mxu0 0.0
        %1061 = vmatpush1.msra.mxu0 0.0
        %1062 = vmatprep.subr.mxu0 0.0
        %1063 = vmatpush1.msra.mxu0 0.0
        %1064 = vmatprep.subr.mxu0 0.0
        %1065 = vmatpush1.msra.mxu0 0.0
        %1066 = vmatprep.subr.mxu0 0.0
        %1067 = vmatpush1.msra.mxu0 0.0
        %1068 = vmatprep.subr.mxu0 0.0
        %1069 = vmatpush1.msra.mxu0 0.0
        %1070 = vmatprep.subr.mxu0 0.0
        %1071 = vmatpush1.msra.mxu0 0.0
        %1072 = vmatprep.subr.mxu0 0.0
        %1073 = vmatpush1.msra.mxu0 0.0
        %1074 = vmatprep.subr.mxu0 0.0
        %1075 = vmatpush1.msra.mxu0 0.0
        %1076 = vmatprep.subr.mxu0 0.0
        %1077 = vmatpush1.msra.mxu0 0.0
        %1078 = vmatprep.subr.mxu0 0.0
        %1079 = vmatpush1.msra.mxu0 0.0
        %1080 = vmatprep.subr.mxu0 0.0
        %1081 = vmatpush1.msra.mxu0 0.0
        %1082 = vmatprep.subr.mxu0 0.0
        %1083 = vmatpush1.msra.mxu0 0.0
        %1084 = vmatprep.subr.mxu0 0.0
        %1085 = vmatpush1.msra.mxu0 0.0
        %1086 = vmatprep.subr.mxu0 0.0
        %1087 = vmatpush1.msra.mxu0 0.0
        %1088 = vmatprep.subr.mxu0 0.0
        %1089 = vmatpush1.msra.mxu0 0.0
        %1090 = vmatprep.subr.mxu0 0.0
        %1091 = vmatpush1.msra.mxu0 0.0
        %1092 = vmatprep.subr.mxu0 0.0
        %1093 = vmatpush1.msra.mxu0 0.0
        %1094 = vmatprep.subr.mxu0 0.0
        %1095 = vmatpush1.msra.mxu0 0.0
        %1096 = vmatprep.subr.mxu0 0.0
        %1097 = vmatpush1.msra.mxu0 0.0
        %1098 = vmatprep.subr.mxu0 0.0
        %1099 = vmatpush1.msra.mxu0 0.0
        %1100 = vmatprep.subr.mxu0 0.0
        %1101 = vmatpush1.msra.mxu0 0.0
        %1102 = vmatprep.subr.mxu0 0.0
        %1103 = vmatpush1.msra.mxu0 0.0
        %1104 = vmatprep.subr.mxu0 0.0
        %1105 = vmatpush1.msra.mxu0 0.0
        %1106 = vmatprep.subr.mxu0 0.0
        %1107 = vmatpush1.msra.mxu0 0.0
        %1108 = vmatprep.subr.mxu0 0.0
        %1109 = vmatpush1.msra.mxu0 0.0
        %1110 = vmatprep.subr.mxu0 0.0
        %1111 = vmatpush1.msra.mxu0 0.0
        %1112 = vmatprep.subr.mxu0 0.0
        %1113 = vmatpush1.msra.mxu0 0.0
        %1114 = vmatprep.subr.mxu0 0.0
        %1115 = vmatpush1.msra.mxu0 0.0
        %1116 = vmatprep.subr.mxu0 0.0
        %1117 = vmatpush1.msra.mxu0 0.0
        %1118 = vmatprep.subr.mxu0 0.0
        %1119 = vmatpush1.msra.mxu0 0.0
        %1120 = vmatprep.mubr.f32.mxu0 0.0
        %1121 = vmatmul.mubr.f32.gmra.mrb[0].mxu0 %v961
        %v1122 = vpop.f32.mrb[0].mxu0
        %v1123 = vadd.f32 0.0, %v1122
        %v1124 = vpop.f32.mrb[0].mxu0
        %1125 = vmatprep.mubr.f32.mxu0 0.0
        %1126 = vmatmul.mubr.f32.gmra.mrb[0].mxu0 %v964
        %v1127 = vpop.f32.mrb[0].mxu0
        %v1128 = vadd.f32 0.0, %v1127
        %v1129 = vpop.f32.mrb[0].mxu0
        %1130 = vmatprep.mubr.f32.mxu0 0.0
        %1131 = vmatmul.mubr.f32.gmra.mrb[0].mxu0 %v967
        %v1132 = vpop.f32.mrb[0].mxu0
        %v1133 = vadd.f32 0.0, %v1132
        %v1134 = vpop.f32.mrb[0].mxu0
        %1135 = vmatprep.mubr.f32.mxu0 0.0
        %1136 = vmatmul.mubr.f32.gmra.mrb[0].mxu0 %v970
        %v1137 = vpop.f32.mrb[0].mxu0
        %v1138 = vadd.f32 0.0, %v1137
        %v1139 = vpop.f32.mrb[0].mxu0
        %1140 = vmatprep.mubr.f32.mxu0 0.0
        %1141 = vmatmul.mubr.f32.gmra.mrb[0].mxu0 %v973
        %v1142 = vpop.f32.mrb[0].mxu0
        %v1143 = vadd.f32 0.0, %v1142
        %v1144 = vpop.f32.mrb[0].mxu0
        %1145 = vmatprep.mubr.f32.mxu0 0.0
        %1146 = vmatmul.mubr.f32.gmra.mrb[0].mxu0 %v976
        %v1147 = vpop.f32.mrb[0].mxu0
        %v1148 = vadd.f32 0.0, %v1147
        %v1149 = vpop.f32.mrb[0].mxu0
        %1150 = vmatprep.mubr.f32.mxu0 0.0
        %1151 = vmatmul.mubr.f32.gmra.mrb[0].mxu0 %v979
        %v1152 = vpop.f32.mrb[0].mxu0
        %v1153 = vadd.f32 0.0, %v1152
        %v1154 = vpop.f32.mrb[0].mxu0
        %1155 = vmatprep.mubr.f32.mxu0 0.0
        %1156 = vmatmul.mubr.f32.gmra.mrb[0].mxu0 %v982
        %v1157 = vpop.f32.mrb[0].mxu0
        %v1158 = vadd.f32 0.0, %v1157
        %v1159 = vpop.f32.mrb[0].mxu0
        %1160 = vmatprep.mubr.f32.mxu0 0.0
        %1161 = vmatmul.mubr.f32.gmra.mrb[0].mxu0 %v985
        %v1162 = vpop.f32.mrb[0].mxu0
        %v1163 = vadd.f32 0.0, %v1162
        %v1164 = vpop.f32.mrb[0].mxu0
        %1165 = vmatprep.mubr.f32.mxu0 0.0
        %1166 = vmatmul.mubr.f32.gmra.mrb[0].mxu0 %v988
        %v1167 = vpop.f32.mrb[0].mxu0
        %v1168 = vadd.f32 0.0, %v1167
        %v1169 = vpop.f32.mrb[0].mxu0
        %1170 = vmatprep.mubr.f32.mxu0 0.0
        %1171 = vmatmul.mubr.f32.gmra.mrb[0].mxu0 %v991
        %v1172 = vpop.f32.mrb[0].mxu0
        %v1173 = vadd.f32 0.0, %v1172
        %v1174 = vpop.f32.mrb[0].mxu0
        %1175 = vmatprep.mubr.f32.mxu0 0.0
        %1176 = vmatmul.mubr.f32.gmra.mrb[0].mxu0 %v994
        %v1177 = vpop.f32.mrb[0].mxu0
        %v1178 = vadd.f32 0.0, %v1177
        %v1179 = vpop.f32.mrb[0].mxu0
        %1180 = vmatprep.mubr.f32.mxu0 0.0
        %1181 = vmatmul.mubr.f32.gmra.mrb[0].mxu0 %v997
        %v1182 = vpop.f32.mrb[0].mxu0
        %v1183 = vadd.f32 0.0, %v1182
        %v1184 = vpop.f32.mrb[0].mxu0
        %1185 = vmatprep.mubr.f32.mxu0 0.0
        %1186 = vmatmul.mubr.f32.gmra.mrb[0].mxu0 %v1000
        %v1187 = vpop.f32.mrb[0].mxu0
        %v1188 = vadd.f32 0.0, %v1187
        %v1189 = vpop.f32.mrb[0].mxu0
        %1190 = vmatprep.mubr.f32.mxu0 0.0
        %1191 = vmatmul.mubr.f32.gmra.mrb[0].mxu0 %v1003
        %v1192 = vpop.f32.mrb[0].mxu0
        %v1193 = vadd.f32 0.0, %v1192
        %v1194 = vpop.f32.mrb[0].mxu0
        %1195 = vmatprep.mubr.f32.mxu0 0.0
        %1196 = vmatmul.mubr.f32.gmra.mrb[0].mxu0 %v1006
        %v1197 = vpop.f32.mrb[0].mxu0
        %v1198 = vadd.f32 0.0, %v1197
        %v1199 = vpop.f32.mrb[0].mxu0
        %1200 = vmatprep.mubr.f32.mxu0 0.0
        %1201 = vmatmul.mubr.f32.gmra.mrb[0].mxu0 %v1009
        %v1202 = vpop.f32.mrb[0].mxu0
        %v1203 = vadd.f32 0.0, %v1202
        %v1204 = vpop.f32.mrb[0].mxu0
        %1205 = vmatprep.mubr.f32.mxu0 0.0
        %1206 = vmatmul.mubr.f32.gmra.mrb[0].mxu0 %v1012
        %v1207 = vpop.f32.mrb[0].mxu0
        %v1208 = vadd.f32 0.0, %v1207
        %v1209 = vpop.f32.mrb[0].mxu0
        %1210 = vmatprep.mubr.f32.mxu0 0.0
        %1211 = vmatmul.mubr.f32.gmra.mrb[0].mxu0 %v1015
        %v1212 = vpop.f32.mrb[0].mxu0
        %v1213 = vadd.f32 0.0, %v1212
        %v1214 = vpop.f32.mrb[0].mxu0
        %1215 = vmatprep.mubr.f32.mxu0 0.0
        %1216 = vmatmul.mubr.f32.gmra.mrb[0].mxu0 %v1018
        %v1217 = vpop.f32.mrb[0].mxu0
        %v1218 = vadd.f32 0.0, %v1217
        %v1219 = vpop.f32.mrb[0].mxu0
        %1220 = vmatprep.mubr.f32.mxu0 0.0
        %1221 = vmatmul.mubr.f32.gmra.mrb[0].mxu0 %v1021
        %v1222 = vpop.f32.mrb[0].mxu0
        %v1223 = vadd.f32 0.0, %v1222
        %v1224 = vpop.f32.mrb[0].mxu0
        %1225 = vmatprep.mubr.f32.mxu0 0.0
        %1226 = vmatmul.mubr.f32.gmra.mrb[0].mxu0 %v1024
        %v1227 = vpop.f32.mrb[0].mxu0
        %v1228 = vadd.f32 0.0, %v1227
        %v1229 = vpop.f32.mrb[0].mxu0
        %1230 = vmatprep.mubr.f32.mxu0 0.0
        %1231 = vmatmul.mubr.f32.gmra.mrb[0].mxu0 %v1027
        %v1232 = vpop.f32.mrb[0].mxu0
        %v1233 = vadd.f32 0.0, %v1232
        %v1234 = vpop.f32.mrb[0].mxu0
        %1235 = vmatprep.mubr.f32.mxu0 0.0
        %1236 = vmatmul.mubr.f32.gmra.mrb[0].mxu0 %v1030
        %v1237 = vpop.f32.mrb[0].mxu0
        %v1238 = vadd.f32 0.0, %v1237
        %v1239 = vpop.f32.mrb[0].mxu0
        %1240 = vmatprep.mubr.f32.mxu0 0.0
        %1241 = vmatmul.mubr.f32.gmra.mrb[0].mxu0 %v1033
        %v1242 = vpop.f32.mrb[0].mxu0
        %v1243 = vadd.f32 0.0, %v1242
        %v1244 = vpop.f32.mrb[0].mxu0
        %1245 = vmatprep.mubr.f32.mxu0 0.0
        %1246 = vmatmul.mubr.f32.gmra.mrb[0].mxu0 %v1036
        %v1247 = vpop.f32.mrb[0].mxu0
        %v1248 = vadd.f32 0.0, %v1247
        %v1249 = vpop.f32.mrb[0].mxu0
        %1250 = vmatprep.mubr.f32.mxu0 0.0
        %1251 = vmatmul.mubr.f32.gmra.mrb[0].mxu0 %v1039
        %v1252 = vpop.f32.mrb[0].mxu0
        %v1253 = vadd.f32 0.0, %v1252
        %v1254 = vpop.f32.mrb[0].mxu0
        %1255 = vmatprep.mubr.f32.mxu0 0.0
        %1256 = vmatmul.mubr.f32.gmra.mrb[0].mxu0 %v1042
        %v1257 = vpop.f32.mrb[0].mxu0
        %v1258 = vadd.f32 0.0, %v1257
        %v1259 = vpop.f32.mrb[0].mxu0
        %1260 = vmatprep.mubr.f32.mxu0 0.0
        %1261 = vmatmul.mubr.f32.gmra.mrb[0].mxu0 %v1045
        %v1262 = vpop.f32.mrb[0].mxu0
        %v1263 = vadd.f32 0.0, %v1262
        %v1264 = vpop.f32.mrb[0].mxu0
        %1265 = vmatprep.mubr.f32.mxu0 0.0
        %1266 = vmatmul.mubr.f32.gmra.mrb[0].mxu0 %v1048
        %v1267 = vpop.f32.mrb[0].mxu0
        %v1268 = vadd.f32 0.0, %v1267
        %v1269 = vpop.f32.mrb[0].mxu0
        %1270 = vmatprep.mubr.f32.mxu0 0.0
        %1271 = vmatmul.mubr.f32.gmra.mrb[0].mxu0 %v1051
        %v1272 = vpop.f32.mrb[0].mxu0
        %v1273 = vadd.f32 0.0, %v1272
        %v1274 = vpop.f32.mrb[0].mxu0
        %1275 = vmatprep.mubr.f32.mxu0 0.0
        %1276 = vmatmul.mubr.f32.gmra.mrb[0].mxu0 %v1054
        %v1277 = vpop.f32.mrb[0].mxu0
        %v1278 = vadd.f32 0.0, %v1277
        %v1279 = vpop.f32.mrb[0].mxu0
        %1280 = vdwg.mxu0
        %v1281 = vadd.f32 %v768, %v1123
        %v1282 = vadd.f32 %v773, %v1128
        %v1283 = vadd.f32 %v778, %v1133
        %v1284 = vadd.f32 %v783, %v1138
        %v1285 = vadd.f32 %v788, %v1143
        %v1286 = vadd.f32 %v793, %v1148
        %v1287 = vadd.f32 %v798, %v1153
        %v1288 = vadd.f32 %v803, %v1158
        %v1289 = vadd.f32 %v808, %v1163
        %v1290 = vadd.f32 %v813, %v1168
        %v1291 = vadd.f32 %v818, %v1173
        %v1292 = vadd.f32 %v823, %v1178
        %v1293 = vadd.f32 %v828, %v1183
        %v1294 = vadd.f32 %v833, %v1188
        %v1295 = vadd.f32 %v838, %v1193
        %v1296 = vadd.f32 %v843, %v1198
        %v1297 = vadd.f32 %v848, %v1203
        %v1298 = vadd.f32 %v853, %v1208
        %v1299 = vadd.f32 %v858, %v1213
        %v1300 = vadd.f32 %v863, %v1218
        %v1301 = vadd.f32 %v868, %v1223
        %v1302 = vadd.f32 %v873, %v1228
        %v1303 = vadd.f32 %v878, %v1233
        %v1304 = vadd.f32 %v883, %v1238
        %v1305 = vadd.f32 %v888, %v1243
        %v1306 = vadd.f32 %v893, %v1248
        %v1307 = vadd.f32 %v898, %v1253
        %v1308 = vadd.f32 %v903, %v1258
        %v1309 = vadd.f32 %v908, %v1263
        %v1310 = vadd.f32 %v913, %v1268
        %v1311 = vadd.f32 %v918, %v1273
        %v1312 = vadd.f32 %v923, %v1278
        %s1313 = scalar_lea.vmem %s185, 24 [#allocation2]
        %v1314 = vld [vmem:[%s1313] sm:$0xff]
        %v1315 = vld [vmem:[%s1313 + $0x8] sm:$0xff]
        %v1316 = vld [vmem:[%s1313 + $0x18] sm:$0xff]
        %v1317 = vld [vmem:[%s1313 + $0x20] sm:$0xff]
        %v1318 = vld [vmem:[%s1313 + $0x30] sm:$0xff]
        %v1319 = vld [vmem:[%s1313 + $0x38] sm:$0xff]
        %v1320 = vld [vmem:[%s1313 + $0x48] sm:$0xff]
        %v1321 = vld [vmem:[%s1313 + $0x50] sm:$0xff]
        %v1322 = vld [vmem:[%s1313 + $0x60] sm:$0xff]
        %v1323 = vld [vmem:[%s1313 + $0x68] sm:$0xff]
        %v1324 = vld [vmem:[%s1313 + $0x78] sm:$0xff]
        %v1325 = vld [vmem:[%s1313 + $0x80] sm:$0xff]
        %v1326 = vld [vmem:[%s1313 + $0x90] sm:$0xff]
        %v1327 = vld [vmem:[%s1313 + $0x98] sm:$0xff]
        %v1328 = vld [vmem:[%s1313 + $0xa8] sm:$0xff]
        %v1329 = vld [vmem:[%s1313 + $0xb0] sm:$0xff]
        %v1330 = vld [vmem:[%s1313 + $0xc0] sm:$0xff]
        %v1331 = vld [vmem:[%s1313 + $0xc8] sm:$0xff]
        %v1332 = vld [vmem:[%s1313 + $0xd8] sm:$0xff]
        %v1333 = vld [vmem:[%s1313 + $0xe0] sm:$0xff]
        %v1334 = vld [vmem:[%s1313 + $0xf0] sm:$0xff]
        %v1335 = vld [vmem:[%s1313 + $0xf8] sm:$0xff]
        %v1336 = vld [vmem:[%s1313 + $0x108] sm:$0xff]
        %v1337 = vld [vmem:[%s1313 + $0x110] sm:$0xff]
        %v1338 = vld [vmem:[%s1313 + $0x120] sm:$0xff]
        %v1339 = vld [vmem:[%s1313 + $0x128] sm:$0xff]
        %v1340 = vld [vmem:[%s1313 + $0x138] sm:$0xff]
        %v1341 = vld [vmem:[%s1313 + $0x140] sm:$0xff]
        %v1342 = vld [vmem:[%s1313 + $0x150] sm:$0xff]
        %v1343 = vld [vmem:[%s1313 + $0x158] sm:$0xff]
        %v1344 = vld [vmem:[%s1313 + $0x168] sm:$0xff]
        %v1345 = vld [vmem:[%s1313 + $0x170] sm:$0xff]
        %s1346 = scalar_lea.vmem [#allocation5], 24
        %v1347 = vld [vmem:[%s1346] sm:$0xff]
        %v1349 = vsel %vm283, %v1314, 0
        %v1352 = vsel %vm283, %v1315, 0
        %v1355 = vsel %vm283, %v1316, 0
        %v1358 = vsel %vm283, %v1317, 0
        %v1361 = vsel %vm283, %v1318, 0
        %v1364 = vsel %vm283, %v1319, 0
        %v1367 = vsel %vm283, %v1320, 0
        %v1370 = vsel %vm283, %v1321, 0
        %v1373 = vsel %vm283, %v1322, 0
        %v1376 = vsel %vm283, %v1323, 0
        %v1379 = vsel %vm283, %v1324, 0
        %v1382 = vsel %vm283, %v1325, 0
        %v1385 = vsel %vm283, %v1326, 0
        %v1388 = vsel %vm283, %v1327, 0
        %v1391 = vsel %vm283, %v1328, 0
        %v1394 = vsel %vm283, %v1329, 0
        %v1397 = vsel %vm283, %v1330, 0
        %v1400 = vsel %vm283, %v1331, 0
        %v1403 = vsel %vm283, %v1332, 0
        %v1406 = vsel %vm283, %v1333, 0
        %v1409 = vsel %vm283, %v1334, 0
        %v1412 = vsel %vm283, %v1335, 0
        %v1415 = vsel %vm283, %v1336, 0
        %v1418 = vsel %vm283, %v1337, 0
        %v1421 = vsel %vm283, %v1338, 0
        %v1424 = vsel %vm283, %v1339, 0
        %v1427 = vsel %vm283, %v1340, 0
        %v1430 = vsel %vm283, %v1341, 0
        %v1433 = vsel %vm283, %v1342, 0
        %v1436 = vsel %vm283, %v1343, 0
        %v1439 = vsel %vm283, %v1344, 0
        %v1442 = vsel %vm283, %v1345, 0
        %1444 = vmatprep.subr.mxu0 0.0
        %1445 = vmatpush1.msra.mxu0 %v1347
        %1446 = vmatprep.subr.mxu0 0.0
        %1447 = vmatpush1.msra.mxu0 0.0
        %1448 = vmatprep.subr.mxu0 0.0
        %1449 = vmatpush1.msra.mxu0 0.0
        %1450 = vmatprep.subr.mxu0 0.0
        %1451 = vmatpush1.msra.mxu0 0.0
        %1452 = vmatprep.subr.mxu0 0.0
        %1453 = vmatpush1.msra.mxu0 0.0
        %1454 = vmatprep.subr.mxu0 0.0
        %1455 = vmatpush1.msra.mxu0 0.0
        %1456 = vmatprep.subr.mxu0 0.0
        %1457 = vmatpush1.msra.mxu0 0.0
        %1458 = vmatprep.subr.mxu0 0.0
        %1459 = vmatpush1.msra.mxu0 0.0
        %1460 = vmatprep.subr.mxu0 0.0
        %1461 = vmatpush1.msra.mxu0 0.0
        %1462 = vmatprep.subr.mxu0 0.0
        %1463 = vmatpush1.msra.mxu0 0.0
        %1464 = vmatprep.subr.mxu0 0.0
        %1465 = vmatpush1.msra.mxu0 0.0
        %1466 = vmatprep.subr.mxu0 0.0
        %1467 = vmatpush1.msra.mxu0 0.0
        %1468 = vmatprep.subr.mxu0 0.0
        %1469 = vmatpush1.msra.mxu0 0.0
        %1470 = vmatprep.subr.mxu0 0.0
        %1471 = vmatpush1.msra.mxu0 0.0
        %1472 = vmatprep.subr.mxu0 0.0
        %1473 = vmatpush1.msra.mxu0 0.0
        %1474 = vmatprep.subr.mxu0 0.0
        %1475 = vmatpush1.msra.mxu0 0.0
        %1476 = vmatprep.subr.mxu0 0.0
        %1477 = vmatpush1.msra.mxu0 0.0
        %1478 = vmatprep.subr.mxu0 0.0
        %1479 = vmatpush1.msra.mxu0 0.0
        %1480 = vmatprep.subr.mxu0 0.0
        %1481 = vmatpush1.msra.mxu0 0.0
        %1482 = vmatprep.subr.mxu0 0.0
        %1483 = vmatpush1.msra.mxu0 0.0
        %1484 = vmatprep.subr.mxu0 0.0
        %1485 = vmatpush1.msra.mxu0 0.0
        %1486 = vmatprep.subr.mxu0 0.0
        %1487 = vmatpush1.msra.mxu0 0.0
        %1488 = vmatprep.subr.mxu0 0.0
        %1489 = vmatpush1.msra.mxu0 0.0
        %1490 = vmatprep.subr.mxu0 0.0
        %1491 = vmatpush1.msra.mxu0 0.0
        %1492 = vmatprep.subr.mxu0 0.0
        %1493 = vmatpush1.msra.mxu0 0.0
        %1494 = vmatprep.subr.mxu0 0.0
        %1495 = vmatpush1.msra.mxu0 0.0
        %1496 = vmatprep.subr.mxu0 0.0
        %1497 = vmatpush1.msra.mxu0 0.0
        %1498 = vmatprep.subr.mxu0 0.0
        %1499 = vmatpush1.msra.mxu0 0.0
        %1500 = vmatprep.subr.mxu0 0.0
        %1501 = vmatpush1.msra.mxu0 0.0
        %1502 = vmatprep.subr.mxu0 0.0
        %1503 = vmatpush1.msra.mxu0 0.0
        %1504 = vmatprep.subr.mxu0 0.0
        %1505 = vmatpush1.msra.mxu0 0.0
        %1506 = vmatprep.subr.mxu0 0.0
        %1507 = vmatpush1.msra.mxu0 0.0
        %1508 = vmatprep.mubr.f32.mxu0 0.0
        %1509 = vmatmul.mubr.f32.gmra.mrb[0].mxu0 %v1349
        %v1510 = vpop.f32.mrb[0].mxu0
        %v1511 = vadd.f32 0.0, %v1510
        %v1512 = vpop.f32.mrb[0].mxu0
        %1513 = vmatprep.mubr.f32.mxu0 0.0
        %1514 = vmatmul.mubr.f32.gmra.mrb[0].mxu0 %v1352
        %v1515 = vpop.f32.mrb[0].mxu0
        %v1516 = vadd.f32 0.0, %v1515
        %v1517 = vpop.f32.mrb[0].mxu0
        %1518 = vmatprep.mubr.f32.mxu0 0.0
        %1519 = vmatmul.mubr.f32.gmra.mrb[0].mxu0 %v1355
        %v1520 = vpop.f32.mrb[0].mxu0
        %v1521 = vadd.f32 0.0, %v1520
        %v1522 = vpop.f32.mrb[0].mxu0
        %1523 = vmatprep.mubr.f32.mxu0 0.0
        %1524 = vmatmul.mubr.f32.gmra.mrb[0].mxu0 %v1358
        %v1525 = vpop.f32.mrb[0].mxu0
        %v1526 = vadd.f32 0.0, %v1525
        %v1527 = vpop.f32.mrb[0].mxu0
        %1528 = vmatprep.mubr.f32.mxu0 0.0
        %1529 = vmatmul.mubr.f32.gmra.mrb[0].mxu0 %v1361
        %v1530 = vpop.f32.mrb[0].mxu0
        %v1531 = vadd.f32 0.0, %v1530
        %v1532 = vpop.f32.mrb[0].mxu0
        %1533 = vmatprep.mubr.f32.mxu0 0.0
        %1534 = vmatmul.mubr.f32.gmra.mrb[0].mxu0 %v1364
        %v1535 = vpop.f32.mrb[0].mxu0
        %v1536 = vadd.f32 0.0, %v1535
        %v1537 = vpop.f32.mrb[0].mxu0
        %1538 = vmatprep.mubr.f32.mxu0 0.0
        %1539 = vmatmul.mubr.f32.gmra.mrb[0].mxu0 %v1367
        %v1540 = vpop.f32.mrb[0].mxu0
        %v1541 = vadd.f32 0.0, %v1540
        %v1542 = vpop.f32.mrb[0].mxu0
        %1543 = vmatprep.mubr.f32.mxu0 0.0
        %1544 = vmatmul.mubr.f32.gmra.mrb[0].mxu0 %v1370
        %v1545 = vpop.f32.mrb[0].mxu0
        %v1546 = vadd.f32 0.0, %v1545
        %v1547 = vpop.f32.mrb[0].mxu0
        %1548 = vmatprep.mubr.f32.mxu0 0.0
        %1549 = vmatmul.mubr.f32.gmra.mrb[0].mxu0 %v1373
        %v1550 = vpop.f32.mrb[0].mxu0
        %v1551 = vadd.f32 0.0, %v1550
        %v1552 = vpop.f32.mrb[0].mxu0
        %1553 = vmatprep.mubr.f32.mxu0 0.0
        %1554 = vmatmul.mubr.f32.gmra.mrb[0].mxu0 %v1376
        %v1555 = vpop.f32.mrb[0].mxu0
        %v1556 = vadd.f32 0.0, %v1555
        %v1557 = vpop.f32.mrb[0].mxu0
        %1558 = vmatprep.mubr.f32.mxu0 0.0
        %1559 = vmatmul.mubr.f32.gmra.mrb[0].mxu0 %v1379
        %v1560 = vpop.f32.mrb[0].mxu0
        %v1561 = vadd.f32 0.0, %v1560
        %v1562 = vpop.f32.mrb[0].mxu0
        %1563 = vmatprep.mubr.f32.mxu0 0.0
        %1564 = vmatmul.mubr.f32.gmra.mrb[0].mxu0 %v1382
        %v1565 = vpop.f32.mrb[0].mxu0
        %v1566 = vadd.f32 0.0, %v1565
        %v1567 = vpop.f32.mrb[0].mxu0
        %1568 = vmatprep.mubr.f32.mxu0 0.0
        %1569 = vmatmul.mubr.f32.gmra.mrb[0].mxu0 %v1385
        %v1570 = vpop.f32.mrb[0].mxu0
        %v1571 = vadd.f32 0.0, %v1570
        %v1572 = vpop.f32.mrb[0].mxu0
        %1573 = vmatprep.mubr.f32.mxu0 0.0
        %1574 = vmatmul.mubr.f32.gmra.mrb[0].mxu0 %v1388
        %v1575 = vpop.f32.mrb[0].mxu0
        %v1576 = vadd.f32 0.0, %v1575
        %v1577 = vpop.f32.mrb[0].mxu0
        %1578 = vmatprep.mubr.f32.mxu0 0.0
        %1579 = vmatmul.mubr.f32.gmra.mrb[0].mxu0 %v1391
        %v1580 = vpop.f32.mrb[0].mxu0
        %v1581 = vadd.f32 0.0, %v1580
        %v1582 = vpop.f32.mrb[0].mxu0
        %1583 = vmatprep.mubr.f32.mxu0 0.0
        %1584 = vmatmul.mubr.f32.gmra.mrb[0].mxu0 %v1394
        %v1585 = vpop.f32.mrb[0].mxu0
        %v1586 = vadd.f32 0.0, %v1585
        %v1587 = vpop.f32.mrb[0].mxu0
        %1588 = vmatprep.mubr.f32.mxu0 0.0
        %1589 = vmatmul.mubr.f32.gmra.mrb[0].mxu0 %v1397
        %v1590 = vpop.f32.mrb[0].mxu0
        %v1591 = vadd.f32 0.0, %v1590
        %v1592 = vpop.f32.mrb[0].mxu0
        %1593 = vmatprep.mubr.f32.mxu0 0.0
        %1594 = vmatmul.mubr.f32.gmra.mrb[0].mxu0 %v1400
        %v1595 = vpop.f32.mrb[0].mxu0
        %v1596 = vadd.f32 0.0, %v1595
        %v1597 = vpop.f32.mrb[0].mxu0
        %1598 = vmatprep.mubr.f32.mxu0 0.0
        %1599 = vmatmul.mubr.f32.gmra.mrb[0].mxu0 %v1403
        %v1600 = vpop.f32.mrb[0].mxu0
        %v1601 = vadd.f32 0.0, %v1600
        %v1602 = vpop.f32.mrb[0].mxu0
        %1603 = vmatprep.mubr.f32.mxu0 0.0
        %1604 = vmatmul.mubr.f32.gmra.mrb[0].mxu0 %v1406
        %v1605 = vpop.f32.mrb[0].mxu0
        %v1606 = vadd.f32 0.0, %v1605
        %v1607 = vpop.f32.mrb[0].mxu0
        %1608 = vmatprep.mubr.f32.mxu0 0.0
        %1609 = vmatmul.mubr.f32.gmra.mrb[0].mxu0 %v1409
        %v1610 = vpop.f32.mrb[0].mxu0
        %v1611 = vadd.f32 0.0, %v1610
        %v1612 = vpop.f32.mrb[0].mxu0
        %1613 = vmatprep.mubr.f32.mxu0 0.0
        %1614 = vmatmul.mubr.f32.gmra.mrb[0].mxu0 %v1412
        %v1615 = vpop.f32.mrb[0].mxu0
        %v1616 = vadd.f32 0.0, %v1615
        %v1617 = vpop.f32.mrb[0].mxu0
        %1618 = vmatprep.mubr.f32.mxu0 0.0
        %1619 = vmatmul.mubr.f32.gmra.mrb[0].mxu0 %v1415
        %v1620 = vpop.f32.mrb[0].mxu0
        %v1621 = vadd.f32 0.0, %v1620
        %v1622 = vpop.f32.mrb[0].mxu0
        %1623 = vmatprep.mubr.f32.mxu0 0.0
        %1624 = vmatmul.mubr.f32.gmra.mrb[0].mxu0 %v1418
        %v1625 = vpop.f32.mrb[0].mxu0
        %v1626 = vadd.f32 0.0, %v1625
        %v1627 = vpop.f32.mrb[0].mxu0
        %1628 = vmatprep.mubr.f32.mxu0 0.0
        %1629 = vmatmul.mubr.f32.gmra.mrb[0].mxu0 %v1421
        %v1630 = vpop.f32.mrb[0].mxu0
        %v1631 = vadd.f32 0.0, %v1630
        %v1632 = vpop.f32.mrb[0].mxu0
        %1633 = vmatprep.mubr.f32.mxu0 0.0
        %1634 = vmatmul.mubr.f32.gmra.mrb[0].mxu0 %v1424
        %v1635 = vpop.f32.mrb[0].mxu0
        %v1636 = vadd.f32 0.0, %v1635
        %v1637 = vpop.f32.mrb[0].mxu0
        %1638 = vmatprep.mubr.f32.mxu0 0.0
        %1639 = vmatmul.mubr.f32.gmra.mrb[0].mxu0 %v1427
        %v1640 = vpop.f32.mrb[0].mxu0
        %v1641 = vadd.f32 0.0, %v1640
        %v1642 = vpop.f32.mrb[0].mxu0
        %1643 = vmatprep.mubr.f32.mxu0 0.0
        %1644 = vmatmul.mubr.f32.gmra.mrb[0].mxu0 %v1430
        %v1645 = vpop.f32.mrb[0].mxu0
        %v1646 = vadd.f32 0.0, %v1645
        %v1647 = vpop.f32.mrb[0].mxu0
        %1648 = vmatprep.mubr.f32.mxu0 0.0
        %1649 = vmatmul.mubr.f32.gmra.mrb[0].mxu0 %v1433
        %v1650 = vpop.f32.mrb[0].mxu0
        %v1651 = vadd.f32 0.0, %v1650
        %v1652 = vpop.f32.mrb[0].mxu0
        %1653 = vmatprep.mubr.f32.mxu0 0.0
        %1654 = vmatmul.mubr.f32.gmra.mrb[0].mxu0 %v1436
        %v1655 = vpop.f32.mrb[0].mxu0
        %v1656 = vadd.f32 0.0, %v1655
        %v1657 = vpop.f32.mrb[0].mxu0
        %1658 = vmatprep.mubr.f32.mxu0 0.0
        %1659 = vmatmul.mubr.f32.gmra.mrb[0].mxu0 %v1439
        %v1660 = vpop.f32.mrb[0].mxu0
        %v1661 = vadd.f32 0.0, %v1660
        %v1662 = vpop.f32.mrb[0].mxu0
        %1663 = vmatprep.mubr.f32.mxu0 0.0
        %1664 = vmatmul.mubr.f32.gmra.mrb[0].mxu0 %v1442
        %v1665 = vpop.f32.mrb[0].mxu0
        %v1666 = vadd.f32 0.0, %v1665
        %v1667 = vpop.f32.mrb[0].mxu0
        %1668 = vdwg.mxu0
        %v1669 = vadd.f32 %v1281, %v1511
        %v1670 = vadd.f32 %v1282, %v1516
        %v1671 = vadd.f32 %v1283, %v1521
        %v1672 = vadd.f32 %v1284, %v1526
        %v1673 = vadd.f32 %v1285, %v1531
        %v1674 = vadd.f32 %v1286, %v1536
        %v1675 = vadd.f32 %v1287, %v1541
        %v1676 = vadd.f32 %v1288, %v1546
        %v1677 = vadd.f32 %v1289, %v1551
        %v1678 = vadd.f32 %v1290, %v1556
        %v1679 = vadd.f32 %v1291, %v1561
        %v1680 = vadd.f32 %v1292, %v1566
        %v1681 = vadd.f32 %v1293, %v1571
        %v1682 = vadd.f32 %v1294, %v1576
        %v1683 = vadd.f32 %v1295, %v1581
        %v1684 = vadd.f32 %v1296, %v1586
        %v1685 = vadd.f32 %v1297, %v1591
        %v1686 = vadd.f32 %v1298, %v1596
        %v1687 = vadd.f32 %v1299, %v1601
        %v1688 = vadd.f32 %v1300, %v1606
        %v1689 = vadd.f32 %v1301, %v1611
        %v1690 = vadd.f32 %v1302, %v1616
        %v1691 = vadd.f32 %v1303, %v1621
        %v1692 = vadd.f32 %v1304, %v1626
        %v1693 = vadd.f32 %v1305, %v1631
        %v1694 = vadd.f32 %v1306, %v1636
        %v1695 = vadd.f32 %v1307, %v1641
        %v1696 = vadd.f32 %v1308, %v1646
        %v1697 = vadd.f32 %v1309, %v1651
        %v1698 = vadd.f32 %v1310, %v1656
        %v1699 = vadd.f32 %v1311, %v1661
        %v1700 = vadd.f32 %v1312, %v1666
        %v1701 = vld [vmem:[%s1313 + $0x1] sm:$0xff]
        %v1702 = vld [vmem:[%s1313 + $0x9] sm:$0xff]
        %v1703 = vld [vmem:[%s1313 + $0x19] sm:$0xff]
        %v1704 = vld [vmem:[%s1313 + $0x21] sm:$0xff]
        %v1705 = vld [vmem:[%s1313 + $0x31] sm:$0xff]
        %v1706 = vld [vmem:[%s1313 + $0x39] sm:$0xff]
        %v1707 = vld [vmem:[%s1313 + $0x49] sm:$0xff]
        %v1708 = vld [vmem:[%s1313 + $0x51] sm:$0xff]
        %v1709 = vld [vmem:[%s1313 + $0x61] sm:$0xff]
        %v1710 = vld [vmem:[%s1313 + $0x69] sm:$0xff]
        %v1711 = vld [vmem:[%s1313 + $0x79] sm:$0xff]
        %v1712 = vld [vmem:[%s1313 + $0x81] sm:$0xff]
        %v1713 = vld [vmem:[%s1313 + $0x91] sm:$0xff]
        %v1714 = vld [vmem:[%s1313 + $0x99] sm:$0xff]
        %v1715 = vld [vmem:[%s1313 + $0xa9] sm:$0xff]
        %v1716 = vld [vmem:[%s1313 + $0xb1] sm:$0xff]
        %v1717 = vld [vmem:[%s1313 + $0xc1] sm:$0xff]
        %v1718 = vld [vmem:[%s1313 + $0xc9] sm:$0xff]
        %v1719 = vld [vmem:[%s1313 + $0xd9] sm:$0xff]
        %v1720 = vld [vmem:[%s1313 + $0xe1] sm:$0xff]
        %v1721 = vld [vmem:[%s1313 + $0xf1] sm:$0xff]
        %v1722 = vld [vmem:[%s1313 + $0xf9] sm:$0xff]
        %v1723 = vld [vmem:[%s1313 + $0x109] sm:$0xff]
        %v1724 = vld [vmem:[%s1313 + $0x111] sm:$0xff]
        %v1725 = vld [vmem:[%s1313 + $0x121] sm:$0xff]
        %v1726 = vld [vmem:[%s1313 + $0x129] sm:$0xff]
        %v1727 = vld [vmem:[%s1313 + $0x139] sm:$0xff]
        %v1728 = vld [vmem:[%s1313 + $0x141] sm:$0xff]
        %v1729 = vld [vmem:[%s1313 + $0x151] sm:$0xff]
        %v1730 = vld [vmem:[%s1313 + $0x159] sm:$0xff]
        %v1731 = vld [vmem:[%s1313 + $0x169] sm:$0xff]
        %v1732 = vld [vmem:[%s1313 + $0x171] sm:$0xff]
        %s1733 = scalar_lea.vmem [#allocation5], 32
        %v1734 = vld [vmem:[%s1733] sm:$0xff]
        %v1736 = vsel %vm283, %v1701, 0
        %v1739 = vsel %vm283, %v1702, 0
        %v1742 = vsel %vm283, %v1703, 0
        %v1745 = vsel %vm283, %v1704, 0
        %v1748 = vsel %vm283, %v1705, 0
        %v1751 = vsel %vm283, %v1706, 0
        %v1754 = vsel %vm283, %v1707, 0
        %v1757 = vsel %vm283, %v1708, 0
        %v1760 = vsel %vm283, %v1709, 0
        %v1763 = vsel %vm283, %v1710, 0
        %v1766 = vsel %vm283, %v1711, 0
        %v1769 = vsel %vm283, %v1712, 0
        %v1772 = vsel %vm283, %v1713, 0
        %v1775 = vsel %vm283, %v1714, 0
        %v1778 = vsel %vm283, %v1715, 0
        %v1781 = vsel %vm283, %v1716, 0
        %v1784 = vsel %vm283, %v1717, 0
        %v1787 = vsel %vm283, %v1718, 0
        %v1790 = vsel %vm283, %v1719, 0
        %v1793 = vsel %vm283, %v1720, 0
        %v1796 = vsel %vm283, %v1721, 0
        %v1799 = vsel %vm283, %v1722, 0
        %v1802 = vsel %vm283, %v1723, 0
        %v1805 = vsel %vm283, %v1724, 0
        %v1808 = vsel %vm283, %v1725, 0
        %v1811 = vsel %vm283, %v1726, 0
        %v1814 = vsel %vm283, %v1727, 0
        %v1817 = vsel %vm283, %v1728, 0
        %v1820 = vsel %vm283, %v1729, 0
        %v1823 = vsel %vm283, %v1730, 0
        %v1826 = vsel %vm283, %v1731, 0
        %v1829 = vsel %vm283, %v1732, 0
        %1831 = vmatprep.subr.mxu0 0.0
        %1832 = vmatpush1.msra.mxu0 %v1734
        %1833 = vmatprep.subr.mxu0 0.0
        %1834 = vmatpush1.msra.mxu0 0.0
        %1835 = vmatprep.subr.mxu0 0.0
        %1836 = vmatpush1.msra.mxu0 0.0
        %1837 = vmatprep.subr.mxu0 0.0
        %1838 = vmatpush1.msra.mxu0 0.0
        %1839 = vmatprep.subr.mxu0 0.0
        %1840 = vmatpush1.msra.mxu0 0.0
        %1841 = vmatprep.subr.mxu0 0.0
        %1842 = vmatpush1.msra.mxu0 0.0
        %1843 = vmatprep.subr.mxu0 0.0
        %1844 = vmatpush1.msra.mxu0 0.0
        %1845 = vmatprep.subr.mxu0 0.0
        %1846 = vmatpush1.msra.mxu0 0.0
        %1847 = vmatprep.subr.mxu0 0.0
        %1848 = vmatpush1.msra.mxu0 0.0
        %1849 = vmatprep.subr.mxu0 0.0
        %1850 = vmatpush1.msra.mxu0 0.0
        %1851 = vmatprep.subr.mxu0 0.0
        %1852 = vmatpush1.msra.mxu0 0.0
        %1853 = vmatprep.subr.mxu0 0.0
        %1854 = vmatpush1.msra.mxu0 0.0
        %1855 = vmatprep.subr.mxu0 0.0
        %1856 = vmatpush1.msra.mxu0 0.0
        %1857 = vmatprep.subr.mxu0 0.0
        %1858 = vmatpush1.msra.mxu0 0.0
        %1859 = vmatprep.subr.mxu0 0.0
        %1860 = vmatpush1.msra.mxu0 0.0
        %1861 = vmatprep.subr.mxu0 0.0
        %1862 = vmatpush1.msra.mxu0 0.0
        %1863 = vmatprep.subr.mxu0 0.0
        %1864 = vmatpush1.msra.mxu0 0.0
        %1865 = vmatprep.subr.mxu0 0.0
        %1866 = vmatpush1.msra.mxu0 0.0
        %1867 = vmatprep.subr.mxu0 0.0
        %1868 = vmatpush1.msra.mxu0 0.0
        %1869 = vmatprep.subr.mxu0 0.0
        %1870 = vmatpush1.msra.mxu0 0.0
        %1871 = vmatprep.subr.mxu0 0.0
        %1872 = vmatpush1.msra.mxu0 0.0
        %1873 = vmatprep.subr.mxu0 0.0
        %1874 = vmatpush1.msra.mxu0 0.0
        %1875 = vmatprep.subr.mxu0 0.0
        %1876 = vmatpush1.msra.mxu0 0.0
        %1877 = vmatprep.subr.mxu0 0.0
        %1878 = vmatpush1.msra.mxu0 0.0
        %1879 = vmatprep.subr.mxu0 0.0
        %1880 = vmatpush1.msra.mxu0 0.0
        %1881 = vmatprep.subr.mxu0 0.0
        %1882 = vmatpush1.msra.mxu0 0.0
        %1883 = vmatprep.subr.mxu0 0.0
        %1884 = vmatpush1.msra.mxu0 0.0
        %1885 = vmatprep.subr.mxu0 0.0
        %1886 = vmatpush1.msra.mxu0 0.0
        %1887 = vmatprep.subr.mxu0 0.0
        %1888 = vmatpush1.msra.mxu0 0.0
        %1889 = vmatprep.subr.mxu0 0.0
        %1890 = vmatpush1.msra.mxu0 0.0
        %1891 = vmatprep.subr.mxu0 0.0
        %1892 = vmatpush1.msra.mxu0 0.0
        %1893 = vmatprep.subr.mxu0 0.0
        %1894 = vmatpush1.msra.mxu0 0.0
        %1895 = vmatprep.mubr.f32.mxu0 0.0
        %1896 = vmatmul.mubr.f32.gmra.mrb[0].mxu0 %v1736
        %v1897 = vpop.f32.mrb[0].mxu0
        %v1898 = vadd.f32 0.0, %v1897
        %v1899 = vpop.f32.mrb[0].mxu0
        %1900 = vmatprep.mubr.f32.mxu0 0.0
        %1901 = vmatmul.mubr.f32.gmra.mrb[0].mxu0 %v1739
        %v1902 = vpop.f32.mrb[0].mxu0
        %v1903 = vadd.f32 0.0, %v1902
        %v1904 = vpop.f32.mrb[0].mxu0
        %1905 = vmatprep.mubr.f32.mxu0 0.0
        %1906 = vmatmul.mubr.f32.gmra.mrb[0].mxu0 %v1742
        %v1907 = vpop.f32.mrb[0].mxu0
        %v1908 = vadd.f32 0.0, %v1907
        %v1909 = vpop.f32.mrb[0].mxu0
        %1910 = vmatprep.mubr.f32.mxu0 0.0
        %1911 = vmatmul.mubr.f32.gmra.mrb[0].mxu0 %v1745
        %v1912 = vpop.f32.mrb[0].mxu0
        %v1913 = vadd.f32 0.0, %v1912
        %v1914 = vpop.f32.mrb[0].mxu0
        %1915 = vmatprep.mubr.f32.mxu0 0.0
        %1916 = vmatmul.mubr.f32.gmra.mrb[0].mxu0 %v1748
        %v1917 = vpop.f32.mrb[0].mxu0
        %v1918 = vadd.f32 0.0, %v1917
        %v1919 = vpop.f32.mrb[0].mxu0
        %1920 = vmatprep.mubr.f32.mxu0 0.0
        %1921 = vmatmul.mubr.f32.gmra.mrb[0].mxu0 %v1751
        %v1922 = vpop.f32.mrb[0].mxu0
        %v1923 = vadd.f32 0.0, %v1922
        %v1924 = vpop.f32.mrb[0].mxu0
        %1925 = vmatprep.mubr.f32.mxu0 0.0
        %1926 = vmatmul.mubr.f32.gmra.mrb[0].mxu0 %v1754
        %v1927 = vpop.f32.mrb[0].mxu0
        %v1928 = vadd.f32 0.0, %v1927
        %v1929 = vpop.f32.mrb[0].mxu0
        %1930 = vmatprep.mubr.f32.mxu0 0.0
        %1931 = vmatmul.mubr.f32.gmra.mrb[0].mxu0 %v1757
        %v1932 = vpop.f32.mrb[0].mxu0
        %v1933 = vadd.f32 0.0, %v1932
        %v1934 = vpop.f32.mrb[0].mxu0
        %1935 = vmatprep.mubr.f32.mxu0 0.0
        %1936 = vmatmul.mubr.f32.gmra.mrb[0].mxu0 %v1760
        %v1937 = vpop.f32.mrb[0].mxu0
        %v1938 = vadd.f32 0.0, %v1937
        %v1939 = vpop.f32.mrb[0].mxu0
        %1940 = vmatprep.mubr.f32.mxu0 0.0
        %1941 = vmatmul.mubr.f32.gmra.mrb[0].mxu0 %v1763
        %v1942 = vpop.f32.mrb[0].mxu0
        %v1943 = vadd.f32 0.0, %v1942
        %v1944 = vpop.f32.mrb[0].mxu0
        %1945 = vmatprep.mubr.f32.mxu0 0.0
        %1946 = vmatmul.mubr.f32.gmra.mrb[0].mxu0 %v1766
        %v1947 = vpop.f32.mrb[0].mxu0
        %v1948 = vadd.f32 0.0, %v1947
        %v1949 = vpop.f32.mrb[0].mxu0
        %1950 = vmatprep.mubr.f32.mxu0 0.0
        %1951 = vmatmul.mubr.f32.gmra.mrb[0].mxu0 %v1769
        %v1952 = vpop.f32.mrb[0].mxu0
        %v1953 = vadd.f32 0.0, %v1952
        %v1954 = vpop.f32.mrb[0].mxu0
        %1955 = vmatprep.mubr.f32.mxu0 0.0
        %1956 = vmatmul.mubr.f32.gmra.mrb[0].mxu0 %v1772
        %v1957 = vpop.f32.mrb[0].mxu0
        %v1958 = vadd.f32 0.0, %v1957
        %v1959 = vpop.f32.mrb[0].mxu0
        %1960 = vmatprep.mubr.f32.mxu0 0.0
        %1961 = vmatmul.mubr.f32.gmra.mrb[0].mxu0 %v1775
        %v1962 = vpop.f32.mrb[0].mxu0
        %v1963 = vadd.f32 0.0, %v1962
        %v1964 = vpop.f32.mrb[0].mxu0
        %1965 = vmatprep.mubr.f32.mxu0 0.0
        %1966 = vmatmul.mubr.f32.gmra.mrb[0].mxu0 %v1778
        %v1967 = vpop.f32.mrb[0].mxu0
        %v1968 = vadd.f32 0.0, %v1967
        %v1969 = vpop.f32.mrb[0].mxu0
        %1970 = vmatprep.mubr.f32.mxu0 0.0
        %1971 = vmatmul.mubr.f32.gmra.mrb[0].mxu0 %v1781
        %v1972 = vpop.f32.mrb[0].mxu0
        %v1973 = vadd.f32 0.0, %v1972
        %v1974 = vpop.f32.mrb[0].mxu0
        %1975 = vmatprep.mubr.f32.mxu0 0.0
        %1976 = vmatmul.mubr.f32.gmra.mrb[0].mxu0 %v1784
        %v1977 = vpop.f32.mrb[0].mxu0
        %v1978 = vadd.f32 0.0, %v1977
        %v1979 = vpop.f32.mrb[0].mxu0
        %1980 = vmatprep.mubr.f32.mxu0 0.0
        %1981 = vmatmul.mubr.f32.gmra.mrb[0].mxu0 %v1787
        %v1982 = vpop.f32.mrb[0].mxu0
        %v1983 = vadd.f32 0.0, %v1982
        %v1984 = vpop.f32.mrb[0].mxu0
        %1985 = vmatprep.mubr.f32.mxu0 0.0
        %1986 = vmatmul.mubr.f32.gmra.mrb[0].mxu0 %v1790
        %v1987 = vpop.f32.mrb[0].mxu0
        %v1988 = vadd.f32 0.0, %v1987
        %v1989 = vpop.f32.mrb[0].mxu0
        %1990 = vmatprep.mubr.f32.mxu0 0.0
        %1991 = vmatmul.mubr.f32.gmra.mrb[0].mxu0 %v1793
        %v1992 = vpop.f32.mrb[0].mxu0
        %v1993 = vadd.f32 0.0, %v1992
        %v1994 = vpop.f32.mrb[0].mxu0
        %1995 = vmatprep.mubr.f32.mxu0 0.0
        %1996 = vmatmul.mubr.f32.gmra.mrb[0].mxu0 %v1796
        %v1997 = vpop.f32.mrb[0].mxu0
        %v1998 = vadd.f32 0.0, %v1997
        %v1999 = vpop.f32.mrb[0].mxu0
        %2000 = vmatprep.mubr.f32.mxu0 0.0
        %2001 = vmatmul.mubr.f32.gmra.mrb[0].mxu0 %v1799
        %v2002 = vpop.f32.mrb[0].mxu0
        %v2003 = vadd.f32 0.0, %v2002
        %v2004 = vpop.f32.mrb[0].mxu0
        %2005 = vmatprep.mubr.f32.mxu0 0.0
        %2006 = vmatmul.mubr.f32.gmra.mrb[0].mxu0 %v1802
        %v2007 = vpop.f32.mrb[0].mxu0
        %v2008 = vadd.f32 0.0, %v2007
        %v2009 = vpop.f32.mrb[0].mxu0
        %2010 = vmatprep.mubr.f32.mxu0 0.0
        %2011 = vmatmul.mubr.f32.gmra.mrb[0].mxu0 %v1805
        %v2012 = vpop.f32.mrb[0].mxu0
        %v2013 = vadd.f32 0.0, %v2012
        %v2014 = vpop.f32.mrb[0].mxu0
        %2015 = vmatprep.mubr.f32.mxu0 0.0
        %2016 = vmatmul.mubr.f32.gmra.mrb[0].mxu0 %v1808
        %v2017 = vpop.f32.mrb[0].mxu0
        %v2018 = vadd.f32 0.0, %v2017
        %v2019 = vpop.f32.mrb[0].mxu0
        %2020 = vmatprep.mubr.f32.mxu0 0.0
        %2021 = vmatmul.mubr.f32.gmra.mrb[0].mxu0 %v1811
        %v2022 = vpop.f32.mrb[0].mxu0
        %v2023 = vadd.f32 0.0, %v2022
        %v2024 = vpop.f32.mrb[0].mxu0
        %2025 = vmatprep.mubr.f32.mxu0 0.0
        %2026 = vmatmul.mubr.f32.gmra.mrb[0].mxu0 %v1814
        %v2027 = vpop.f32.mrb[0].mxu0
        %v2028 = vadd.f32 0.0, %v2027
        %v2029 = vpop.f32.mrb[0].mxu0
        %2030 = vmatprep.mubr.f32.mxu0 0.0
        %2031 = vmatmul.mubr.f32.gmra.mrb[0].mxu0 %v1817
        %v2032 = vpop.f32.mrb[0].mxu0
        %v2033 = vadd.f32 0.0, %v2032
        %v2034 = vpop.f32.mrb[0].mxu0
        %2035 = vmatprep.mubr.f32.mxu0 0.0
        %2036 = vmatmul.mubr.f32.gmra.mrb[0].mxu0 %v1820
        %v2037 = vpop.f32.mrb[0].mxu0
        %v2038 = vadd.f32 0.0, %v2037
        %v2039 = vpop.f32.mrb[0].mxu0
        %2040 = vmatprep.mubr.f32.mxu0 0.0
        %2041 = vmatmul.mubr.f32.gmra.mrb[0].mxu0 %v1823
        %v2042 = vpop.f32.mrb[0].mxu0
        %v2043 = vadd.f32 0.0, %v2042
        %v2044 = vpop.f32.mrb[0].mxu0
        %2045 = vmatprep.mubr.f32.mxu0 0.0
        %2046 = vmatmul.mubr.f32.gmra.mrb[0].mxu0 %v1826
        %v2047 = vpop.f32.mrb[0].mxu0
        %v2048 = vadd.f32 0.0, %v2047
        %v2049 = vpop.f32.mrb[0].mxu0
        %2050 = vmatprep.mubr.f32.mxu0 0.0
        %2051 = vmatmul.mubr.f32.gmra.mrb[0].mxu0 %v1829
        %v2052 = vpop.f32.mrb[0].mxu0
        %v2053 = vadd.f32 0.0, %v2052
        %v2054 = vpop.f32.mrb[0].mxu0
        %2055 = vdwg.mxu0
        %v2056 = vadd.f32 %v1669, %v1898
        %v2057 = vadd.f32 %v1670, %v1903
        %v2058 = vadd.f32 %v1671, %v1908
        %v2059 = vadd.f32 %v1672, %v1913
        %v2060 = vadd.f32 %v1673, %v1918
        %v2061 = vadd.f32 %v1674, %v1923
        %v2062 = vadd.f32 %v1675, %v1928
        %v2063 = vadd.f32 %v1676, %v1933
        %v2064 = vadd.f32 %v1677, %v1938
        %v2065 = vadd.f32 %v1678, %v1943
        %v2066 = vadd.f32 %v1679, %v1948
        %v2067 = vadd.f32 %v1680, %v1953
        %v2068 = vadd.f32 %v1681, %v1958
        %v2069 = vadd.f32 %v1682, %v1963
        %v2070 = vadd.f32 %v1683, %v1968
        %v2071 = vadd.f32 %v1684, %v1973
        %v2072 = vadd.f32 %v1685, %v1978
        %v2073 = vadd.f32 %v1686, %v1983
        %v2074 = vadd.f32 %v1687, %v1988
        %v2075 = vadd.f32 %v1688, %v1993
        %v2076 = vadd.f32 %v1689, %v1998
        %v2077 = vadd.f32 %v1690, %v2003
        %v2078 = vadd.f32 %v1691, %v2008
        %v2079 = vadd.f32 %v1692, %v2013
        %v2080 = vadd.f32 %v1693, %v2018
        %v2081 = vadd.f32 %v1694, %v2023
        %v2082 = vadd.f32 %v1695, %v2028
        %v2083 = vadd.f32 %v1696, %v2033
        %v2084 = vadd.f32 %v1697, %v2038
        %v2085 = vadd.f32 %v1698, %v2043
        %v2086 = vadd.f32 %v1699, %v2048
        %v2087 = vadd.f32 %v1700, %v2053
        %v2088 = vld [vmem:[%s1313 + $0x2] sm:$0xff]
        %v2089 = vld [vmem:[%s1313 + $0xa] sm:$0xff]
        %v2090 = vld [vmem:[%s1313 + $0x1a] sm:$0xff]
        %v2091 = vld [vmem:[%s1313 + $0x22] sm:$0xff]
        %v2092 = vld [vmem:[%s1313 + $0x32] sm:$0xff]
        %v2093 = vld [vmem:[%s1313 + $0x3a] sm:$0xff]
        %v2094 = vld [vmem:[%s1313 + $0x4a] sm:$0xff]
        %v2095 = vld [vmem:[%s1313 + $0x52] sm:$0xff]
        %v2096 = vld [vmem:[%s1313 + $0x62] sm:$0xff]
        %v2097 = vld [vmem:[%s1313 + $0x6a] sm:$0xff]
        %v2098 = vld [vmem:[%s1313 + $0x7a] sm:$0xff]
        %v2099 = vld [vmem:[%s1313 + $0x82] sm:$0xff]
        %v2100 = vld [vmem:[%s1313 + $0x92] sm:$0xff]
        %v2101 = vld [vmem:[%s1313 + $0x9a] sm:$0xff]
        %v2102 = vld [vmem:[%s1313 + $0xaa] sm:$0xff]
        %v2103 = vld [vmem:[%s1313 + $0xb2] sm:$0xff]
        %v2104 = vld [vmem:[%s1313 + $0xc2] sm:$0xff]
        %v2105 = vld [vmem:[%s1313 + $0xca] sm:$0xff]
        %v2106 = vld [vmem:[%s1313 + $0xda] sm:$0xff]
        %v2107 = vld [vmem:[%s1313 + $0xe2] sm:$0xff]
        %v2108 = vld [vmem:[%s1313 + $0xf2] sm:$0xff]
        %v2109 = vld [vmem:[%s1313 + $0xfa] sm:$0xff]
        %v2110 = vld [vmem:[%s1313 + $0x10a] sm:$0xff]
        %v2111 = vld [vmem:[%s1313 + $0x112] sm:$0xff]
        %v2112 = vld [vmem:[%s1313 + $0x122] sm:$0xff]
        %v2113 = vld [vmem:[%s1313 + $0x12a] sm:$0xff]
        %v2114 = vld [vmem:[%s1313 + $0x13a] sm:$0xff]
        %v2115 = vld [vmem:[%s1313 + $0x142] sm:$0xff]
        %v2116 = vld [vmem:[%s1313 + $0x152] sm:$0xff]
        %v2117 = vld [vmem:[%s1313 + $0x15a] sm:$0xff]
        %v2118 = vld [vmem:[%s1313 + $0x16a] sm:$0xff]
        %v2119 = vld [vmem:[%s1313 + $0x172] sm:$0xff]
        %s2120 = scalar_lea.vmem [#allocation5], 40
        %v2121 = vld [vmem:[%s2120] sm:$0xff]
        %v2123 = vsel %vm283, %v2088, 0
        %v2126 = vsel %vm283, %v2089, 0
        %v2129 = vsel %vm283, %v2090, 0
        %v2132 = vsel %vm283, %v2091, 0
        %v2135 = vsel %vm283, %v2092, 0
        %v2138 = vsel %vm283, %v2093, 0
        %v2141 = vsel %vm283, %v2094, 0
        %v2144 = vsel %vm283, %v2095, 0
        %v2147 = vsel %vm283, %v2096, 0
        %v2150 = vsel %vm283, %v2097, 0
        %v2153 = vsel %vm283, %v2098, 0
        %v2156 = vsel %vm283, %v2099, 0
        %v2159 = vsel %vm283, %v2100, 0
        %v2162 = vsel %vm283, %v2101, 0
        %v2165 = vsel %vm283, %v2102, 0
        %v2168 = vsel %vm283, %v2103, 0
        %v2171 = vsel %vm283, %v2104, 0
        %v2174 = vsel %vm283, %v2105, 0
        %v2177 = vsel %vm283, %v2106, 0
        %v2180 = vsel %vm283, %v2107, 0
        %v2183 = vsel %vm283, %v2108, 0
        %v2186 = vsel %vm283, %v2109, 0
        %v2189 = vsel %vm283, %v2110, 0
        %v2192 = vsel %vm283, %v2111, 0
        %v2195 = vsel %vm283, %v2112, 0
        %v2198 = vsel %vm283, %v2113, 0
        %v2201 = vsel %vm283, %v2114, 0
        %v2204 = vsel %vm283, %v2115, 0
        %v2207 = vsel %vm283, %v2116, 0
        %v2210 = vsel %vm283, %v2117, 0
        %v2213 = vsel %vm283, %v2118, 0
        %v2216 = vsel %vm283, %v2119, 0
        %2218 = vmatprep.subr.mxu0 0.0
        %2219 = vmatpush1.msra.mxu0 %v2121
        %2220 = vmatprep.subr.mxu0 0.0
        %2221 = vmatpush1.msra.mxu0 0.0
        %2222 = vmatprep.subr.mxu0 0.0
        %2223 = vmatpush1.msra.mxu0 0.0
        %2224 = vmatprep.subr.mxu0 0.0
        %2225 = vmatpush1.msra.mxu0 0.0
        %2226 = vmatprep.subr.mxu0 0.0
        %2227 = vmatpush1.msra.mxu0 0.0
        %2228 = vmatprep.subr.mxu0 0.0
        %2229 = vmatpush1.msra.mxu0 0.0
        %2230 = vmatprep.subr.mxu0 0.0
        %2231 = vmatpush1.msra.mxu0 0.0
        %2232 = vmatprep.subr.mxu0 0.0
        %2233 = vmatpush1.msra.mxu0 0.0
        %2234 = vmatprep.subr.mxu0 0.0
        %2235 = vmatpush1.msra.mxu0 0.0
        %2236 = vmatprep.subr.mxu0 0.0
        %2237 = vmatpush1.msra.mxu0 0.0
        %2238 = vmatprep.subr.mxu0 0.0
        %2239 = vmatpush1.msra.mxu0 0.0
        %2240 = vmatprep.subr.mxu0 0.0
        %2241 = vmatpush1.msra.mxu0 0.0
        %2242 = vmatprep.subr.mxu0 0.0
        %2243 = vmatpush1.msra.mxu0 0.0
        %2244 = vmatprep.subr.mxu0 0.0
        %2245 = vmatpush1.msra.mxu0 0.0
        %2246 = vmatprep.subr.mxu0 0.0
        %2247 = vmatpush1.msra.mxu0 0.0
        %2248 = vmatprep.subr.mxu0 0.0
        %2249 = vmatpush1.msra.mxu0 0.0
        %2250 = vmatprep.subr.mxu0 0.0
        %2251 = vmatpush1.msra.mxu0 0.0
        %2252 = vmatprep.subr.mxu0 0.0
        %2253 = vmatpush1.msra.mxu0 0.0
        %2254 = vmatprep.subr.mxu0 0.0
        %2255 = vmatpush1.msra.mxu0 0.0
        %2256 = vmatprep.subr.mxu0 0.0
        %2257 = vmatpush1.msra.mxu0 0.0
        %2258 = vmatprep.subr.mxu0 0.0
        %2259 = vmatpush1.msra.mxu0 0.0
        %2260 = vmatprep.subr.mxu0 0.0
        %2261 = vmatpush1.msra.mxu0 0.0
        %2262 = vmatprep.subr.mxu0 0.0
        %2263 = vmatpush1.msra.mxu0 0.0
        %2264 = vmatprep.subr.mxu0 0.0
        %2265 = vmatpush1.msra.mxu0 0.0
        %2266 = vmatprep.subr.mxu0 0.0
        %2267 = vmatpush1.msra.mxu0 0.0
        %2268 = vmatprep.subr.mxu0 0.0
        %2269 = vmatpush1.msra.mxu0 0.0
        %2270 = vmatprep.subr.mxu0 0.0
        %2271 = vmatpush1.msra.mxu0 0.0
        %2272 = vmatprep.subr.mxu0 0.0
        %2273 = vmatpush1.msra.mxu0 0.0
        %2274 = vmatprep.subr.mxu0 0.0
        %2275 = vmatpush1.msra.mxu0 0.0
        %2276 = vmatprep.subr.mxu0 0.0
        %2277 = vmatpush1.msra.mxu0 0.0
        %2278 = vmatprep.subr.mxu0 0.0
        %2279 = vmatpush1.msra.mxu0 0.0
        %2280 = vmatprep.subr.mxu0 0.0
        %2281 = vmatpush1.msra.mxu0 0.0
        %2282 = vmatprep.mubr.f32.mxu0 0.0
        %2283 = vmatmul.mubr.f32.gmra.mrb[0].mxu0 %v2123
        %v2284 = vpop.f32.mrb[0].mxu0
        %v2285 = vadd.f32 0.0, %v2284
        %v2286 = vpop.f32.mrb[0].mxu0
        %2287 = vmatprep.mubr.f32.mxu0 0.0
        %2288 = vmatmul.mubr.f32.gmra.mrb[0].mxu0 %v2126
        %v2289 = vpop.f32.mrb[0].mxu0
        %v2290 = vadd.f32 0.0, %v2289
        %v2291 = vpop.f32.mrb[0].mxu0
        %2292 = vmatprep.mubr.f32.mxu0 0.0
        %2293 = vmatmul.mubr.f32.gmra.mrb[0].mxu0 %v2129
        %v2294 = vpop.f32.mrb[0].mxu0
        %v2295 = vadd.f32 0.0, %v2294
        %v2296 = vpop.f32.mrb[0].mxu0
        %2297 = vmatprep.mubr.f32.mxu0 0.0
        %2298 = vmatmul.mubr.f32.gmra.mrb[0].mxu0 %v2132
        %v2299 = vpop.f32.mrb[0].mxu0
        %v2300 = vadd.f32 0.0, %v2299
        %v2301 = vpop.f32.mrb[0].mxu0
        %2302 = vmatprep.mubr.f32.mxu0 0.0
        %2303 = vmatmul.mubr.f32.gmra.mrb[0].mxu0 %v2135
        %v2304 = vpop.f32.mrb[0].mxu0
        %v2305 = vadd.f32 0.0, %v2304
        %v2306 = vpop.f32.mrb[0].mxu0
        %2307 = vmatprep.mubr.f32.mxu0 0.0
        %2308 = vmatmul.mubr.f32.gmra.mrb[0].mxu0 %v2138
        %v2309 = vpop.f32.mrb[0].mxu0
        %v2310 = vadd.f32 0.0, %v2309
        %v2311 = vpop.f32.mrb[0].mxu0
        %2312 = vmatprep.mubr.f32.mxu0 0.0
        %2313 = vmatmul.mubr.f32.gmra.mrb[0].mxu0 %v2141
        %v2314 = vpop.f32.mrb[0].mxu0
        %v2315 = vadd.f32 0.0, %v2314
        %v2316 = vpop.f32.mrb[0].mxu0
        %2317 = vmatprep.mubr.f32.mxu0 0.0
        %2318 = vmatmul.mubr.f32.gmra.mrb[0].mxu0 %v2144
        %v2319 = vpop.f32.mrb[0].mxu0
        %v2320 = vadd.f32 0.0, %v2319
        %v2321 = vpop.f32.mrb[0].mxu0
        %2322 = vmatprep.mubr.f32.mxu0 0.0
        %2323 = vmatmul.mubr.f32.gmra.mrb[0].mxu0 %v2147
        %v2324 = vpop.f32.mrb[0].mxu0
        %v2325 = vadd.f32 0.0, %v2324
        %v2326 = vpop.f32.mrb[0].mxu0
        %2327 = vmatprep.mubr.f32.mxu0 0.0
        %2328 = vmatmul.mubr.f32.gmra.mrb[0].mxu0 %v2150
        %v2329 = vpop.f32.mrb[0].mxu0
        %v2330 = vadd.f32 0.0, %v2329
        %v2331 = vpop.f32.mrb[0].mxu0
        %2332 = vmatprep.mubr.f32.mxu0 0.0
        %2333 = vmatmul.mubr.f32.gmra.mrb[0].mxu0 %v2153
        %v2334 = vpop.f32.mrb[0].mxu0
        %v2335 = vadd.f32 0.0, %v2334
        %v2336 = vpop.f32.mrb[0].mxu0
        %2337 = vmatprep.mubr.f32.mxu0 0.0
        %2338 = vmatmul.mubr.f32.gmra.mrb[0].mxu0 %v2156
        %v2339 = vpop.f32.mrb[0].mxu0
        %v2340 = vadd.f32 0.0, %v2339
        %v2341 = vpop.f32.mrb[0].mxu0
        %2342 = vmatprep.mubr.f32.mxu0 0.0
        %2343 = vmatmul.mubr.f32.gmra.mrb[0].mxu0 %v2159
        %v2344 = vpop.f32.mrb[0].mxu0
        %v2345 = vadd.f32 0.0, %v2344
        %v2346 = vpop.f32.mrb[0].mxu0
        %2347 = vmatprep.mubr.f32.mxu0 0.0
        %2348 = vmatmul.mubr.f32.gmra.mrb[0].mxu0 %v2162
        %v2349 = vpop.f32.mrb[0].mxu0
        %v2350 = vadd.f32 0.0, %v2349
        %v2351 = vpop.f32.mrb[0].mxu0
        %2352 = vmatprep.mubr.f32.mxu0 0.0
        %2353 = vmatmul.mubr.f32.gmra.mrb[0].mxu0 %v2165
        %v2354 = vpop.f32.mrb[0].mxu0
        %v2355 = vadd.f32 0.0, %v2354
        %v2356 = vpop.f32.mrb[0].mxu0
        %2357 = vmatprep.mubr.f32.mxu0 0.0
        %2358 = vmatmul.mubr.f32.gmra.mrb[0].mxu0 %v2168
        %v2359 = vpop.f32.mrb[0].mxu0
        %v2360 = vadd.f32 0.0, %v2359
        %v2361 = vpop.f32.mrb[0].mxu0
        %2362 = vmatprep.mubr.f32.mxu0 0.0
        %2363 = vmatmul.mubr.f32.gmra.mrb[0].mxu0 %v2171
        %v2364 = vpop.f32.mrb[0].mxu0
        %v2365 = vadd.f32 0.0, %v2364
        %v2366 = vpop.f32.mrb[0].mxu0
        %2367 = vmatprep.mubr.f32.mxu0 0.0
        %2368 = vmatmul.mubr.f32.gmra.mrb[0].mxu0 %v2174
        %v2369 = vpop.f32.mrb[0].mxu0
        %v2370 = vadd.f32 0.0, %v2369
        %v2371 = vpop.f32.mrb[0].mxu0
        %2372 = vmatprep.mubr.f32.mxu0 0.0
        %2373 = vmatmul.mubr.f32.gmra.mrb[0].mxu0 %v2177
        %v2374 = vpop.f32.mrb[0].mxu0
        %v2375 = vadd.f32 0.0, %v2374
        %v2376 = vpop.f32.mrb[0].mxu0
        %2377 = vmatprep.mubr.f32.mxu0 0.0
        %2378 = vmatmul.mubr.f32.gmra.mrb[0].mxu0 %v2180
        %v2379 = vpop.f32.mrb[0].mxu0
        %v2380 = vadd.f32 0.0, %v2379
        %v2381 = vpop.f32.mrb[0].mxu0
        %2382 = vmatprep.mubr.f32.mxu0 0.0
        %2383 = vmatmul.mubr.f32.gmra.mrb[0].mxu0 %v2183
        %v2384 = vpop.f32.mrb[0].mxu0
        %v2385 = vadd.f32 0.0, %v2384
        %v2386 = vpop.f32.mrb[0].mxu0
        %2387 = vmatprep.mubr.f32.mxu0 0.0
        %2388 = vmatmul.mubr.f32.gmra.mrb[0].mxu0 %v2186
        %v2389 = vpop.f32.mrb[0].mxu0
        %v2390 = vadd.f32 0.0, %v2389
        %v2391 = vpop.f32.mrb[0].mxu0
        %2392 = vmatprep.mubr.f32.mxu0 0.0
        %2393 = vmatmul.mubr.f32.gmra.mrb[0].mxu0 %v2189
        %v2394 = vpop.f32.mrb[0].mxu0
        %v2395 = vadd.f32 0.0, %v2394
        %v2396 = vpop.f32.mrb[0].mxu0
        %2397 = vmatprep.mubr.f32.mxu0 0.0
        %2398 = vmatmul.mubr.f32.gmra.mrb[0].mxu0 %v2192
        %v2399 = vpop.f32.mrb[0].mxu0
        %v2400 = vadd.f32 0.0, %v2399
        %v2401 = vpop.f32.mrb[0].mxu0
        %2402 = vmatprep.mubr.f32.mxu0 0.0
        %2403 = vmatmul.mubr.f32.gmra.mrb[0].mxu0 %v2195
        %v2404 = vpop.f32.mrb[0].mxu0
        %v2405 = vadd.f32 0.0, %v2404
        %v2406 = vpop.f32.mrb[0].mxu0
        %2407 = vmatprep.mubr.f32.mxu0 0.0
        %2408 = vmatmul.mubr.f32.gmra.mrb[0].mxu0 %v2198
        %v2409 = vpop.f32.mrb[0].mxu0
        %v2410 = vadd.f32 0.0, %v2409
        %v2411 = vpop.f32.mrb[0].mxu0
        %2412 = vmatprep.mubr.f32.mxu0 0.0
        %2413 = vmatmul.mubr.f32.gmra.mrb[0].mxu0 %v2201
        %v2414 = vpop.f32.mrb[0].mxu0
        %v2415 = vadd.f32 0.0, %v2414
        %v2416 = vpop.f32.mrb[0].mxu0
        %2417 = vmatprep.mubr.f32.mxu0 0.0
        %2418 = vmatmul.mubr.f32.gmra.mrb[0].mxu0 %v2204
        %v2419 = vpop.f32.mrb[0].mxu0
        %v2420 = vadd.f32 0.0, %v2419
        %v2421 = vpop.f32.mrb[0].mxu0
        %2422 = vmatprep.mubr.f32.mxu0 0.0
        %2423 = vmatmul.mubr.f32.gmra.mrb[0].mxu0 %v2207
        %v2424 = vpop.f32.mrb[0].mxu0
        %v2425 = vadd.f32 0.0, %v2424
        %v2426 = vpop.f32.mrb[0].mxu0
        %2427 = vmatprep.mubr.f32.mxu0 0.0
        %2428 = vmatmul.mubr.f32.gmra.mrb[0].mxu0 %v2210
        %v2429 = vpop.f32.mrb[0].mxu0
        %v2430 = vadd.f32 0.0, %v2429
        %v2431 = vpop.f32.mrb[0].mxu0
        %2432 = vmatprep.mubr.f32.mxu0 0.0
        %2433 = vmatmul.mubr.f32.gmra.mrb[0].mxu0 %v2213
        %v2434 = vpop.f32.mrb[0].mxu0
        %v2435 = vadd.f32 0.0, %v2434
        %v2436 = vpop.f32.mrb[0].mxu0
        %2437 = vmatprep.mubr.f32.mxu0 0.0
        %2438 = vmatmul.mubr.f32.gmra.mrb[0].mxu0 %v2216
        %v2439 = vpop.f32.mrb[0].mxu0
        %v2440 = vadd.f32 0.0, %v2439
        %v2441 = vpop.f32.mrb[0].mxu0
        %2442 = vdwg.mxu0
        %v2443 = vadd.f32 %v2056, %v2285
        %v2444 = vadd.f32 %v2057, %v2290
        %v2445 = vadd.f32 %v2058, %v2295
        %v2446 = vadd.f32 %v2059, %v2300
        %v2447 = vadd.f32 %v2060, %v2305
        %v2448 = vadd.f32 %v2061, %v2310
        %v2449 = vadd.f32 %v2062, %v2315
        %v2450 = vadd.f32 %v2063, %v2320
        %v2451 = vadd.f32 %v2064, %v2325
        %v2452 = vadd.f32 %v2065, %v2330
        %v2453 = vadd.f32 %v2066, %v2335
        %v2454 = vadd.f32 %v2067, %v2340
        %v2455 = vadd.f32 %v2068, %v2345
        %v2456 = vadd.f32 %v2069, %v2350
        %v2457 = vadd.f32 %v2070, %v2355
        %v2458 = vadd.f32 %v2071, %v2360
        %v2459 = vadd.f32 %v2072, %v2365
        %v2460 = vadd.f32 %v2073, %v2370
        %v2461 = vadd.f32 %v2074, %v2375
        %v2462 = vadd.f32 %v2075, %v2380
        %v2463 = vadd.f32 %v2076, %v2385
        %v2464 = vadd.f32 %v2077, %v2390
        %v2465 = vadd.f32 %v2078, %v2395
        %v2466 = vadd.f32 %v2079, %v2400
        %v2467 = vadd.f32 %v2080, %v2405
        %v2468 = vadd.f32 %v2081, %v2410
        %v2469 = vadd.f32 %v2082, %v2415
        %v2470 = vadd.f32 %v2083, %v2420
        %v2471 = vadd.f32 %v2084, %v2425
        %v2472 = vadd.f32 %v2085, %v2430
        %v2473 = vadd.f32 %v2086, %v2435
        %v2474 = vadd.f32 %v2087, %v2440
        %s2475 = scalar_lea.vmem %s185, 48 [#allocation2]
        %v2476 = vld [vmem:[%s2475] sm:$0xff]
        %v2477 = vld [vmem:[%s2475 + $0x8] sm:$0xff]
        %v2478 = vld [vmem:[%s2475 + $0x18] sm:$0xff]
        %v2479 = vld [vmem:[%s2475 + $0x20] sm:$0xff]
        %v2480 = vld [vmem:[%s2475 + $0x30] sm:$0xff]
        %v2481 = vld [vmem:[%s2475 + $0x38] sm:$0xff]
        %v2482 = vld [vmem:[%s2475 + $0x48] sm:$0xff]
        %v2483 = vld [vmem:[%s2475 + $0x50] sm:$0xff]
        %v2484 = vld [vmem:[%s2475 + $0x60] sm:$0xff]
        %v2485 = vld [vmem:[%s2475 + $0x68] sm:$0xff]
        %v2486 = vld [vmem:[%s2475 + $0x78] sm:$0xff]
        %v2487 = vld [vmem:[%s2475 + $0x80] sm:$0xff]
        %v2488 = vld [vmem:[%s2475 + $0x90] sm:$0xff]
        %v2489 = vld [vmem:[%s2475 + $0x98] sm:$0xff]
        %v2490 = vld [vmem:[%s2475 + $0xa8] sm:$0xff]
        %v2491 = vld [vmem:[%s2475 + $0xb0] sm:$0xff]
        %v2492 = vld [vmem:[%s2475 + $0xc0] sm:$0xff]
        %v2493 = vld [vmem:[%s2475 + $0xc8] sm:$0xff]
        %v2494 = vld [vmem:[%s2475 + $0xd8] sm:$0xff]
        %v2495 = vld [vmem:[%s2475 + $0xe0] sm:$0xff]
        %v2496 = vld [vmem:[%s2475 + $0xf0] sm:$0xff]
        %v2497 = vld [vmem:[%s2475 + $0xf8] sm:$0xff]
        %v2498 = vld [vmem:[%s2475 + $0x108] sm:$0xff]
        %v2499 = vld [vmem:[%s2475 + $0x110] sm:$0xff]
        %v2500 = vld [vmem:[%s2475 + $0x120] sm:$0xff]
        %v2501 = vld [vmem:[%s2475 + $0x128] sm:$0xff]
        %v2502 = vld [vmem:[%s2475 + $0x138] sm:$0xff]
        %v2503 = vld [vmem:[%s2475 + $0x140] sm:$0xff]
        %v2504 = vld [vmem:[%s2475 + $0x150] sm:$0xff]
        %v2505 = vld [vmem:[%s2475 + $0x158] sm:$0xff]
        %v2506 = vld [vmem:[%s2475 + $0x168] sm:$0xff]
        %v2507 = vld [vmem:[%s2475 + $0x170] sm:$0xff]
        %s2508 = scalar_lea.vmem [#allocation5], 48
        %v2509 = vld [vmem:[%s2508] sm:$0xff]
        %v2511 = vsel %vm283, %v2476, 0
        %v2514 = vsel %vm283, %v2477, 0
        %v2517 = vsel %vm283, %v2478, 0
        %v2520 = vsel %vm283, %v2479, 0
        %v2523 = vsel %vm283, %v2480, 0
        %v2526 = vsel %vm283, %v2481, 0
        %v2529 = vsel %vm283, %v2482, 0
        %v2532 = vsel %vm283, %v2483, 0
        %v2535 = vsel %vm283, %v2484, 0
        %v2538 = vsel %vm283, %v2485, 0
        %v2541 = vsel %vm283, %v2486, 0
        %v2544 = vsel %vm283, %v2487, 0
        %v2547 = vsel %vm283, %v2488, 0
        %v2550 = vsel %vm283, %v2489, 0
        %v2553 = vsel %vm283, %v2490, 0
        %v2556 = vsel %vm283, %v2491, 0
        %v2559 = vsel %vm283, %v2492, 0
        %v2562 = vsel %vm283, %v2493, 0
        %v2565 = vsel %vm283, %v2494, 0
        %v2568 = vsel %vm283, %v2495, 0
        %v2571 = vsel %vm283, %v2496, 0
        %v2574 = vsel %vm283, %v2497, 0
        %v2577 = vsel %vm283, %v2498, 0
        %v2580 = vsel %vm283, %v2499, 0
        %v2583 = vsel %vm283, %v2500, 0
        %v2586 = vsel %vm283, %v2501, 0
        %v2589 = vsel %vm283, %v2502, 0
        %v2592 = vsel %vm283, %v2503, 0
        %v2595 = vsel %vm283, %v2504, 0
        %v2598 = vsel %vm283, %v2505, 0
        %v2601 = vsel %vm283, %v2506, 0
        %v2604 = vsel %vm283, %v2507, 0
        %2606 = vmatprep.subr.mxu0 0.0
        %2607 = vmatpush1.msra.mxu0 %v2509
        %2608 = vmatprep.subr.mxu0 0.0
        %2609 = vmatpush1.msra.mxu0 0.0
        %2610 = vmatprep.subr.mxu0 0.0
        %2611 = vmatpush1.msra.mxu0 0.0
        %2612 = vmatprep.subr.mxu0 0.0
        %2613 = vmatpush1.msra.mxu0 0.0
        %2614 = vmatprep.subr.mxu0 0.0
        %2615 = vmatpush1.msra.mxu0 0.0
        %2616 = vmatprep.subr.mxu0 0.0
        %2617 = vmatpush1.msra.mxu0 0.0
        %2618 = vmatprep.subr.mxu0 0.0
        %2619 = vmatpush1.msra.mxu0 0.0
        %2620 = vmatprep.subr.mxu0 0.0
        %2621 = vmatpush1.msra.mxu0 0.0
        %2622 = vmatprep.subr.mxu0 0.0
        %2623 = vmatpush1.msra.mxu0 0.0
        %2624 = vmatprep.subr.mxu0 0.0
        %2625 = vmatpush1.msra.mxu0 0.0
        %2626 = vmatprep.subr.mxu0 0.0
        %2627 = vmatpush1.msra.mxu0 0.0
        %2628 = vmatprep.subr.mxu0 0.0
        %2629 = vmatpush1.msra.mxu0 0.0
        %2630 = vmatprep.subr.mxu0 0.0
        %2631 = vmatpush1.msra.mxu0 0.0
        %2632 = vmatprep.subr.mxu0 0.0
        %2633 = vmatpush1.msra.mxu0 0.0
        %2634 = vmatprep.subr.mxu0 0.0
        %2635 = vmatpush1.msra.mxu0 0.0
        %2636 = vmatprep.subr.mxu0 0.0
        %2637 = vmatpush1.msra.mxu0 0.0
        %2638 = vmatprep.subr.mxu0 0.0
        %2639 = vmatpush1.msra.mxu0 0.0
        %2640 = vmatprep.subr.mxu0 0.0
        %2641 = vmatpush1.msra.mxu0 0.0
        %2642 = vmatprep.subr.mxu0 0.0
        %2643 = vmatpush1.msra.mxu0 0.0
        %2644 = vmatprep.subr.mxu0 0.0
        %2645 = vmatpush1.msra.mxu0 0.0
        %2646 = vmatprep.subr.mxu0 0.0
        %2647 = vmatpush1.msra.mxu0 0.0
        %2648 = vmatprep.subr.mxu0 0.0
        %2649 = vmatpush1.msra.mxu0 0.0
        %2650 = vmatprep.subr.mxu0 0.0
        %2651 = vmatpush1.msra.mxu0 0.0
        %2652 = vmatprep.subr.mxu0 0.0
        %2653 = vmatpush1.msra.mxu0 0.0
        %2654 = vmatprep.subr.mxu0 0.0
        %2655 = vmatpush1.msra.mxu0 0.0
        %2656 = vmatprep.subr.mxu0 0.0
        %2657 = vmatpush1.msra.mxu0 0.0
        %2658 = vmatprep.subr.mxu0 0.0
        %2659 = vmatpush1.msra.mxu0 0.0
        %2660 = vmatprep.subr.mxu0 0.0
        %2661 = vmatpush1.msra.mxu0 0.0
        %2662 = vmatprep.subr.mxu0 0.0
        %2663 = vmatpush1.msra.mxu0 0.0
        %2664 = vmatprep.subr.mxu0 0.0
        %2665 = vmatpush1.msra.mxu0 0.0
        %2666 = vmatprep.subr.mxu0 0.0
        %2667 = vmatpush1.msra.mxu0 0.0
        %2668 = vmatprep.subr.mxu0 0.0
        %2669 = vmatpush1.msra.mxu0 0.0
        %2670 = vmatprep.mubr.f32.mxu0 0.0
        %2671 = vmatmul.mubr.f32.gmra.mrb[0].mxu0 %v2511
        %v2672 = vpop.f32.mrb[0].mxu0
        %v2673 = vadd.f32 0.0, %v2672
        %v2674 = vpop.f32.mrb[0].mxu0
        %2675 = vmatprep.mubr.f32.mxu0 0.0
        %2676 = vmatmul.mubr.f32.gmra.mrb[0].mxu0 %v2514
        %v2677 = vpop.f32.mrb[0].mxu0
        %v2678 = vadd.f32 0.0, %v2677
        %v2679 = vpop.f32.mrb[0].mxu0
        %2680 = vmatprep.mubr.f32.mxu0 0.0
        %2681 = vmatmul.mubr.f32.gmra.mrb[0].mxu0 %v2517
        %v2682 = vpop.f32.mrb[0].mxu0
        %v2683 = vadd.f32 0.0, %v2682
        %v2684 = vpop.f32.mrb[0].mxu0
        %2685 = vmatprep.mubr.f32.mxu0 0.0
        %2686 = vmatmul.mubr.f32.gmra.mrb[0].mxu0 %v2520
        %v2687 = vpop.f32.mrb[0].mxu0
        %v2688 = vadd.f32 0.0, %v2687
        %v2689 = vpop.f32.mrb[0].mxu0
        %2690 = vmatprep.mubr.f32.mxu0 0.0
        %2691 = vmatmul.mubr.f32.gmra.mrb[0].mxu0 %v2523
        %v2692 = vpop.f32.mrb[0].mxu0
        %v2693 = vadd.f32 0.0, %v2692
        %v2694 = vpop.f32.mrb[0].mxu0
        %2695 = vmatprep.mubr.f32.mxu0 0.0
        %2696 = vmatmul.mubr.f32.gmra.mrb[0].mxu0 %v2526
        %v2697 = vpop.f32.mrb[0].mxu0
        %v2698 = vadd.f32 0.0, %v2697
        %v2699 = vpop.f32.mrb[0].mxu0
        %2700 = vmatprep.mubr.f32.mxu0 0.0
        %2701 = vmatmul.mubr.f32.gmra.mrb[0].mxu0 %v2529
        %v2702 = vpop.f32.mrb[0].mxu0
        %v2703 = vadd.f32 0.0, %v2702
        %v2704 = vpop.f32.mrb[0].mxu0
        %2705 = vmatprep.mubr.f32.mxu0 0.0
        %2706 = vmatmul.mubr.f32.gmra.mrb[0].mxu0 %v2532
        %v2707 = vpop.f32.mrb[0].mxu0
        %v2708 = vadd.f32 0.0, %v2707
        %v2709 = vpop.f32.mrb[0].mxu0
        %2710 = vmatprep.mubr.f32.mxu0 0.0
        %2711 = vmatmul.mubr.f32.gmra.mrb[0].mxu0 %v2535
        %v2712 = vpop.f32.mrb[0].mxu0
        %v2713 = vadd.f32 0.0, %v2712
        %v2714 = vpop.f32.mrb[0].mxu0
        %2715 = vmatprep.mubr.f32.mxu0 0.0
        %2716 = vmatmul.mubr.f32.gmra.mrb[0].mxu0 %v2538
        %v2717 = vpop.f32.mrb[0].mxu0
        %v2718 = vadd.f32 0.0, %v2717
        %v2719 = vpop.f32.mrb[0].mxu0
        %2720 = vmatprep.mubr.f32.mxu0 0.0
        %2721 = vmatmul.mubr.f32.gmra.mrb[0].mxu0 %v2541
        %v2722 = vpop.f32.mrb[0].mxu0
        %v2723 = vadd.f32 0.0, %v2722
        %v2724 = vpop.f32.mrb[0].mxu0
        %2725 = vmatprep.mubr.f32.mxu0 0.0
        %2726 = vmatmul.mubr.f32.gmra.mrb[0].mxu0 %v2544
        %v2727 = vpop.f32.mrb[0].mxu0
        %v2728 = vadd.f32 0.0, %v2727
        %v2729 = vpop.f32.mrb[0].mxu0
        %2730 = vmatprep.mubr.f32.mxu0 0.0
        %2731 = vmatmul.mubr.f32.gmra.mrb[0].mxu0 %v2547
        %v2732 = vpop.f32.mrb[0].mxu0
        %v2733 = vadd.f32 0.0, %v2732
        %v2734 = vpop.f32.mrb[0].mxu0
        %2735 = vmatprep.mubr.f32.mxu0 0.0
        %2736 = vmatmul.mubr.f32.gmra.mrb[0].mxu0 %v2550
        %v2737 = vpop.f32.mrb[0].mxu0
        %v2738 = vadd.f32 0.0, %v2737
        %v2739 = vpop.f32.mrb[0].mxu0
        %2740 = vmatprep.mubr.f32.mxu0 0.0
        %2741 = vmatmul.mubr.f32.gmra.mrb[0].mxu0 %v2553
        %v2742 = vpop.f32.mrb[0].mxu0
        %v2743 = vadd.f32 0.0, %v2742
        %v2744 = vpop.f32.mrb[0].mxu0
        %2745 = vmatprep.mubr.f32.mxu0 0.0
        %2746 = vmatmul.mubr.f32.gmra.mrb[0].mxu0 %v2556
        %v2747 = vpop.f32.mrb[0].mxu0
        %v2748 = vadd.f32 0.0, %v2747
        %v2749 = vpop.f32.mrb[0].mxu0
        %2750 = vmatprep.mubr.f32.mxu0 0.0
        %2751 = vmatmul.mubr.f32.gmra.mrb[0].mxu0 %v2559
        %v2752 = vpop.f32.mrb[0].mxu0
        %v2753 = vadd.f32 0.0, %v2752
        %v2754 = vpop.f32.mrb[0].mxu0
        %2755 = vmatprep.mubr.f32.mxu0 0.0
        %2756 = vmatmul.mubr.f32.gmra.mrb[0].mxu0 %v2562
        %v2757 = vpop.f32.mrb[0].mxu0
        %v2758 = vadd.f32 0.0, %v2757
        %v2759 = vpop.f32.mrb[0].mxu0
        %2760 = vmatprep.mubr.f32.mxu0 0.0
        %2761 = vmatmul.mubr.f32.gmra.mrb[0].mxu0 %v2565
        %v2762 = vpop.f32.mrb[0].mxu0
        %v2763 = vadd.f32 0.0, %v2762
        %v2764 = vpop.f32.mrb[0].mxu0
        %2765 = vmatprep.mubr.f32.mxu0 0.0
        %2766 = vmatmul.mubr.f32.gmra.mrb[0].mxu0 %v2568
        %v2767 = vpop.f32.mrb[0].mxu0
        %v2768 = vadd.f32 0.0, %v2767
        %v2769 = vpop.f32.mrb[0].mxu0
        %2770 = vmatprep.mubr.f32.mxu0 0.0
        %2771 = vmatmul.mubr.f32.gmra.mrb[0].mxu0 %v2571
        %v2772 = vpop.f32.mrb[0].mxu0
        %v2773 = vadd.f32 0.0, %v2772
        %v2774 = vpop.f32.mrb[0].mxu0
        %2775 = vmatprep.mubr.f32.mxu0 0.0
        %2776 = vmatmul.mubr.f32.gmra.mrb[0].mxu0 %v2574
        %v2777 = vpop.f32.mrb[0].mxu0
        %v2778 = vadd.f32 0.0, %v2777
        %v2779 = vpop.f32.mrb[0].mxu0
        %2780 = vmatprep.mubr.f32.mxu0 0.0
        %2781 = vmatmul.mubr.f32.gmra.mrb[0].mxu0 %v2577
        %v2782 = vpop.f32.mrb[0].mxu0
        %v2783 = vadd.f32 0.0, %v2782
        %v2784 = vpop.f32.mrb[0].mxu0
        %2785 = vmatprep.mubr.f32.mxu0 0.0
        %2786 = vmatmul.mubr.f32.gmra.mrb[0].mxu0 %v2580
        %v2787 = vpop.f32.mrb[0].mxu0
        %v2788 = vadd.f32 0.0, %v2787
        %v2789 = vpop.f32.mrb[0].mxu0
        %2790 = vmatprep.mubr.f32.mxu0 0.0
        %2791 = vmatmul.mubr.f32.gmra.mrb[0].mxu0 %v2583
        %v2792 = vpop.f32.mrb[0].mxu0
        %v2793 = vadd.f32 0.0, %v2792
        %v2794 = vpop.f32.mrb[0].mxu0
        %2795 = vmatprep.mubr.f32.mxu0 0.0
        %2796 = vmatmul.mubr.f32.gmra.mrb[0].mxu0 %v2586
        %v2797 = vpop.f32.mrb[0].mxu0
        %v2798 = vadd.f32 0.0, %v2797
        %v2799 = vpop.f32.mrb[0].mxu0
        %2800 = vmatprep.mubr.f32.mxu0 0.0
        %2801 = vmatmul.mubr.f32.gmra.mrb[0].mxu0 %v2589
        %v2802 = vpop.f32.mrb[0].mxu0
        %v2803 = vadd.f32 0.0, %v2802
        %v2804 = vpop.f32.mrb[0].mxu0
        %2805 = vmatprep.mubr.f32.mxu0 0.0
        %2806 = vmatmul.mubr.f32.gmra.mrb[0].mxu0 %v2592
        %v2807 = vpop.f32.mrb[0].mxu0
        %v2808 = vadd.f32 0.0, %v2807
        %v2809 = vpop.f32.mrb[0].mxu0
        %2810 = vmatprep.mubr.f32.mxu0 0.0
        %2811 = vmatmul.mubr.f32.gmra.mrb[0].mxu0 %v2595
        %v2812 = vpop.f32.mrb[0].mxu0
        %v2813 = vadd.f32 0.0, %v2812
        %v2814 = vpop.f32.mrb[0].mxu0
        %2815 = vmatprep.mubr.f32.mxu0 0.0
        %2816 = vmatmul.mubr.f32.gmra.mrb[0].mxu0 %v2598
        %v2817 = vpop.f32.mrb[0].mxu0
        %v2818 = vadd.f32 0.0, %v2817
        %v2819 = vpop.f32.mrb[0].mxu0
        %2820 = vmatprep.mubr.f32.mxu0 0.0
        %2821 = vmatmul.mubr.f32.gmra.mrb[0].mxu0 %v2601
        %v2822 = vpop.f32.mrb[0].mxu0
        %v2823 = vadd.f32 0.0, %v2822
        %v2824 = vpop.f32.mrb[0].mxu0
        %2825 = vmatprep.mubr.f32.mxu0 0.0
        %2826 = vmatmul.mubr.f32.gmra.mrb[0].mxu0 %v2604
        %v2827 = vpop.f32.mrb[0].mxu0
        %v2828 = vadd.f32 0.0, %v2827
        %v2829 = vpop.f32.mrb[0].mxu0
        %2830 = vdwg.mxu0
        %v2831 = vadd.f32 %v2443, %v2673
        %v2832 = vadd.f32 %v2444, %v2678
        %v2833 = vadd.f32 %v2445, %v2683
        %v2834 = vadd.f32 %v2446, %v2688
        %v2835 = vadd.f32 %v2447, %v2693
        %v2836 = vadd.f32 %v2448, %v2698
        %v2837 = vadd.f32 %v2449, %v2703
        %v2838 = vadd.f32 %v2450, %v2708
        %v2839 = vadd.f32 %v2451, %v2713
        %v2840 = vadd.f32 %v2452, %v2718
        %v2841 = vadd.f32 %v2453, %v2723
        %v2842 = vadd.f32 %v2454, %v2728
        %v2843 = vadd.f32 %v2455, %v2733
        %v2844 = vadd.f32 %v2456, %v2738
        %v2845 = vadd.f32 %v2457, %v2743
        %v2846 = vadd.f32 %v2458, %v2748
        %v2847 = vadd.f32 %v2459, %v2753
        %v2848 = vadd.f32 %v2460, %v2758
        %v2849 = vadd.f32 %v2461, %v2763
        %v2850 = vadd.f32 %v2462, %v2768
        %v2851 = vadd.f32 %v2463, %v2773
        %v2852 = vadd.f32 %v2464, %v2778
        %v2853 = vadd.f32 %v2465, %v2783
        %v2854 = vadd.f32 %v2466, %v2788
        %v2855 = vadd.f32 %v2467, %v2793
        %v2856 = vadd.f32 %v2468, %v2798
        %v2857 = vadd.f32 %v2469, %v2803
        %v2858 = vadd.f32 %v2470, %v2808
        %v2859 = vadd.f32 %v2471, %v2813
        %v2860 = vadd.f32 %v2472, %v2818
        %v2861 = vadd.f32 %v2473, %v2823
        %v2862 = vadd.f32 %v2474, %v2828
        %v2863 = vld [vmem:[%s2475 + $0x1] sm:$0xff]
        %v2864 = vld [vmem:[%s2475 + $0x9] sm:$0xff]
        %v2865 = vld [vmem:[%s2475 + $0x19] sm:$0xff]
        %v2866 = vld [vmem:[%s2475 + $0x21] sm:$0xff]
        %v2867 = vld [vmem:[%s2475 + $0x31] sm:$0xff]
        %v2868 = vld [vmem:[%s2475 + $0x39] sm:$0xff]
        %v2869 = vld [vmem:[%s2475 + $0x49] sm:$0xff]
        %v2870 = vld [vmem:[%s2475 + $0x51] sm:$0xff]
        %v2871 = vld [vmem:[%s2475 + $0x61] sm:$0xff]
        %v2872 = vld [vmem:[%s2475 + $0x69] sm:$0xff]
        %v2873 = vld [vmem:[%s2475 + $0x79] sm:$0xff]
        %v2874 = vld [vmem:[%s2475 + $0x81] sm:$0xff]
        %v2875 = vld [vmem:[%s2475 + $0x91] sm:$0xff]
        %v2876 = vld [vmem:[%s2475 + $0x99] sm:$0xff]
        %v2877 = vld [vmem:[%s2475 + $0xa9] sm:$0xff]
        %v2878 = vld [vmem:[%s2475 + $0xb1] sm:$0xff]
        %v2879 = vld [vmem:[%s2475 + $0xc1] sm:$0xff]
        %v2880 = vld [vmem:[%s2475 + $0xc9] sm:$0xff]
        %v2881 = vld [vmem:[%s2475 + $0xd9] sm:$0xff]
        %v2882 = vld [vmem:[%s2475 + $0xe1] sm:$0xff]
        %v2883 = vld [vmem:[%s2475 + $0xf1] sm:$0xff]
        %v2884 = vld [vmem:[%s2475 + $0xf9] sm:$0xff]
        %v2885 = vld [vmem:[%s2475 + $0x109] sm:$0xff]
        %v2886 = vld [vmem:[%s2475 + $0x111] sm:$0xff]
        %v2887 = vld [vmem:[%s2475 + $0x121] sm:$0xff]
        %v2888 = vld [vmem:[%s2475 + $0x129] sm:$0xff]
        %v2889 = vld [vmem:[%s2475 + $0x139] sm:$0xff]
        %v2890 = vld [vmem:[%s2475 + $0x141] sm:$0xff]
        %v2891 = vld [vmem:[%s2475 + $0x151] sm:$0xff]
        %v2892 = vld [vmem:[%s2475 + $0x159] sm:$0xff]
        %v2893 = vld [vmem:[%s2475 + $0x169] sm:$0xff]
        %v2894 = vld [vmem:[%s2475 + $0x171] sm:$0xff]
        %s2895 = scalar_lea.vmem [#allocation5], 56
        %v2896 = vld [vmem:[%s2895] sm:$0xff]
        %v2898 = vsel %vm283, %v2863, 0
        %v2901 = vsel %vm283, %v2864, 0
        %v2904 = vsel %vm283, %v2865, 0
        %v2907 = vsel %vm283, %v2866, 0
        %v2910 = vsel %vm283, %v2867, 0
        %v2913 = vsel %vm283, %v2868, 0
        %v2916 = vsel %vm283, %v2869, 0
        %v2919 = vsel %vm283, %v2870, 0
        %v2922 = vsel %vm283, %v2871, 0
        %v2925 = vsel %vm283, %v2872, 0
        %v2928 = vsel %vm283, %v2873, 0
        %v2931 = vsel %vm283, %v2874, 0
        %v2934 = vsel %vm283, %v2875, 0
        %v2937 = vsel %vm283, %v2876, 0
        %v2940 = vsel %vm283, %v2877, 0
        %v2943 = vsel %vm283, %v2878, 0
        %v2946 = vsel %vm283, %v2879, 0
        %v2949 = vsel %vm283, %v2880, 0
        %v2952 = vsel %vm283, %v2881, 0
        %v2955 = vsel %vm283, %v2882, 0
        %v2958 = vsel %vm283, %v2883, 0
        %v2961 = vsel %vm283, %v2884, 0
        %v2964 = vsel %vm283, %v2885, 0
        %v2967 = vsel %vm283, %v2886, 0
        %v2970 = vsel %vm283, %v2887, 0
        %v2973 = vsel %vm283, %v2888, 0
        %v2976 = vsel %vm283, %v2889, 0
        %v2979 = vsel %vm283, %v2890, 0
        %v2982 = vsel %vm283, %v2891, 0
        %v2985 = vsel %vm283, %v2892, 0
        %v2988 = vsel %vm283, %v2893, 0
        %v2991 = vsel %vm283, %v2894, 0
        %2993 = vmatprep.subr.mxu0 0.0
        %2994 = vmatpush1.msra.mxu0 %v2896
        %2995 = vmatprep.subr.mxu0 0.0
        %2996 = vmatpush1.msra.mxu0 0.0
        %2997 = vmatprep.subr.mxu0 0.0
        %2998 = vmatpush1.msra.mxu0 0.0
        %2999 = vmatprep.subr.mxu0 0.0
        %3000 = vmatpush1.msra.mxu0 0.0
        %3001 = vmatprep.subr.mxu0 0.0
        %3002 = vmatpush1.msra.mxu0 0.0
        %3003 = vmatprep.subr.mxu0 0.0
        %3004 = vmatpush1.msra.mxu0 0.0
        %3005 = vmatprep.subr.mxu0 0.0
        %3006 = vmatpush1.msra.mxu0 0.0
        %3007 = vmatprep.subr.mxu0 0.0
        %3008 = vmatpush1.msra.mxu0 0.0
        %3009 = vmatprep.subr.mxu0 0.0
        %3010 = vmatpush1.msra.mxu0 0.0
        %3011 = vmatprep.subr.mxu0 0.0
        %3012 = vmatpush1.msra.mxu0 0.0
        %3013 = vmatprep.subr.mxu0 0.0
        %3014 = vmatpush1.msra.mxu0 0.0
        %3015 = vmatprep.subr.mxu0 0.0
        %3016 = vmatpush1.msra.mxu0 0.0
        %3017 = vmatprep.subr.mxu0 0.0
        %3018 = vmatpush1.msra.mxu0 0.0
        %3019 = vmatprep.subr.mxu0 0.0
        %3020 = vmatpush1.msra.mxu0 0.0
        %3021 = vmatprep.subr.mxu0 0.0
        %3022 = vmatpush1.msra.mxu0 0.0
        %3023 = vmatprep.subr.mxu0 0.0
        %3024 = vmatpush1.msra.mxu0 0.0
        %3025 = vmatprep.subr.mxu0 0.0
        %3026 = vmatpush1.msra.mxu0 0.0
        %3027 = vmatprep.subr.mxu0 0.0
        %3028 = vmatpush1.msra.mxu0 0.0
        %3029 = vmatprep.subr.mxu0 0.0
        %3030 = vmatpush1.msra.mxu0 0.0
        %3031 = vmatprep.subr.mxu0 0.0
        %3032 = vmatpush1.msra.mxu0 0.0
        %3033 = vmatprep.subr.mxu0 0.0
        %3034 = vmatpush1.msra.mxu0 0.0
        %3035 = vmatprep.subr.mxu0 0.0
        %3036 = vmatpush1.msra.mxu0 0.0
        %3037 = vmatprep.subr.mxu0 0.0
        %3038 = vmatpush1.msra.mxu0 0.0
        %3039 = vmatprep.subr.mxu0 0.0
        %3040 = vmatpush1.msra.mxu0 0.0
        %3041 = vmatprep.subr.mxu0 0.0
        %3042 = vmatpush1.msra.mxu0 0.0
        %3043 = vmatprep.subr.mxu0 0.0
        %3044 = vmatpush1.msra.mxu0 0.0
        %3045 = vmatprep.subr.mxu0 0.0
        %3046 = vmatpush1.msra.mxu0 0.0
        %3047 = vmatprep.subr.mxu0 0.0
        %3048 = vmatpush1.msra.mxu0 0.0
        %3049 = vmatprep.subr.mxu0 0.0
        %3050 = vmatpush1.msra.mxu0 0.0
        %3051 = vmatprep.subr.mxu0 0.0
        %3052 = vmatpush1.msra.mxu0 0.0
        %3053 = vmatprep.subr.mxu0 0.0
        %3054 = vmatpush1.msra.mxu0 0.0
        %3055 = vmatprep.subr.mxu0 0.0
        %3056 = vmatpush1.msra.mxu0 0.0
        %3057 = vmatprep.mubr.f32.mxu0 0.0
        %3058 = vmatmul.mubr.f32.gmra.mrb[0].mxu0 %v2898
        %v3059 = vpop.f32.mrb[0].mxu0
        %v3060 = vadd.f32 0.0, %v3059
        %v3061 = vpop.f32.mrb[0].mxu0
        %3062 = vmatprep.mubr.f32.mxu0 0.0
        %3063 = vmatmul.mubr.f32.gmra.mrb[0].mxu0 %v2901
        %v3064 = vpop.f32.mrb[0].mxu0
        %v3065 = vadd.f32 0.0, %v3064
        %v3066 = vpop.f32.mrb[0].mxu0
        %3067 = vmatprep.mubr.f32.mxu0 0.0
        %3068 = vmatmul.mubr.f32.gmra.mrb[0].mxu0 %v2904
        %v3069 = vpop.f32.mrb[0].mxu0
        %v3070 = vadd.f32 0.0, %v3069
        %v3071 = vpop.f32.mrb[0].mxu0
        %3072 = vmatprep.mubr.f32.mxu0 0.0
        %3073 = vmatmul.mubr.f32.gmra.mrb[0].mxu0 %v2907
        %v3074 = vpop.f32.mrb[0].mxu0
        %v3075 = vadd.f32 0.0, %v3074
        %v3076 = vpop.f32.mrb[0].mxu0
        %3077 = vmatprep.mubr.f32.mxu0 0.0
        %3078 = vmatmul.mubr.f32.gmra.mrb[0].mxu0 %v2910
        %v3079 = vpop.f32.mrb[0].mxu0
        %v3080 = vadd.f32 0.0, %v3079
        %v3081 = vpop.f32.mrb[0].mxu0
        %3082 = vmatprep.mubr.f32.mxu0 0.0
        %3083 = vmatmul.mubr.f32.gmra.mrb[0].mxu0 %v2913
        %v3084 = vpop.f32.mrb[0].mxu0
        %v3085 = vadd.f32 0.0, %v3084
        %v3086 = vpop.f32.mrb[0].mxu0
        %3087 = vmatprep.mubr.f32.mxu0 0.0
        %3088 = vmatmul.mubr.f32.gmra.mrb[0].mxu0 %v2916
        %v3089 = vpop.f32.mrb[0].mxu0
        %v3090 = vadd.f32 0.0, %v3089
        %v3091 = vpop.f32.mrb[0].mxu0
        %3092 = vmatprep.mubr.f32.mxu0 0.0
        %3093 = vmatmul.mubr.f32.gmra.mrb[0].mxu0 %v2919
        %v3094 = vpop.f32.mrb[0].mxu0
        %v3095 = vadd.f32 0.0, %v3094
        %v3096 = vpop.f32.mrb[0].mxu0
        %3097 = vmatprep.mubr.f32.mxu0 0.0
        %3098 = vmatmul.mubr.f32.gmra.mrb[0].mxu0 %v2922
        %v3099 = vpop.f32.mrb[0].mxu0
        %v3100 = vadd.f32 0.0, %v3099
        %v3101 = vpop.f32.mrb[0].mxu0
        %3102 = vmatprep.mubr.f32.mxu0 0.0
        %3103 = vmatmul.mubr.f32.gmra.mrb[0].mxu0 %v2925
        %v3104 = vpop.f32.mrb[0].mxu0
        %v3105 = vadd.f32 0.0, %v3104
        %v3106 = vpop.f32.mrb[0].mxu0
        %3107 = vmatprep.mubr.f32.mxu0 0.0
        %3108 = vmatmul.mubr.f32.gmra.mrb[0].mxu0 %v2928
        %v3109 = vpop.f32.mrb[0].mxu0
        %v3110 = vadd.f32 0.0, %v3109
        %v3111 = vpop.f32.mrb[0].mxu0
        %3112 = vmatprep.mubr.f32.mxu0 0.0
        %3113 = vmatmul.mubr.f32.gmra.mrb[0].mxu0 %v2931
        %v3114 = vpop.f32.mrb[0].mxu0
        %v3115 = vadd.f32 0.0, %v3114
        %v3116 = vpop.f32.mrb[0].mxu0
        %3117 = vmatprep.mubr.f32.mxu0 0.0
        %3118 = vmatmul.mubr.f32.gmra.mrb[0].mxu0 %v2934
        %v3119 = vpop.f32.mrb[0].mxu0
        %v3120 = vadd.f32 0.0, %v3119
        %v3121 = vpop.f32.mrb[0].mxu0
        %3122 = vmatprep.mubr.f32.mxu0 0.0
        %3123 = vmatmul.mubr.f32.gmra.mrb[0].mxu0 %v2937
        %v3124 = vpop.f32.mrb[0].mxu0
        %v3125 = vadd.f32 0.0, %v3124
        %v3126 = vpop.f32.mrb[0].mxu0
        %3127 = vmatprep.mubr.f32.mxu0 0.0
        %3128 = vmatmul.mubr.f32.gmra.mrb[0].mxu0 %v2940
        %v3129 = vpop.f32.mrb[0].mxu0
        %v3130 = vadd.f32 0.0, %v3129
        %v3131 = vpop.f32.mrb[0].mxu0
        %3132 = vmatprep.mubr.f32.mxu0 0.0
        %3133 = vmatmul.mubr.f32.gmra.mrb[0].mxu0 %v2943
        %v3134 = vpop.f32.mrb[0].mxu0
        %v3135 = vadd.f32 0.0, %v3134
        %v3136 = vpop.f32.mrb[0].mxu0
        %3137 = vmatprep.mubr.f32.mxu0 0.0
        %3138 = vmatmul.mubr.f32.gmra.mrb[0].mxu0 %v2946
        %v3139 = vpop.f32.mrb[0].mxu0
        %v3140 = vadd.f32 0.0, %v3139
        %v3141 = vpop.f32.mrb[0].mxu0
        %3142 = vmatprep.mubr.f32.mxu0 0.0
        %3143 = vmatmul.mubr.f32.gmra.mrb[0].mxu0 %v2949
        %v3144 = vpop.f32.mrb[0].mxu0
        %v3145 = vadd.f32 0.0, %v3144
        %v3146 = vpop.f32.mrb[0].mxu0
        %3147 = vmatprep.mubr.f32.mxu0 0.0
        %3148 = vmatmul.mubr.f32.gmra.mrb[0].mxu0 %v2952
        %v3149 = vpop.f32.mrb[0].mxu0
        %v3150 = vadd.f32 0.0, %v3149
        %v3151 = vpop.f32.mrb[0].mxu0
        %3152 = vmatprep.mubr.f32.mxu0 0.0
        %3153 = vmatmul.mubr.f32.gmra.mrb[0].mxu0 %v2955
        %v3154 = vpop.f32.mrb[0].mxu0
        %v3155 = vadd.f32 0.0, %v3154
        %v3156 = vpop.f32.mrb[0].mxu0
        %3157 = vmatprep.mubr.f32.mxu0 0.0
        %3158 = vmatmul.mubr.f32.gmra.mrb[0].mxu0 %v2958
        %v3159 = vpop.f32.mrb[0].mxu0
        %v3160 = vadd.f32 0.0, %v3159
        %v3161 = vpop.f32.mrb[0].mxu0
        %3162 = vmatprep.mubr.f32.mxu0 0.0
        %3163 = vmatmul.mubr.f32.gmra.mrb[0].mxu0 %v2961
        %v3164 = vpop.f32.mrb[0].mxu0
        %v3165 = vadd.f32 0.0, %v3164
        %v3166 = vpop.f32.mrb[0].mxu0
        %3167 = vmatprep.mubr.f32.mxu0 0.0
        %3168 = vmatmul.mubr.f32.gmra.mrb[0].mxu0 %v2964
        %v3169 = vpop.f32.mrb[0].mxu0
        %v3170 = vadd.f32 0.0, %v3169
        %v3171 = vpop.f32.mrb[0].mxu0
        %3172 = vmatprep.mubr.f32.mxu0 0.0
        %3173 = vmatmul.mubr.f32.gmra.mrb[0].mxu0 %v2967
        %v3174 = vpop.f32.mrb[0].mxu0
        %v3175 = vadd.f32 0.0, %v3174
        %v3176 = vpop.f32.mrb[0].mxu0
        %3177 = vmatprep.mubr.f32.mxu0 0.0
        %3178 = vmatmul.mubr.f32.gmra.mrb[0].mxu0 %v2970
        %v3179 = vpop.f32.mrb[0].mxu0
        %v3180 = vadd.f32 0.0, %v3179
        %v3181 = vpop.f32.mrb[0].mxu0
        %3182 = vmatprep.mubr.f32.mxu0 0.0
        %3183 = vmatmul.mubr.f32.gmra.mrb[0].mxu0 %v2973
        %v3184 = vpop.f32.mrb[0].mxu0
        %v3185 = vadd.f32 0.0, %v3184
        %v3186 = vpop.f32.mrb[0].mxu0
        %3187 = vmatprep.mubr.f32.mxu0 0.0
        %3188 = vmatmul.mubr.f32.gmra.mrb[0].mxu0 %v2976
        %v3189 = vpop.f32.mrb[0].mxu0
        %v3190 = vadd.f32 0.0, %v3189
        %v3191 = vpop.f32.mrb[0].mxu0
        %3192 = vmatprep.mubr.f32.mxu0 0.0
        %3193 = vmatmul.mubr.f32.gmra.mrb[0].mxu0 %v2979
        %v3194 = vpop.f32.mrb[0].mxu0
        %v3195 = vadd.f32 0.0, %v3194
        %v3196 = vpop.f32.mrb[0].mxu0
        %3197 = vmatprep.mubr.f32.mxu0 0.0
        %3198 = vmatmul.mubr.f32.gmra.mrb[0].mxu0 %v2982
        %v3199 = vpop.f32.mrb[0].mxu0
        %v3200 = vadd.f32 0.0, %v3199
        %v3201 = vpop.f32.mrb[0].mxu0
        %3202 = vmatprep.mubr.f32.mxu0 0.0
        %3203 = vmatmul.mubr.f32.gmra.mrb[0].mxu0 %v2985
        %v3204 = vpop.f32.mrb[0].mxu0
        %v3205 = vadd.f32 0.0, %v3204
        %v3206 = vpop.f32.mrb[0].mxu0
        %3207 = vmatprep.mubr.f32.mxu0 0.0
        %3208 = vmatmul.mubr.f32.gmra.mrb[0].mxu0 %v2988
        %v3209 = vpop.f32.mrb[0].mxu0
        %v3210 = vadd.f32 0.0, %v3209
        %v3211 = vpop.f32.mrb[0].mxu0
        %3212 = vmatprep.mubr.f32.mxu0 0.0
        %3213 = vmatmul.mubr.f32.gmra.mrb[0].mxu0 %v2991
        %v3214 = vpop.f32.mrb[0].mxu0
        %v3215 = vadd.f32 0.0, %v3214
        %v3216 = vpop.f32.mrb[0].mxu0
        %3217 = vdwg.mxu0
        %v3218 = vadd.f32 %v2831, %v3060
        %v3219 = vadd.f32 %v2832, %v3065
        %v3220 = vadd.f32 %v2833, %v3070
        %v3221 = vadd.f32 %v2834, %v3075
        %v3222 = vadd.f32 %v2835, %v3080
        %v3223 = vadd.f32 %v2836, %v3085
        %v3224 = vadd.f32 %v2837, %v3090
        %v3225 = vadd.f32 %v2838, %v3095
        %v3226 = vadd.f32 %v2839, %v3100
        %v3227 = vadd.f32 %v2840, %v3105
        %v3228 = vadd.f32 %v2841, %v3110
        %v3229 = vadd.f32 %v2842, %v3115
        %v3230 = vadd.f32 %v2843, %v3120
        %v3231 = vadd.f32 %v2844, %v3125
        %v3232 = vadd.f32 %v2845, %v3130
        %v3233 = vadd.f32 %v2846, %v3135
        %v3234 = vadd.f32 %v2847, %v3140
        %v3235 = vadd.f32 %v2848, %v3145
        %v3236 = vadd.f32 %v2849, %v3150
        %v3237 = vadd.f32 %v2850, %v3155
        %v3238 = vadd.f32 %v2851, %v3160
        %v3239 = vadd.f32 %v2852, %v3165
        %v3240 = vadd.f32 %v2853, %v3170
        %v3241 = vadd.f32 %v2854, %v3175
        %v3242 = vadd.f32 %v2855, %v3180
        %v3243 = vadd.f32 %v2856, %v3185
        %v3244 = vadd.f32 %v2857, %v3190
        %v3245 = vadd.f32 %v2858, %v3195
        %v3246 = vadd.f32 %v2859, %v3200
        %v3247 = vadd.f32 %v2860, %v3205
        %v3248 = vadd.f32 %v2861, %v3210
        %v3249 = vadd.f32 %v2862, %v3215
        %v3250 = vld [vmem:[%s2475 + $0x2] sm:$0xff]
        %v3251 = vld [vmem:[%s2475 + $0xa] sm:$0xff]
        %v3252 = vld [vmem:[%s2475 + $0x1a] sm:$0xff]
        %v3253 = vld [vmem:[%s2475 + $0x22] sm:$0xff]
        %v3254 = vld [vmem:[%s2475 + $0x32] sm:$0xff]
        %v3255 = vld [vmem:[%s2475 + $0x3a] sm:$0xff]
        %v3256 = vld [vmem:[%s2475 + $0x4a] sm:$0xff]
        %v3257 = vld [vmem:[%s2475 + $0x52] sm:$0xff]
        %v3258 = vld [vmem:[%s2475 + $0x62] sm:$0xff]
        %v3259 = vld [vmem:[%s2475 + $0x6a] sm:$0xff]
        %v3260 = vld [vmem:[%s2475 + $0x7a] sm:$0xff]
        %v3261 = vld [vmem:[%s2475 + $0x82] sm:$0xff]
        %v3262 = vld [vmem:[%s2475 + $0x92] sm:$0xff]
        %v3263 = vld [vmem:[%s2475 + $0x9a] sm:$0xff]
        %v3264 = vld [vmem:[%s2475 + $0xaa] sm:$0xff]
        %v3265 = vld [vmem:[%s2475 + $0xb2] sm:$0xff]
        %v3266 = vld [vmem:[%s2475 + $0xc2] sm:$0xff]
        %v3267 = vld [vmem:[%s2475 + $0xca] sm:$0xff]
        %v3268 = vld [vmem:[%s2475 + $0xda] sm:$0xff]
        %v3269 = vld [vmem:[%s2475 + $0xe2] sm:$0xff]
        %v3270 = vld [vmem:[%s2475 + $0xf2] sm:$0xff]
        %v3271 = vld [vmem:[%s2475 + $0xfa] sm:$0xff]
        %v3272 = vld [vmem:[%s2475 + $0x10a] sm:$0xff]
        %v3273 = vld [vmem:[%s2475 + $0x112] sm:$0xff]
        %v3274 = vld [vmem:[%s2475 + $0x122] sm:$0xff]
        %v3275 = vld [vmem:[%s2475 + $0x12a] sm:$0xff]
        %v3276 = vld [vmem:[%s2475 + $0x13a] sm:$0xff]
        %v3277 = vld [vmem:[%s2475 + $0x142] sm:$0xff]
        %v3278 = vld [vmem:[%s2475 + $0x152] sm:$0xff]
        %v3279 = vld [vmem:[%s2475 + $0x15a] sm:$0xff]
        %v3280 = vld [vmem:[%s2475 + $0x16a] sm:$0xff]
        %v3281 = vld [vmem:[%s2475 + $0x172] sm:$0xff]
        %s3282 = scalar_lea.vmem [#allocation5], 64
        %v3283 = vld [vmem:[%s3282] sm:$0xff]
        %v3285 = vsel %vm283, %v3250, 0
        %v3288 = vsel %vm283, %v3251, 0
        %v3291 = vsel %vm283, %v3252, 0
        %v3294 = vsel %vm283, %v3253, 0
        %v3297 = vsel %vm283, %v3254, 0
        %v3300 = vsel %vm283, %v3255, 0
        %v3303 = vsel %vm283, %v3256, 0
        %v3306 = vsel %vm283, %v3257, 0
        %v3309 = vsel %vm283, %v3258, 0
        %v3312 = vsel %vm283, %v3259, 0
        %v3315 = vsel %vm283, %v3260, 0
        %v3318 = vsel %vm283, %v3261, 0
        %v3321 = vsel %vm283, %v3262, 0
        %v3324 = vsel %vm283, %v3263, 0
        %v3327 = vsel %vm283, %v3264, 0
        %v3330 = vsel %vm283, %v3265, 0
        %v3333 = vsel %vm283, %v3266, 0
        %v3336 = vsel %vm283, %v3267, 0
        %v3339 = vsel %vm283, %v3268, 0
        %v3342 = vsel %vm283, %v3269, 0
        %v3345 = vsel %vm283, %v3270, 0
        %v3348 = vsel %vm283, %v3271, 0
        %v3351 = vsel %vm283, %v3272, 0
        %v3354 = vsel %vm283, %v3273, 0
        %v3357 = vsel %vm283, %v3274, 0
        %v3360 = vsel %vm283, %v3275, 0
        %v3363 = vsel %vm283, %v3276, 0
        %v3366 = vsel %vm283, %v3277, 0
        %v3369 = vsel %vm283, %v3278, 0
        %v3372 = vsel %vm283, %v3279, 0
        %v3375 = vsel %vm283, %v3280, 0
        %v3378 = vsel %vm283, %v3281, 0
        %3380 = vmatprep.subr.mxu0 0.0
        %3381 = vmatpush1.msra.mxu0 %v3283
        %3382 = vmatprep.subr.mxu0 0.0
        %3383 = vmatpush1.msra.mxu0 0.0
        %3384 = vmatprep.subr.mxu0 0.0
        %3385 = vmatpush1.msra.mxu0 0.0
        %3386 = vmatprep.subr.mxu0 0.0
        %3387 = vmatpush1.msra.mxu0 0.0
        %3388 = vmatprep.subr.mxu0 0.0
        %3389 = vmatpush1.msra.mxu0 0.0
        %3390 = vmatprep.subr.mxu0 0.0
        %3391 = vmatpush1.msra.mxu0 0.0
        %3392 = vmatprep.subr.mxu0 0.0
        %3393 = vmatpush1.msra.mxu0 0.0
        %3394 = vmatprep.subr.mxu0 0.0
        %3395 = vmatpush1.msra.mxu0 0.0
        %3396 = vmatprep.subr.mxu0 0.0
        %3397 = vmatpush1.msra.mxu0 0.0
        %3398 = vmatprep.subr.mxu0 0.0
        %3399 = vmatpush1.msra.mxu0 0.0
        %3400 = vmatprep.subr.mxu0 0.0
        %3401 = vmatpush1.msra.mxu0 0.0
        %3402 = vmatprep.subr.mxu0 0.0
        %3403 = vmatpush1.msra.mxu0 0.0
        %3404 = vmatprep.subr.mxu0 0.0
        %3405 = vmatpush1.msra.mxu0 0.0
        %3406 = vmatprep.subr.mxu0 0.0
        %3407 = vmatpush1.msra.mxu0 0.0
        %3408 = vmatprep.subr.mxu0 0.0
        %3409 = vmatpush1.msra.mxu0 0.0
        %3410 = vmatprep.subr.mxu0 0.0
        %3411 = vmatpush1.msra.mxu0 0.0
        %3412 = vmatprep.subr.mxu0 0.0
        %3413 = vmatpush1.msra.mxu0 0.0
        %3414 = vmatprep.subr.mxu0 0.0
        %3415 = vmatpush1.msra.mxu0 0.0
        %3416 = vmatprep.subr.mxu0 0.0
        %3417 = vmatpush1.msra.mxu0 0.0
        %3418 = vmatprep.subr.mxu0 0.0
        %3419 = vmatpush1.msra.mxu0 0.0
        %3420 = vmatprep.subr.mxu0 0.0
        %3421 = vmatpush1.msra.mxu0 0.0
        %3422 = vmatprep.subr.mxu0 0.0
        %3423 = vmatpush1.msra.mxu0 0.0
        %3424 = vmatprep.subr.mxu0 0.0
        %3425 = vmatpush1.msra.mxu0 0.0
        %3426 = vmatprep.subr.mxu0 0.0
        %3427 = vmatpush1.msra.mxu0 0.0
        %3428 = vmatprep.subr.mxu0 0.0
        %3429 = vmatpush1.msra.mxu0 0.0
        %3430 = vmatprep.subr.mxu0 0.0
        %3431 = vmatpush1.msra.mxu0 0.0
        %3432 = vmatprep.subr.mxu0 0.0
        %3433 = vmatpush1.msra.mxu0 0.0
        %3434 = vmatprep.subr.mxu0 0.0
        %3435 = vmatpush1.msra.mxu0 0.0
        %3436 = vmatprep.subr.mxu0 0.0
        %3437 = vmatpush1.msra.mxu0 0.0
        %3438 = vmatprep.subr.mxu0 0.0
        %3439 = vmatpush1.msra.mxu0 0.0
        %3440 = vmatprep.subr.mxu0 0.0
        %3441 = vmatpush1.msra.mxu0 0.0
        %3442 = vmatprep.subr.mxu0 0.0
        %3443 = vmatpush1.msra.mxu0 0.0
        %3444 = vmatprep.mubr.f32.mxu0 0.0
        %3445 = vmatmul.mubr.f32.gmra.mrb[0].mxu0 %v3285
        %v3446 = vpop.f32.mrb[0].mxu0
        %v3447 = vadd.f32 0.0, %v3446
        %v3448 = vpop.f32.mrb[0].mxu0
        %3449 = vmatprep.mubr.f32.mxu0 0.0
        %3450 = vmatmul.mubr.f32.gmra.mrb[0].mxu0 %v3288
        %v3451 = vpop.f32.mrb[0].mxu0
        %v3452 = vadd.f32 0.0, %v3451
        %v3453 = vpop.f32.mrb[0].mxu0
        %3454 = vmatprep.mubr.f32.mxu0 0.0
        %3455 = vmatmul.mubr.f32.gmra.mrb[0].mxu0 %v3291
        %v3456 = vpop.f32.mrb[0].mxu0
        %v3457 = vadd.f32 0.0, %v3456
        %v3458 = vpop.f32.mrb[0].mxu0
        %3459 = vmatprep.mubr.f32.mxu0 0.0
        %3460 = vmatmul.mubr.f32.gmra.mrb[0].mxu0 %v3294
        %v3461 = vpop.f32.mrb[0].mxu0
        %v3462 = vadd.f32 0.0, %v3461
        %v3463 = vpop.f32.mrb[0].mxu0
        %3464 = vmatprep.mubr.f32.mxu0 0.0
        %3465 = vmatmul.mubr.f32.gmra.mrb[0].mxu0 %v3297
        %v3466 = vpop.f32.mrb[0].mxu0
        %v3467 = vadd.f32 0.0, %v3466
        %v3468 = vpop.f32.mrb[0].mxu0
        %3469 = vmatprep.mubr.f32.mxu0 0.0
        %3470 = vmatmul.mubr.f32.gmra.mrb[0].mxu0 %v3300
        %v3471 = vpop.f32.mrb[0].mxu0
        %v3472 = vadd.f32 0.0, %v3471
        %v3473 = vpop.f32.mrb[0].mxu0
        %3474 = vmatprep.mubr.f32.mxu0 0.0
        %3475 = vmatmul.mubr.f32.gmra.mrb[0].mxu0 %v3303
        %v3476 = vpop.f32.mrb[0].mxu0
        %v3477 = vadd.f32 0.0, %v3476
        %v3478 = vpop.f32.mrb[0].mxu0
        %3479 = vmatprep.mubr.f32.mxu0 0.0
        %3480 = vmatmul.mubr.f32.gmra.mrb[0].mxu0 %v3306
        %v3481 = vpop.f32.mrb[0].mxu0
        %v3482 = vadd.f32 0.0, %v3481
        %v3483 = vpop.f32.mrb[0].mxu0
        %3484 = vmatprep.mubr.f32.mxu0 0.0
        %3485 = vmatmul.mubr.f32.gmra.mrb[0].mxu0 %v3309
        %v3486 = vpop.f32.mrb[0].mxu0
        %v3487 = vadd.f32 0.0, %v3486
        %v3488 = vpop.f32.mrb[0].mxu0
        %3489 = vmatprep.mubr.f32.mxu0 0.0
        %3490 = vmatmul.mubr.f32.gmra.mrb[0].mxu0 %v3312
        %v3491 = vpop.f32.mrb[0].mxu0
        %v3492 = vadd.f32 0.0, %v3491
        %v3493 = vpop.f32.mrb[0].mxu0
        %3494 = vmatprep.mubr.f32.mxu0 0.0
        %3495 = vmatmul.mubr.f32.gmra.mrb[0].mxu0 %v3315
        %v3496 = vpop.f32.mrb[0].mxu0
        %v3497 = vadd.f32 0.0, %v3496
        %v3498 = vpop.f32.mrb[0].mxu0
        %3499 = vmatprep.mubr.f32.mxu0 0.0
        %3500 = vmatmul.mubr.f32.gmra.mrb[0].mxu0 %v3318
        %v3501 = vpop.f32.mrb[0].mxu0
        %v3502 = vadd.f32 0.0, %v3501
        %v3503 = vpop.f32.mrb[0].mxu0
        %3504 = vmatprep.mubr.f32.mxu0 0.0
        %3505 = vmatmul.mubr.f32.gmra.mrb[0].mxu0 %v3321
        %v3506 = vpop.f32.mrb[0].mxu0
        %v3507 = vadd.f32 0.0, %v3506
        %v3508 = vpop.f32.mrb[0].mxu0
        %3509 = vmatprep.mubr.f32.mxu0 0.0
        %3510 = vmatmul.mubr.f32.gmra.mrb[0].mxu0 %v3324
        %v3511 = vpop.f32.mrb[0].mxu0
        %v3512 = vadd.f32 0.0, %v3511
        %v3513 = vpop.f32.mrb[0].mxu0
        %3514 = vmatprep.mubr.f32.mxu0 0.0
        %3515 = vmatmul.mubr.f32.gmra.mrb[0].mxu0 %v3327
        %v3516 = vpop.f32.mrb[0].mxu0
        %v3517 = vadd.f32 0.0, %v3516
        %v3518 = vpop.f32.mrb[0].mxu0
        %3519 = vmatprep.mubr.f32.mxu0 0.0
        %3520 = vmatmul.mubr.f32.gmra.mrb[0].mxu0 %v3330
        %v3521 = vpop.f32.mrb[0].mxu0
        %v3522 = vadd.f32 0.0, %v3521
        %v3523 = vpop.f32.mrb[0].mxu0
        %3524 = vmatprep.mubr.f32.mxu0 0.0
        %3525 = vmatmul.mubr.f32.gmra.mrb[0].mxu0 %v3333
        %v3526 = vpop.f32.mrb[0].mxu0
        %v3527 = vadd.f32 0.0, %v3526
        %v3528 = vpop.f32.mrb[0].mxu0
        %3529 = vmatprep.mubr.f32.mxu0 0.0
        %3530 = vmatmul.mubr.f32.gmra.mrb[0].mxu0 %v3336
        %v3531 = vpop.f32.mrb[0].mxu0
        %v3532 = vadd.f32 0.0, %v3531
        %v3533 = vpop.f32.mrb[0].mxu0
        %3534 = vmatprep.mubr.f32.mxu0 0.0
        %3535 = vmatmul.mubr.f32.gmra.mrb[0].mxu0 %v3339
        %v3536 = vpop.f32.mrb[0].mxu0
        %v3537 = vadd.f32 0.0, %v3536
        %v3538 = vpop.f32.mrb[0].mxu0
        %3539 = vmatprep.mubr.f32.mxu0 0.0
        %3540 = vmatmul.mubr.f32.gmra.mrb[0].mxu0 %v3342
        %v3541 = vpop.f32.mrb[0].mxu0
        %v3542 = vadd.f32 0.0, %v3541
        %v3543 = vpop.f32.mrb[0].mxu0
        %3544 = vmatprep.mubr.f32.mxu0 0.0
        %3545 = vmatmul.mubr.f32.gmra.mrb[0].mxu0 %v3345
        %v3546 = vpop.f32.mrb[0].mxu0
        %v3547 = vadd.f32 0.0, %v3546
        %v3548 = vpop.f32.mrb[0].mxu0
        %3549 = vmatprep.mubr.f32.mxu0 0.0
        %3550 = vmatmul.mubr.f32.gmra.mrb[0].mxu0 %v3348
        %v3551 = vpop.f32.mrb[0].mxu0
        %v3552 = vadd.f32 0.0, %v3551
        %v3553 = vpop.f32.mrb[0].mxu0
        %3554 = vmatprep.mubr.f32.mxu0 0.0
        %3555 = vmatmul.mubr.f32.gmra.mrb[0].mxu0 %v3351
        %v3556 = vpop.f32.mrb[0].mxu0
        %v3557 = vadd.f32 0.0, %v3556
        %v3558 = vpop.f32.mrb[0].mxu0
        %3559 = vmatprep.mubr.f32.mxu0 0.0
        %3560 = vmatmul.mubr.f32.gmra.mrb[0].mxu0 %v3354
        %v3561 = vpop.f32.mrb[0].mxu0
        %v3562 = vadd.f32 0.0, %v3561
        %v3563 = vpop.f32.mrb[0].mxu0
        %3564 = vmatprep.mubr.f32.mxu0 0.0
        %3565 = vmatmul.mubr.f32.gmra.mrb[0].mxu0 %v3357
        %v3566 = vpop.f32.mrb[0].mxu0
        %v3567 = vadd.f32 0.0, %v3566
        %v3568 = vpop.f32.mrb[0].mxu0
        %3569 = vmatprep.mubr.f32.mxu0 0.0
        %3570 = vmatmul.mubr.f32.gmra.mrb[0].mxu0 %v3360
        %v3571 = vpop.f32.mrb[0].mxu0
        %v3572 = vadd.f32 0.0, %v3571
        %v3573 = vpop.f32.mrb[0].mxu0
        %3574 = vmatprep.mubr.f32.mxu0 0.0
        %3575 = vmatmul.mubr.f32.gmra.mrb[0].mxu0 %v3363
        %v3576 = vpop.f32.mrb[0].mxu0
        %v3577 = vadd.f32 0.0, %v3576
        %v3578 = vpop.f32.mrb[0].mxu0
        %3579 = vmatprep.mubr.f32.mxu0 0.0
        %3580 = vmatmul.mubr.f32.gmra.mrb[0].mxu0 %v3366
        %v3581 = vpop.f32.mrb[0].mxu0
        %v3582 = vadd.f32 0.0, %v3581
        %v3583 = vpop.f32.mrb[0].mxu0
        %3584 = vmatprep.mubr.f32.mxu0 0.0
        %3585 = vmatmul.mubr.f32.gmra.mrb[0].mxu0 %v3369
        %v3586 = vpop.f32.mrb[0].mxu0
        %v3587 = vadd.f32 0.0, %v3586
        %v3588 = vpop.f32.mrb[0].mxu0
        %3589 = vmatprep.mubr.f32.mxu0 0.0
        %3590 = vmatmul.mubr.f32.gmra.mrb[0].mxu0 %v3372
        %v3591 = vpop.f32.mrb[0].mxu0
        %v3592 = vadd.f32 0.0, %v3591
        %v3593 = vpop.f32.mrb[0].mxu0
        %3594 = vmatprep.mubr.f32.mxu0 0.0
        %3595 = vmatmul.mubr.f32.gmra.mrb[0].mxu0 %v3375
        %v3596 = vpop.f32.mrb[0].mxu0
        %v3597 = vadd.f32 0.0, %v3596
        %v3598 = vpop.f32.mrb[0].mxu0
        %3599 = vmatprep.mubr.f32.mxu0 0.0
        %3600 = vmatmul.mubr.f32.gmra.mrb[0].mxu0 %v3378
        %v3601 = vpop.f32.mrb[0].mxu0
        %v3602 = vadd.f32 0.0, %v3601
        %v3603 = vpop.f32.mrb[0].mxu0
        %3604 = vdwg.mxu0
        %v3605 = vadd.f32 %v3218, %v3447
        %v3606 = vadd.f32 %v3219, %v3452
        %v3607 = vadd.f32 %v3220, %v3457
        %v3608 = vadd.f32 %v3221, %v3462
        %v3609 = vadd.f32 %v3222, %v3467
        %v3610 = vadd.f32 %v3223, %v3472
        %v3611 = vadd.f32 %v3224, %v3477
        %v3612 = vadd.f32 %v3225, %v3482
        %v3613 = vadd.f32 %v3226, %v3487
        %v3614 = vadd.f32 %v3227, %v3492
        %v3615 = vadd.f32 %v3228, %v3497
        %v3616 = vadd.f32 %v3229, %v3502
        %v3617 = vadd.f32 %v3230, %v3507
        %v3618 = vadd.f32 %v3231, %v3512
        %v3619 = vadd.f32 %v3232, %v3517
        %v3620 = vadd.f32 %v3233, %v3522
        %v3621 = vadd.f32 %v3234, %v3527
        %v3622 = vadd.f32 %v3235, %v3532
        %v3623 = vadd.f32 %v3236, %v3537
        %v3624 = vadd.f32 %v3237, %v3542
        %v3625 = vadd.f32 %v3238, %v3547
        %v3626 = vadd.f32 %v3239, %v3552
        %v3627 = vadd.f32 %v3240, %v3557
        %v3628 = vadd.f32 %v3241, %v3562
        %v3629 = vadd.f32 %v3242, %v3567
        %v3630 = vadd.f32 %v3243, %v3572
        %v3631 = vadd.f32 %v3244, %v3577
        %v3632 = vadd.f32 %v3245, %v3582
        %v3633 = vadd.f32 %v3246, %v3587
        %v3634 = vadd.f32 %v3247, %v3592
        %v3635 = vadd.f32 %v3248, %v3597
        %v3636 = vadd.f32 %v3249, %v3602
        %v3637 = vld [vmem:[#allocation7] sm:$0x1]
        %v3639 = vlaneseq
        %v3640 = vshrl.u32 %v3639, 7
        %v3641 = vsub.s32 0, %v3640
        %v3642 = vrot.slane %v3637, %v3641
        %v3644 = vadd.f32 %v3605, %v3642
        %v3645 = vadd.f32 %v3606, %v3642
        %v3646 = vadd.f32 %v3607, %v3642
        %v3647 = vadd.f32 %v3608, %v3642
        %v3648 = vadd.f32 %v3609, %v3642
        %v3649 = vadd.f32 %v3610, %v3642
        %v3650 = vadd.f32 %v3611, %v3642
        %v3651 = vadd.f32 %v3612, %v3642
        %v3652 = vadd.f32 %v3613, %v3642
        %v3653 = vadd.f32 %v3614, %v3642
        %v3654 = vadd.f32 %v3615, %v3642
        %v3655 = vadd.f32 %v3616, %v3642
        %v3656 = vadd.f32 %v3617, %v3642
        %v3657 = vadd.f32 %v3618, %v3642
        %v3658 = vadd.f32 %v3619, %v3642
        %v3659 = vadd.f32 %v3620, %v3642
        %v3660 = vadd.f32 %v3621, %v3642
        %v3661 = vadd.f32 %v3622, %v3642
        %v3662 = vadd.f32 %v3623, %v3642
        %v3663 = vadd.f32 %v3624, %v3642
        %v3664 = vadd.f32 %v3625, %v3642
        %v3665 = vadd.f32 %v3626, %v3642
        %v3666 = vadd.f32 %v3627, %v3642
        %v3667 = vadd.f32 %v3628, %v3642
        %v3668 = vadd.f32 %v3629, %v3642
        %v3669 = vadd.f32 %v3630, %v3642
        %v3670 = vadd.f32 %v3631, %v3642
        %v3671 = vadd.f32 %v3632, %v3642
        %v3672 = vadd.f32 %v3633, %v3642
        %v3673 = vadd.f32 %v3634, %v3642
        %v3674 = vadd.f32 %v3635, %v3642
        %v3675 = vadd.f32 %v3636, %v3642
        %v3676 = vmax.f32 %v3644, 0.0
        %v3677 = vmax.f32 %v3645, 0.0
        %v3678 = vmax.f32 %v3646, 0.0
        %v3679 = vmax.f32 %v3647, 0.0
        %v3680 = vmax.f32 %v3648, 0.0
        %v3681 = vmax.f32 %v3649, 0.0
        %v3682 = vmax.f32 %v3650, 0.0
        %v3683 = vmax.f32 %v3651, 0.0
        %v3684 = vmax.f32 %v3652, 0.0
        %v3685 = vmax.f32 %v3653, 0.0
        %v3686 = vmax.f32 %v3654, 0.0
        %v3687 = vmax.f32 %v3655, 0.0
        %v3688 = vmax.f32 %v3656, 0.0
        %v3689 = vmax.f32 %v3657, 0.0
        %v3690 = vmax.f32 %v3658, 0.0
        %v3691 = vmax.f32 %v3659, 0.0
        %v3692 = vmax.f32 %v3660, 0.0
        %v3693 = vmax.f32 %v3661, 0.0
        %v3694 = vmax.f32 %v3662, 0.0
        %v3695 = vmax.f32 %v3663, 0.0
        %v3696 = vmax.f32 %v3664, 0.0
        %v3697 = vmax.f32 %v3665, 0.0
        %v3698 = vmax.f32 %v3666, 0.0
        %v3699 = vmax.f32 %v3667, 0.0
        %v3700 = vmax.f32 %v3668, 0.0
        %v3701 = vmax.f32 %v3669, 0.0
        %v3702 = vmax.f32 %v3670, 0.0
        %v3703 = vmax.f32 %v3671, 0.0
        %v3704 = vmax.f32 %v3672, 0.0
        %v3705 = vmax.f32 %v3673, 0.0
        %v3706 = vmax.f32 %v3674, 0.0
        %v3707 = vmax.f32 %v3675, 0.0
        %vm3708 = vcmask 130048
        %3709 = vst.msk [vmem:[%s215] sm:$0xff] %vm3708, %v3676
        %3710 = vst.msk [vmem:[%s215 + $0x8] sm:$0xff] %vm3708, %v3677
        %3711 = vst.msk [vmem:[%s215 + $0x10] sm:$0xff] %vm3708, %v3678
        %3712 = vst.msk [vmem:[%s215 + $0x18] sm:$0xff] %vm3708, %v3679
        %3713 = vst.msk [vmem:[%s215 + $0x20] sm:$0xff] %vm3708, %v3680
        %3714 = vst.msk [vmem:[%s215 + $0x28] sm:$0xff] %vm3708, %v3681
        %3715 = vst.msk [vmem:[%s215 + $0x30] sm:$0xff] %vm3708, %v3682
        %3716 = vst.msk [vmem:[%s215 + $0x38] sm:$0xff] %vm3708, %v3683
        %3717 = vst.msk [vmem:[%s215 + $0x40] sm:$0xff] %vm3708, %v3684
        %3718 = vst.msk [vmem:[%s215 + $0x48] sm:$0xff] %vm3708, %v3685
        %3719 = vst.msk [vmem:[%s215 + $0x50] sm:$0xff] %vm3708, %v3686
        %3720 = vst.msk [vmem:[%s215 + $0x58] sm:$0xff] %vm3708, %v3687
        %3721 = vst.msk [vmem:[%s215 + $0x60] sm:$0xff] %vm3708, %v3688
        %3722 = vst.msk [vmem:[%s215 + $0x68] sm:$0xff] %vm3708, %v3689
        %3723 = vst.msk [vmem:[%s215 + $0x70] sm:$0xff] %vm3708, %v3690
        %3724 = vst.msk [vmem:[%s215 + $0x78] sm:$0xff] %vm3708, %v3691
        %3725 = vst.msk [vmem:[%s215 + $0x80] sm:$0xff] %vm3708, %v3692
        %3726 = vst.msk [vmem:[%s215 + $0x88] sm:$0xff] %vm3708, %v3693
        %3727 = vst.msk [vmem:[%s215 + $0x90] sm:$0xff] %vm3708, %v3694
        %3728 = vst.msk [vmem:[%s215 + $0x98] sm:$0xff] %vm3708, %v3695
        %3729 = vst.msk [vmem:[%s215 + $0xa0] sm:$0xff] %vm3708, %v3696
        %3730 = vst.msk [vmem:[%s215 + $0xa8] sm:$0xff] %vm3708, %v3697
        %3731 = vst.msk [vmem:[%s215 + $0xb0] sm:$0xff] %vm3708, %v3698
        %3732 = vst.msk [vmem:[%s215 + $0xb8] sm:$0xff] %vm3708, %v3699
        %3733 = vst.msk [vmem:[%s215 + $0xc0] sm:$0xff] %vm3708, %v3700
        %3734 = vst.msk [vmem:[%s215 + $0xc8] sm:$0xff] %vm3708, %v3701
        %3735 = vst.msk [vmem:[%s215 + $0xd0] sm:$0xff] %vm3708, %v3702
        %3736 = vst.msk [vmem:[%s215 + $0xd8] sm:$0xff] %vm3708, %v3703
        %3737 = vst.msk [vmem:[%s215 + $0xe0] sm:$0xff] %vm3708, %v3704
        %3738 = vst.msk [vmem:[%s215 + $0xe8] sm:$0xff] %vm3708, %v3705
        %3739 = vst.msk [vmem:[%s215 + $0xf0] sm:$0xff] %vm3708, %v3706
        %3740 = vst.msk [vmem:[%s215 + $0xf8] sm:$0xff] %vm3708, %v3707
        %s3741 = sand.u32 %s97, 1
        %s3742 = scalar_lea.sflag [#allocation4], %s3741
        %s3743 = sand.u32 %s97, 1
        %s3744 = smul.addr %s3743, 256
        %s3745 = scalar_lea.vmem [#allocation8], %s3744
        // Predicated region
        $region45: #{tpu_custom_call.1} parent=31 // pred_check
          %p3746 = pneg %p107
        $region46: #{tpu_custom_call.1} parent=31 // pred_check_branch
          %3748 = sbr.rel (%p3746) target = $region48
        $region47: #{tpu_custom_call.1} parent=31 // pred_region
          %s3750 = ssub.s32 4096, 4096
          %3751 = vsyncadd %s3742, %s3750
          %s3752 = smul.addr %s21, 32
          %s3753 = smul.addr %s3752, 128
          %s3754 = scalar_lea.hbm %s3, %s3753
          %s3755 = sshll.u32 %s3745, 4
          %s3756 = int_to_ptr.vmem [resolvable:$true] %s3755
          %3761 = dma.vmem_to_hbm [thread:$0]  %s3756, 4096, %s3754, %s3742, 128, 128, 8
        $region48: #{tpu_custom_call.1} parent=31 // pred_fallthru
          _
      $region32: #{tpu_custom_call.1} parent=5 // pred_fallthru
        _
      %p3762 = scmp.le.s32.totalorder 2, %s16
      // Predicated region
      $region49: #{tpu_custom_call.1} parent=5 // pred_check
        %p3763 = pneg %p3762
      $region50: #{tpu_custom_call.1} parent=5 // pred_check_branch
        %3765 = sbr.rel (%p3763) target = $region52
      $region51: #{tpu_custom_call.1} parent=5 // pred_region
        %s3766 = ssub.s32 %s16, 2
        // Predicated region
        $region53: #{tpu_custom_call.1} parent=51 // pred_check
          %p3767 = pneg %p113
        $region54: #{tpu_custom_call.1} parent=51 // pred_check_branch
          %3769 = sbr.rel (%p3767) target = $region56
        $region55: #{tpu_custom_call.1} parent=51 // pred_region
          %s3770 = sand.u32 %s98, 1
          %s3771 = scalar_lea.sflag [#allocation4], %s3770
          %s3772 = sand.u32 %s98, 1
          %s3773 = smul.addr %s3772, 256
          %s3774 = scalar_lea.vmem [#allocation8], %s3773
          %3775 = dma.done %s3771, 4096
        $region56: #{tpu_custom_call.1} parent=51 // pred_fallthru
          _
      $region52: #{tpu_custom_call.1} parent=5 // pred_fallthru
        _
    $region6: #{tpu_custom_call.1} parent=1 // loop_footer
      %s20 = sadd.s32 1, %s16
    $region7: #{tpu_custom_call.1} parent=1 // loop_footer_branch
      %15 = sbr.rel target = $region3
    $region8: #{tpu_custom_call.1} parent=1 // loop_exit
      _
    %3776 = vsyncpa [#allocation3], 1
    %s3777 = scalar_lea.sflag [#allocation3], 1
    %3778 = vsyncpa %s3777, 1
    %3779 = vsyncpa [#allocation6], 1
    %3780 = vsyncpa [#allocation4], 1
    %s3781 = scalar_lea.sflag [#allocation4], 1
    %3782 = vsyncpa %s3781, 1

</llo_original>
